<compile_context>
chip_gen: v6e
topology: v6e:2x2x1
jax: 0.10.0
libtpu: 0.0.40
codegen_flags: <defaults>
</compile_context>

<pallas_src>
import jax
import jax.numpy as jnp
from jax.experimental import pallas as pl
from jax.experimental.pallas import tpu as pltpu

_C = 3          # r, g, b planes used by the module
_LEVELS = 4


# --------------------------- selector construction --------------------------
def _haar_selector(w_in, dtype=jnp.bfloat16):
    """[w_in, w_in] selector with the Haar weights folded in.

    Output col j < w     : 0.5 at rows 2j, 2j+1            -> (even+odd)/2
    Output col j >= w    : +1 at row 2(j-w), -1 at 2(j-w)+1 -> even-odd (signed)
    All values (0, ±0.5, ±1) are exactly representable in bf16.
    """
    w = w_in // 2
    rows = jnp.arange(w_in)[:, None]                 # input column index
    cols = jnp.arange(w_in)[None, :]                 # output column index
    k = jnp.where(cols < w, cols, cols - w)          # pair index
    is_even = rows == 2 * k
    is_odd = rows == 2 * k + 1
    avg = 0.5 * (is_even | is_odd).astype(jnp.float32)
    diff = is_even.astype(jnp.float32) - is_odd.astype(jnp.float32)
    return jnp.where(cols < w, avg, diff).astype(dtype)


# ------------------------------- kernel body ---------------------------------
def _gather_dot(a_f32, sel_bf16):
    """a_f32 @ sel with sel in {0, ±0.5, ±1}: 3 bf16 MXU passes, ~f32 exact.

    Manual hi/mid/lo bf16 split of the data operand (the selector is already an
    exact bf16), accumulated in f32 — replaces Precision.HIGHEST (6 passes).
    """
    hi = a_f32.astype(jnp.bfloat16)
    r = a_f32 - hi.astype(jnp.float32)
    mid = r.astype(jnp.bfloat16)
    lo = (r - mid.astype(jnp.float32)).astype(jnp.bfloat16)
    acc = jnp.dot(hi, sel_bf16, preferred_element_type=jnp.float32)
    acc = acc + jnp.dot(mid, sel_bf16, preferred_element_type=jnp.float32)
    acc = acc + jnp.dot(lo, sel_bf16, preferred_element_type=jnp.float32)
    return acc


def _haar_level(in_ref, sel_ref, h_in, w_in, o_ref, ll_out_ref):
    """One Haar level on a channel-stacked [3*h_in, w_in] plane held in a ref."""
    h, w = h_in // 2, w_in // 2

    # ---- Row ("Y" axis) step: strided sublane reads (pure data movement).
    # Channel boundaries sit at even offsets (h_in even), so one strided read
    # covers all 3 channels.
    rows_e = in_ref[pl.ds(0, _C * h, stride=2), :]      # rows 0,2,4,...  [3h, w_in]
    rows_o = in_ref[pl.ds(1, _C * h, stride=2), :]      # rows 1,3,5,...  [3h, w_in]
    L = (rows_e + rows_o) * 0.5
    Hy = jnp.abs(rows_e - rows_o)

    # ---- Column ("X" axis) step: weighted-selector matmul (weights folded in).
    # Left half of the result is already the average (S); right half is the
    # signed difference, needing only an abs.  (torch's flip/transpose dance in
    # WaveletTransformAxisX cancels algebraically, so this is adjacent-column
    # pairing.)
    sel = sel_ref[...]                                  # bf16 [w_in, w_in]
    pL = _gather_dot(L, sel)                            # [3h, w_in] f32
    pH = _gather_dot(Hy, sel)                           # [3h, w_in] f32

    # ---- Write the 12 subbands: [r_LL r_LH r_HL r_HH g_* ... b_*].
    for c in range(_C):
        o_ref[4 * c + 0] = pL[c * h:(c + 1) * h, :w]              # LL
        o_ref[4 * c + 1] = jnp.abs(pL[c * h:(c + 1) * h, w:])     # LH
        o_ref[4 * c + 2] = pH[c * h:(c + 1) * h, :w]              # HL
        o_ref[4 * c + 3] = jnp.abs(pH[c * h:(c + 1) * h, w:])     # HH

    # Stacked LL planes feed the next level directly from VMEM scratch.
    if ll_out_ref is not None:
        ll_out_ref[...] = pL[:, :w]


def _wavelet4_kernel(x_ref, s1_ref, s2_ref, s3_ref, s4_ref,
                     o1_ref, o2_ref, o3_ref, o4_ref, ll1, ll2, ll3):
    H = x_ref.shape[0] // _C
    W = x_ref.shape[1]
    _haar_level(x_ref, s1_ref, H, W, o1_ref, ll1)
    _haar_level(ll1, s2_ref, H // 2, W // 2, o2_ref, ll2)
    _haar_level(ll2, s3_ref, H // 4, W // 4, o3_ref, ll3)
    _haar_level(ll3, s4_ref, H // 8, W // 8, o4_ref, None)


# ------------------------------ VMEM budgeting -------------------------------
def _vmem_limit_bytes(H, W):
    """Rough VMEM budget: double-buffered blocks + scratch + in-kernel temps."""
    f32, bf16 = 4, 2
    in_block = _C * H * W * f32
    out_blocks = sum(4 * _C * (H >> k) * (W >> k) * f32 for k in range(1, _LEVELS + 1))
    scratch = sum(_C * (H >> k) * (W >> k) * f32 for k in range(1, _LEVELS))
    selectors = sum((W >> k) * (W >> k) * bf16 for k in range(_LEVELS))
    temps = 4 * in_block            # L/Hy + bf16 split chunks + matmul outputs
    need = 2 * (in_block + out_blocks + selectors) + scratch + temps
    need = int(need * 1.5)
    try:
        cap = int(0.75 * pltpu.get_tpu_info().vmem_capacity_bytes)
    except Exception:               # e.g. interpret mode / no TPU info available
        cap = 64 << 20
    return max(32 << 20, min(need, cap))


# --------------------------------- wrapper -----------------------------------
@jax.jit
def wavelet_transform(batch_image):
    """Equivalent of WaveletTransform.forward.

    batch_image: [B, C>=3, H, W] float32 (NCHW).  H, W divisible by 16.
    Returns a list of 4 arrays [B, 12, H/2^k, W/2^k], k=1..4, band order per
    level = [r_LL, r_LH, r_HL, r_HH, g_*, b_*] (matches the torch module).
    """
    B, C, H, W = batch_image.shape
    assert C >= _C and H % (1 << _LEVELS) == 0 and W % (1 << _LEVELS) == 0

    # Channel-stacked [B, 3H, W] view of the r,g,b planes (free metadata reshape).
    x = batch_image[:, :_C].astype(jnp.float32).reshape(B, _C * H, W)

    # Per-level weighted selectors, built once (bf16, exact values).
    sels = [_haar_selector(W >> k) for k in range(_LEVELS)]

    out_shape = tuple(
        jax.ShapeDtypeStruct((B, 4 * _C, H >> k, W >> k), jnp.float32)
        for k in range(1, _LEVELS + 1))
    out_specs = tuple(
        pl.BlockSpec((None, 4 * _C, H >> k, W >> k), lambda b: (b, 0, 0, 0))
        for k in range(1, _LEVELS + 1))

    in_specs = [pl.BlockSpec((None, _C * H, W), lambda b: (b, 0, 0))]
    for k in range(_LEVELS):
        w_in = W >> k
        # Constant index_map: selector block is fetched once per core and stays
        # resident across the whole batch grid.
        in_specs.append(pl.BlockSpec((w_in, w_in), lambda b: (0, 0)))

    outs = pl.pallas_call(
        _wavelet4_kernel,
        out_shape=out_shape,
        grid=(B,),
        in_specs=in_specs,
        out_specs=out_specs,
        scratch_shapes=[
            pltpu.VMEM((_C * (H >> k), W >> k), jnp.float32)
            for k in range(1, _LEVELS)
        ],
        compiler_params=pltpu.CompilerParams(
            dimension_semantics=("parallel",),
            vmem_limit_bytes=_vmem_limit_bytes(H, W)),
    )(x, *sels)
    return list(outs)


# ----------------------------- pure-jnp reference ---------------------------
def _ref_level(x):
    """One level, mirrors the torch math exactly (flips/transposes cancel)."""
    xe, xo = x[:, :, 0::2, :], x[:, :, 1::2, :]
    L = (xe + xo) / 2.0
    Hy = jnp.abs(xe - xo)

    def col(a):
        ae, ao = a[..., 0::2], a[..., 1::2]
        return (ae + ao) / 2.0, jnp.abs(ae - ao)

    LL, LH = col(L)
    HL, HH = col(Hy)
    stacked = jnp.stack([LL, LH, HL, HH], axis=2)        # [B, 3, 4, h, w]
    B, _, _, hh, ww = stacked.shape
    return stacked.reshape(B, 12, hh, ww)


def _ref_forward(x):
    cur = x[:, :3].astype(jnp.float32)
    outs = []
    for _ in range(_LEVELS):
        t = _ref_level(cur)
        outs.append(t)
        cur = t[:, 0::4]
    return outs


if __name__ == "__main__":
    key = jax.random.PRNGKey(0)
    x = jax.random.normal(key, (2, 3, 32, 32), dtype=jnp.float32)

    outs = wavelet_transform(x)
    outs = [jax.block_until_ready(o) for o in outs]

    refs = _ref_forward(x)
    for o, r in zip(outs, refs):
        assert o.shape == r.shape, (o.shape, r.shape)
        assert jnp.allclose(o, r, atol=1e-5, rtol=1e-5), "mismatch vs reference"

    print("KERNEL_OK")
</pallas_src>

<mosaic_0001>
module attributes {stable_mosaic.version = 11 : i64} {
  func.func @_wavelet4_kernel(%arg0: i32, %arg1: memref<1x96x32xf32, #tpu.memory_space<vmem>>, %arg2: memref<32x32xbf16, #tpu.memory_space<vmem>>, %arg3: memref<16x16xbf16, #tpu.memory_space<vmem>>, %arg4: memref<8x8xbf16, #tpu.memory_space<vmem>>, %arg5: memref<4x4xbf16, #tpu.memory_space<vmem>>, %arg6: memref<1x12x16x16xf32, #tpu.memory_space<vmem>>, %arg7: memref<1x12x8x8xf32, #tpu.memory_space<vmem>>, %arg8: memref<1x12x4x4xf32, #tpu.memory_space<vmem>>, %arg9: memref<1x12x2x2xf32, #tpu.memory_space<vmem>>, %arg10: memref<48x16xf32, #tpu.memory_space<vmem>>, %arg11: memref<24x8xf32, #tpu.memory_space<vmem>>, %arg12: memref<12x4xf32, #tpu.memory_space<vmem>>) attributes {dimension_semantics = [#tpu.dimension_semantics<parallel>], iteration_bounds = array<i64: 2>, scalar_prefetch = 0 : i64, scratch_operands = 3 : i64, tpu.core_type = #tpu.core_type<tc>, window_params = [{transform_indices = @transform_0, window_bounds = array<i64: 1, 96, 32>}, {pipeline_mode = #tpu.pipeline_mode<synchronous>, transform_indices = @transform_1, window_bounds = array<i64: 32, 32>}, {pipeline_mode = #tpu.pipeline_mode<synchronous>, transform_indices = @transform_2, window_bounds = array<i64: 16, 16>}, {pipeline_mode = #tpu.pipeline_mode<synchronous>, transform_indices = @transform_3, window_bounds = array<i64: 8, 8>}, {pipeline_mode = #tpu.pipeline_mode<synchronous>, transform_indices = @transform_4, window_bounds = array<i64: 4, 4>}, {transform_indices = @transform_5, window_bounds = array<i64: 1, 12, 16, 16>}, {transform_indices = @transform_6, window_bounds = array<i64: 1, 12, 8, 8>}, {transform_indices = @transform_7, window_bounds = array<i64: 1, 12, 4, 4>}, {transform_indices = @transform_8, window_bounds = array<i64: 1, 12, 2, 2>}]} {
    %c0 = arith.constant 0 : index
    %c0_0 = arith.constant 0 : index
    %c0_1 = arith.constant 0 : index
    %0 = tpu.strided_load %arg1[%c0, %c0_0, %c0_1] {strides = array<i32: 1, 2, 1>} : memref<1x96x32xf32, #tpu.memory_space<vmem>>, vector<1x48x32xf32>
    %1 = vector.shape_cast %0 : vector<1x48x32xf32> to vector<48x32xf32>
    %c0_2 = arith.constant 0 : index
    %c1 = arith.constant 1 : index
    %c0_3 = arith.constant 0 : index
    %2 = tpu.strided_load %arg1[%c0_2, %c1, %c0_3] {strides = array<i32: 1, 2, 1>} : memref<1x96x32xf32, #tpu.memory_space<vmem>>, vector<1x48x32xf32>
    %3 = vector.shape_cast %2 : vector<1x48x32xf32> to vector<48x32xf32>
    %4 = arith.addf %1, %3 : vector<48x32xf32>
    %cst = arith.constant 5.000000e-01 : f32
    %5 = vector.broadcast %cst : f32 to vector<48x32xf32>
    %6 = arith.mulf %4, %5 : vector<48x32xf32>
    %7 = arith.subf %1, %3 : vector<48x32xf32>
    %8 = math.absf %7 : vector<48x32xf32>
    %c0_4 = arith.constant 0 : index
    %c0_5 = arith.constant 0 : index
    %9 = vector.load %arg2[%c0_4, %c0_5] : memref<32x32xbf16, #tpu.memory_space<vmem>>, vector<32x32xbf16>
    %10 = arith.truncf %6 : vector<48x32xf32> to vector<48x32xbf16>
    %11 = arith.extf %10 : vector<48x32xbf16> to vector<48x32xf32>
    %12 = arith.subf %6, %11 : vector<48x32xf32>
    %13 = arith.truncf %12 : vector<48x32xf32> to vector<48x32xbf16>
    %14 = arith.extf %13 : vector<48x32xbf16> to vector<48x32xf32>
    %15 = arith.subf %12, %14 : vector<48x32xf32>
    %16 = arith.truncf %15 : vector<48x32xf32> to vector<48x32xbf16>
    %cst_6 = arith.constant dense<0.000000e+00> : vector<48x32xf32>
    %17 = tpu.matmul %10, %9, %cst_6 {dimension_numbers = #tpu.dot_dimension_numbers<[1], [0], [0], [1], [0, 0, 1, 1], [], []>} : vector<48x32xbf16>, vector<32x32xbf16>, vector<48x32xf32> -> vector<48x32xf32>
    %cst_7 = arith.constant dense<0.000000e+00> : vector<48x32xf32>
    %18 = tpu.matmul %13, %9, %cst_7 {dimension_numbers = #tpu.dot_dimension_numbers<[1], [0], [0], [1], [0, 0, 1, 1], [], []>} : vector<48x32xbf16>, vector<32x32xbf16>, vector<48x32xf32> -> vector<48x32xf32>
    %19 = arith.addf %17, %18 : vector<48x32xf32>
    %cst_8 = arith.constant dense<0.000000e+00> : vector<48x32xf32>
    %20 = tpu.matmul %16, %9, %cst_8 {dimension_numbers = #tpu.dot_dimension_numbers<[1], [0], [0], [1], [0, 0, 1, 1], [], []>} : vector<48x32xbf16>, vector<32x32xbf16>, vector<48x32xf32> -> vector<48x32xf32>
    %21 = arith.addf %19, %20 : vector<48x32xf32>
    %22 = arith.truncf %8 : vector<48x32xf32> to vector<48x32xbf16>
    %23 = arith.extf %22 : vector<48x32xbf16> to vector<48x32xf32>
    %24 = arith.subf %8, %23 : vector<48x32xf32>
    %25 = arith.truncf %24 : vector<48x32xf32> to vector<48x32xbf16>
    %26 = arith.extf %25 : vector<48x32xbf16> to vector<48x32xf32>
    %27 = arith.subf %24, %26 : vector<48x32xf32>
    %28 = arith.truncf %27 : vector<48x32xf32> to vector<48x32xbf16>
    %cst_9 = arith.constant dense<0.000000e+00> : vector<48x32xf32>
    %29 = tpu.matmul %22, %9, %cst_9 {dimension_numbers = #tpu.dot_dimension_numbers<[1], [0], [0], [1], [0, 0, 1, 1], [], []>} : vector<48x32xbf16>, vector<32x32xbf16>, vector<48x32xf32> -> vector<48x32xf32>
    %cst_10 = arith.constant dense<0.000000e+00> : vector<48x32xf32>
    %30 = tpu.matmul %25, %9, %cst_10 {dimension_numbers = #tpu.dot_dimension_numbers<[1], [0], [0], [1], [0, 0, 1, 1], [], []>} : vector<48x32xbf16>, vector<32x32xbf16>, vector<48x32xf32> -> vector<48x32xf32>
    %31 = arith.addf %29, %30 : vector<48x32xf32>
    %cst_11 = arith.constant dense<0.000000e+00> : vector<48x32xf32>
    %32 = tpu.matmul %28, %9, %cst_11 {dimension_numbers = #tpu.dot_dimension_numbers<[1], [0], [0], [1], [0, 0, 1, 1], [], []>} : vector<48x32xbf16>, vector<32x32xbf16>, vector<48x32xf32> -> vector<48x32xf32>
    %33 = arith.addf %31, %32 : vector<48x32xf32>
    %34 = vector.extract_strided_slice %21 {offsets = [0, 0], sizes = [16, 16], strides = [1, 1]} : vector<48x32xf32> to vector<16x16xf32>
    %c0_12 = arith.constant 0 : index
    %c0_13 = arith.constant 0 : index
    %c0_14 = arith.constant 0 : index
    %c0_15 = arith.constant 0 : index
    %35 = vector.load %arg6[%c0_12, %c0_13, %c0_14, %c0_15] : memref<1x12x16x16xf32, #tpu.memory_space<vmem>>, vector<1x1x16x16xf32>
    %36 = vector.shape_cast %35 : vector<1x1x16x16xf32> to vector<16x16xf32>
    %37 = vector.shape_cast %34 : vector<16x16xf32> to vector<1x1x16x16xf32>
    tpu.vector_store %arg6[%c0_12, %c0_13, %c0_14, %c0_15], %37 {strides = array<i32>} : memref<1x12x16x16xf32, #tpu.memory_space<vmem>>, vector<1x1x16x16xf32>,
    %38 = vector.extract_strided_slice %21 {offsets = [0, 16], sizes = [16, 16], strides = [1, 1]} : vector<48x32xf32> to vector<16x16xf32>
    %39 = math.absf %38 : vector<16x16xf32>
    %c0_16 = arith.constant 0 : index
    %c1_17 = arith.constant 1 : index
    %c0_18 = arith.constant 0 : index
    %c0_19 = arith.constant 0 : index
    %40 = vector.load %arg6[%c0_16, %c1_17, %c0_18, %c0_19] : memref<1x12x16x16xf32, #tpu.memory_space<vmem>>, vector<1x1x16x16xf32>
    %41 = vector.shape_cast %40 : vector<1x1x16x16xf32> to vector<16x16xf32>
    %42 = vector.shape_cast %39 : vector<16x16xf32> to vector<1x1x16x16xf32>
    tpu.vector_store %arg6[%c0_16, %c1_17, %c0_18, %c0_19], %42 {strides = array<i32>} : memref<1x12x16x16xf32, #tpu.memory_space<vmem>>, vector<1x1x16x16xf32>,
    %43 = vector.extract_strided_slice %33 {offsets = [0, 0], sizes = [16, 16], strides = [1, 1]} : vector<48x32xf32> to vector<16x16xf32>
    %c0_20 = arith.constant 0 : index
    %c2 = arith.constant 2 : index
    %c0_21 = arith.constant 0 : index
    %c0_22 = arith.constant 0 : index
    %44 = vector.load %arg6[%c0_20, %c2, %c0_21, %c0_22] : memref<1x12x16x16xf32, #tpu.memory_space<vmem>>, vector<1x1x16x16xf32>
    %45 = vector.shape_cast %44 : vector<1x1x16x16xf32> to vector<16x16xf32>
    %46 = vector.shape_cast %43 : vector<16x16xf32> to vector<1x1x16x16xf32>
    tpu.vector_store %arg6[%c0_20, %c2, %c0_21, %c0_22], %46 {strides = array<i32>} : memref<1x12x16x16xf32, #tpu.memory_space<vmem>>, vector<1x1x16x16xf32>,
    %47 = vector.extract_strided_slice %33 {offsets = [0, 16], sizes = [16, 16], strides = [1, 1]} : vector<48x32xf32> to vector<16x16xf32>
    %48 = math.absf %47 : vector<16x16xf32>
    %c0_23 = arith.constant 0 : index
    %c3 = arith.constant 3 : index
    %c0_24 = arith.constant 0 : index
    %c0_25 = arith.constant 0 : index
    %49 = vector.load %arg6[%c0_23, %c3, %c0_24, %c0_25] : memref<1x12x16x16xf32, #tpu.memory_space<vmem>>, vector<1x1x16x16xf32>
    %50 = vector.shape_cast %49 : vector<1x1x16x16xf32> to vector<16x16xf32>
    %51 = vector.shape_cast %48 : vector<16x16xf32> to vector<1x1x16x16xf32>
    tpu.vector_store %arg6[%c0_23, %c3, %c0_24, %c0_25], %51 {strides = array<i32>} : memref<1x12x16x16xf32, #tpu.memory_space<vmem>>, vector<1x1x16x16xf32>,
    %52 = vector.extract_strided_slice %21 {offsets = [16, 0], sizes = [16, 16], strides = [1, 1]} : vector<48x32xf32> to vector<16x16xf32>
    %c0_26 = arith.constant 0 : index
    %c4 = arith.constant 4 : index
    %c0_27 = arith.constant 0 : index
    %c0_28 = arith.constant 0 : index
    %53 = vector.load %arg6[%c0_26, %c4, %c0_27, %c0_28] : memref<1x12x16x16xf32, #tpu.memory_space<vmem>>, vector<1x1x16x16xf32>
    %54 = vector.shape_cast %53 : vector<1x1x16x16xf32> to vector<16x16xf32>
    %55 = vector.shape_cast %52 : vector<16x16xf32> to vector<1x1x16x16xf32>
    tpu.vector_store %arg6[%c0_26, %c4, %c0_27, %c0_28], %55 {strides = array<i32>} : memref<1x12x16x16xf32, #tpu.memory_space<vmem>>, vector<1x1x16x16xf32>,
    %56 = vector.extract_strided_slice %21 {offsets = [16, 16], sizes = [16, 16], strides = [1, 1]} : vector<48x32xf32> to vector<16x16xf32>
    %57 = math.absf %56 : vector<16x16xf32>
    %c0_29 = arith.constant 0 : index
    %c5 = arith.constant 5 : index
    %c0_30 = arith.constant 0 : index
    %c0_31 = arith.constant 0 : index
    %58 = vector.load %arg6[%c0_29, %c5, %c0_30, %c0_31] : memref<1x12x16x16xf32, #tpu.memory_space<vmem>>, vector<1x1x16x16xf32>
    %59 = vector.shape_cast %58 : vector<1x1x16x16xf32> to vector<16x16xf32>
    %60 = vector.shape_cast %57 : vector<16x16xf32> to vector<1x1x16x16xf32>
    tpu.vector_store %arg6[%c0_29, %c5, %c0_30, %c0_31], %60 {strides = array<i32>} : memref<1x12x16x16xf32, #tpu.memory_space<vmem>>, vector<1x1x16x16xf32>,
    %61 = vector.extract_strided_slice %33 {offsets = [16, 0], sizes = [16, 16], strides = [1, 1]} : vector<48x32xf32> to vector<16x16xf32>
    %c0_32 = arith.constant 0 : index
    %c6 = arith.constant 6 : index
    %c0_33 = arith.constant 0 : index
    %c0_34 = arith.constant 0 : index
    %62 = vector.load %arg6[%c0_32, %c6, %c0_33, %c0_34] : memref<1x12x16x16xf32, #tpu.memory_space<vmem>>, vector<1x1x16x16xf32>
    %63 = vector.shape_cast %62 : vector<1x1x16x16xf32> to vector<16x16xf32>
    %64 = vector.shape_cast %61 : vector<16x16xf32> to vector<1x1x16x16xf32>
    tpu.vector_store %arg6[%c0_32, %c6, %c0_33, %c0_34], %64 {strides = array<i32>} : memref<1x12x16x16xf32, #tpu.memory_space<vmem>>, vector<1x1x16x16xf32>,
    %65 = vector.extract_strided_slice %33 {offsets = [16, 16], sizes = [16, 16], strides = [1, 1]} : vector<48x32xf32> to vector<16x16xf32>
    %66 = math.absf %65 : vector<16x16xf32>
    %c0_35 = arith.constant 0 : index
    %c7 = arith.constant 7 : index
    %c0_36 = arith.constant 0 : index
    %c0_37 = arith.constant 0 : index
    %67 = vector.load %arg6[%c0_35, %c7, %c0_36, %c0_37] : memref<1x12x16x16xf32, #tpu.memory_space<vmem>>, vector<1x1x16x16xf32>
    %68 = vector.shape_cast %67 : vector<1x1x16x16xf32> to vector<16x16xf32>
    %69 = vector.shape_cast %66 : vector<16x16xf32> to vector<1x1x16x16xf32>
    tpu.vector_store %arg6[%c0_35, %c7, %c0_36, %c0_37], %69 {strides = array<i32>} : memref<1x12x16x16xf32, #tpu.memory_space<vmem>>, vector<1x1x16x16xf32>,
    %70 = vector.extract_strided_slice %21 {offsets = [32, 0], sizes = [16, 16], strides = [1, 1]} : vector<48x32xf32> to vector<16x16xf32>
    %c0_38 = arith.constant 0 : index
    %c8 = arith.constant 8 : index
    %c0_39 = arith.constant 0 : index
    %c0_40 = arith.constant 0 : index
    %71 = vector.load %arg6[%c0_38, %c8, %c0_39, %c0_40] : memref<1x12x16x16xf32, #tpu.memory_space<vmem>>, vector<1x1x16x16xf32>
    %72 = vector.shape_cast %71 : vector<1x1x16x16xf32> to vector<16x16xf32>
    %73 = vector.shape_cast %70 : vector<16x16xf32> to vector<1x1x16x16xf32>
    tpu.vector_store %arg6[%c0_38, %c8, %c0_39, %c0_40], %73 {strides = array<i32>} : memref<1x12x16x16xf32, #tpu.memory_space<vmem>>, vector<1x1x16x16xf32>,
    %74 = vector.extract_strided_slice %21 {offsets = [32, 16], sizes = [16, 16], strides = [1, 1]} : vector<48x32xf32> to vector<16x16xf32>
    %75 = math.absf %74 : vector<16x16xf32>
    %c0_41 = arith.constant 0 : index
    %c9 = arith.constant 9 : index
    %c0_42 = arith.constant 0 : index
    %c0_43 = arith.constant 0 : index
    %76 = vector.load %arg6[%c0_41, %c9, %c0_42, %c0_43] : memref<1x12x16x16xf32, #tpu.memory_space<vmem>>, vector<1x1x16x16xf32>
    %77 = vector.shape_cast %76 : vector<1x1x16x16xf32> to vector<16x16xf32>
    %78 = vector.shape_cast %75 : vector<16x16xf32> to vector<1x1x16x16xf32>
    tpu.vector_store %arg6[%c0_41, %c9, %c0_42, %c0_43], %78 {strides = array<i32>} : memref<1x12x16x16xf32, #tpu.memory_space<vmem>>, vector<1x1x16x16xf32>,
    %79 = vector.extract_strided_slice %33 {offsets = [32, 0], sizes = [16, 16], strides = [1, 1]} : vector<48x32xf32> to vector<16x16xf32>
    %c0_44 = arith.constant 0 : index
    %c10 = arith.constant 10 : index
    %c0_45 = arith.constant 0 : index
    %c0_46 = arith.constant 0 : index
    %80 = vector.load %arg6[%c0_44, %c10, %c0_45, %c0_46] : memref<1x12x16x16xf32, #tpu.memory_space<vmem>>, vector<1x1x16x16xf32>
    %81 = vector.shape_cast %80 : vector<1x1x16x16xf32> to vector<16x16xf32>
    %82 = vector.shape_cast %79 : vector<16x16xf32> to vector<1x1x16x16xf32>
    tpu.vector_store %arg6[%c0_44, %c10, %c0_45, %c0_46], %82 {strides = array<i32>} : memref<1x12x16x16xf32, #tpu.memory_space<vmem>>, vector<1x1x16x16xf32>,
    %83 = vector.extract_strided_slice %33 {offsets = [32, 16], sizes = [16, 16], strides = [1, 1]} : vector<48x32xf32> to vector<16x16xf32>
    %84 = math.absf %83 : vector<16x16xf32>
    %c0_47 = arith.constant 0 : index
    %c11 = arith.constant 11 : index
    %c0_48 = arith.constant 0 : index
    %c0_49 = arith.constant 0 : index
    %85 = vector.load %arg6[%c0_47, %c11, %c0_48, %c0_49] : memref<1x12x16x16xf32, #tpu.memory_space<vmem>>, vector<1x1x16x16xf32>
    %86 = vector.shape_cast %85 : vector<1x1x16x16xf32> to vector<16x16xf32>
    %87 = vector.shape_cast %84 : vector<16x16xf32> to vector<1x1x16x16xf32>
    tpu.vector_store %arg6[%c0_47, %c11, %c0_48, %c0_49], %87 {strides = array<i32>} : memref<1x12x16x16xf32, #tpu.memory_space<vmem>>, vector<1x1x16x16xf32>,
    %88 = vector.extract_strided_slice %21 {offsets = [0, 0], sizes = [48, 16], strides = [1, 1]} : vector<48x32xf32> to vector<48x16xf32>
    %c0_50 = arith.constant 0 : index
    %c0_51 = arith.constant 0 : index
    %89 = vector.load %arg10[%c0_50, %c0_51] : memref<48x16xf32, #tpu.memory_space<vmem>>, vector<48x16xf32>
    tpu.vector_store %arg10[%c0_50, %c0_51], %88 {strides = array<i32>} : memref<48x16xf32, #tpu.memory_space<vmem>>, vector<48x16xf32>,
    %c0_52 = arith.constant 0 : index
    %c0_53 = arith.constant 0 : index
    %90 = tpu.strided_load %arg10[%c0_52, %c0_53] {strides = array<i32: 2, 1>} : memref<48x16xf32, #tpu.memory_space<vmem>>, vector<24x16xf32>
    %c1_54 = arith.constant 1 : index
    %c0_55 = arith.constant 0 : index
    %91 = tpu.strided_load %arg10[%c1_54, %c0_55] {strides = array<i32: 2, 1>} : memref<48x16xf32, #tpu.memory_space<vmem>>, vector<24x16xf32>
    %92 = arith.addf %90, %91 : vector<24x16xf32>
    %cst_56 = arith.constant 5.000000e-01 : f32
    %93 = vector.broadcast %cst_56 : f32 to vector<24x16xf32>
    %94 = arith.mulf %92, %93 : vector<24x16xf32>
    %95 = arith.subf %90, %91 : vector<24x16xf32>
    %96 = math.absf %95 : vector<24x16xf32>
    %c0_57 = arith.constant 0 : index
    %c0_58 = arith.constant 0 : index
    %97 = vector.load %arg3[%c0_57, %c0_58] : memref<16x16xbf16, #tpu.memory_space<vmem>>, vector<16x16xbf16>
    %98 = arith.truncf %94 : vector<24x16xf32> to vector<24x16xbf16>
    %99 = arith.extf %98 : vector<24x16xbf16> to vector<24x16xf32>
    %100 = arith.subf %94, %99 : vector<24x16xf32>
    %101 = arith.truncf %100 : vector<24x16xf32> to vector<24x16xbf16>
    %102 = arith.extf %101 : vector<24x16xbf16> to vector<24x16xf32>
    %103 = arith.subf %100, %102 : vector<24x16xf32>
    %104 = arith.truncf %103 : vector<24x16xf32> to vector<24x16xbf16>
    %cst_59 = arith.constant dense<0.000000e+00> : vector<24x16xf32>
    %105 = tpu.matmul %98, %97, %cst_59 {dimension_numbers = #tpu.dot_dimension_numbers<[1], [0], [0], [1], [0, 0, 1, 1], [], []>} : vector<24x16xbf16>, vector<16x16xbf16>, vector<24x16xf32> -> vector<24x16xf32>
    %cst_60 = arith.constant dense<0.000000e+00> : vector<24x16xf32>
    %106 = tpu.matmul %101, %97, %cst_60 {dimension_numbers = #tpu.dot_dimension_numbers<[1], [0], [0], [1], [0, 0, 1, 1], [], []>} : vector<24x16xbf16>, vector<16x16xbf16>, vector<24x16xf32> -> vector<24x16xf32>
    %107 = arith.addf %105, %106 : vector<24x16xf32>
    %cst_61 = arith.constant dense<0.000000e+00> : vector<24x16xf32>
    %108 = tpu.matmul %104, %97, %cst_61 {dimension_numbers = #tpu.dot_dimension_numbers<[1], [0], [0], [1], [0, 0, 1, 1], [], []>} : vector<24x16xbf16>, vector<16x16xbf16>, vector<24x16xf32> -> vector<24x16xf32>
    %109 = arith.addf %107, %108 : vector<24x16xf32>
    %110 = arith.truncf %96 : vector<24x16xf32> to vector<24x16xbf16>
    %111 = arith.extf %110 : vector<24x16xbf16> to vector<24x16xf32>
    %112 = arith.subf %96, %111 : vector<24x16xf32>
    %113 = arith.truncf %112 : vector<24x16xf32> to vector<24x16xbf16>
    %114 = arith.extf %113 : vector<24x16xbf16> to vector<24x16xf32>
    %115 = arith.subf %112, %114 : vector<24x16xf32>
    %116 = arith.truncf %115 : vector<24x16xf32> to vector<24x16xbf16>
    %cst_62 = arith.constant dense<0.000000e+00> : vector<24x16xf32>
    %117 = tpu.matmul %110, %97, %cst_62 {dimension_numbers = #tpu.dot_dimension_numbers<[1], [0], [0], [1], [0, 0, 1, 1], [], []>} : vector<24x16xbf16>, vector<16x16xbf16>, vector<24x16xf32> -> vector<24x16xf32>
    %cst_63 = arith.constant dense<0.000000e+00> : vector<24x16xf32>
    %118 = tpu.matmul %113, %97, %cst_63 {dimension_numbers = #tpu.dot_dimension_numbers<[1], [0], [0], [1], [0, 0, 1, 1], [], []>} : vector<24x16xbf16>, vector<16x16xbf16>, vector<24x16xf32> -> vector<24x16xf32>
    %119 = arith.addf %117, %118 : vector<24x16xf32>
    %cst_64 = arith.constant dense<0.000000e+00> : vector<24x16xf32>
    %120 = tpu.matmul %116, %97, %cst_64 {dimension_numbers = #tpu.dot_dimension_numbers<[1], [0], [0], [1], [0, 0, 1, 1], [], []>} : vector<24x16xbf16>, vector<16x16xbf16>, vector<24x16xf32> -> vector<24x16xf32>
    %121 = arith.addf %119, %120 : vector<24x16xf32>
    %122 = vector.extract_strided_slice %109 {offsets = [0, 0], sizes = [8, 8], strides = [1, 1]} : vector<24x16xf32> to vector<8x8xf32>
    %c0_65 = arith.constant 0 : index
    %c0_66 = arith.constant 0 : index
    %c0_67 = arith.constant 0 : index
    %c0_68 = arith.constant 0 : index
    %123 = vector.load %arg7[%c0_65, %c0_66, %c0_67, %c0_68] : memref<1x12x8x8xf32, #tpu.memory_space<vmem>>, vector<1x1x8x8xf32>
    %124 = vector.shape_cast %123 : vector<1x1x8x8xf32> to vector<8x8xf32>
    %125 = vector.shape_cast %122 : vector<8x8xf32> to vector<1x1x8x8xf32>
    tpu.vector_store %arg7[%c0_65, %c0_66, %c0_67, %c0_68], %125 {strides = array<i32>} : memref<1x12x8x8xf32, #tpu.memory_space<vmem>>, vector<1x1x8x8xf32>,
    %126 = vector.extract_strided_slice %109 {offsets = [0, 8], sizes = [8, 8], strides = [1, 1]} : vector<24x16xf32> to vector<8x8xf32>
    %127 = math.absf %126 : vector<8x8xf32>
    %c0_69 = arith.constant 0 : index
    %c1_70 = arith.constant 1 : index
    %c0_71 = arith.constant 0 : index
    %c0_72 = arith.constant 0 : index
    %128 = vector.load %arg7[%c0_69, %c1_70, %c0_71, %c0_72] : memref<1x12x8x8xf32, #tpu.memory_space<vmem>>, vector<1x1x8x8xf32>
    %129 = vector.shape_cast %128 : vector<1x1x8x8xf32> to vector<8x8xf32>
    %130 = vector.shape_cast %127 : vector<8x8xf32> to vector<1x1x8x8xf32>
    tpu.vector_store %arg7[%c0_69, %c1_70, %c0_71, %c0_72], %130 {strides = array<i32>} : memref<1x12x8x8xf32, #tpu.memory_space<vmem>>, vector<1x1x8x8xf32>,
    %131 = vector.extract_strided_slice %121 {offsets = [0, 0], sizes = [8, 8], strides = [1, 1]} : vector<24x16xf32> to vector<8x8xf32>
    %c0_73 = arith.constant 0 : index
    %c2_74 = arith.constant 2 : index
    %c0_75 = arith.constant 0 : index
    %c0_76 = arith.constant 0 : index
    %132 = vector.load %arg7[%c0_73, %c2_74, %c0_75, %c0_76] : memref<1x12x8x8xf32, #tpu.memory_space<vmem>>, vector<1x1x8x8xf32>
    %133 = vector.shape_cast %132 : vector<1x1x8x8xf32> to vector<8x8xf32>
    %134 = vector.shape_cast %131 : vector<8x8xf32> to vector<1x1x8x8xf32>
    tpu.vector_store %arg7[%c0_73, %c2_74, %c0_75, %c0_76], %134 {strides = array<i32>} : memref<1x12x8x8xf32, #tpu.memory_space<vmem>>, vector<1x1x8x8xf32>,
    %135 = vector.extract_strided_slice %121 {offsets = [0, 8], sizes = [8, 8], strides = [1, 1]} : vector<24x16xf32> to vector<8x8xf32>
    %136 = math.absf %135 : vector<8x8xf32>
    %c0_77 = arith.constant 0 : index
    %c3_78 = arith.constant 3 : index
    %c0_79 = arith.constant 0 : index
    %c0_80 = arith.constant 0 : index
    %137 = vector.load %arg7[%c0_77, %c3_78, %c0_79, %c0_80] : memref<1x12x8x8xf32, #tpu.memory_space<vmem>>, vector<1x1x8x8xf32>
    %138 = vector.shape_cast %137 : vector<1x1x8x8xf32> to vector<8x8xf32>
    %139 = vector.shape_cast %136 : vector<8x8xf32> to vector<1x1x8x8xf32>
    tpu.vector_store %arg7[%c0_77, %c3_78, %c0_79, %c0_80], %139 {strides = array<i32>} : memref<1x12x8x8xf32, #tpu.memory_space<vmem>>, vector<1x1x8x8xf32>,
    %140 = vector.extract_strided_slice %109 {offsets = [8, 0], sizes = [8, 8], strides = [1, 1]} : vector<24x16xf32> to vector<8x8xf32>
    %c0_81 = arith.constant 0 : index
    %c4_82 = arith.constant 4 : index
    %c0_83 = arith.constant 0 : index
    %c0_84 = arith.constant 0 : index
    %141 = vector.load %arg7[%c0_81, %c4_82, %c0_83, %c0_84] : memref<1x12x8x8xf32, #tpu.memory_space<vmem>>, vector<1x1x8x8xf32>
    %142 = vector.shape_cast %141 : vector<1x1x8x8xf32> to vector<8x8xf32>
    %143 = vector.shape_cast %140 : vector<8x8xf32> to vector<1x1x8x8xf32>
    tpu.vector_store %arg7[%c0_81, %c4_82, %c0_83, %c0_84], %143 {strides = array<i32>} : memref<1x12x8x8xf32, #tpu.memory_space<vmem>>, vector<1x1x8x8xf32>,
    %144 = vector.extract_strided_slice %109 {offsets = [8, 8], sizes = [8, 8], strides = [1, 1]} : vector<24x16xf32> to vector<8x8xf32>
    %145 = math.absf %144 : vector<8x8xf32>
    %c0_85 = arith.constant 0 : index
    %c5_86 = arith.constant 5 : index
    %c0_87 = arith.constant 0 : index
    %c0_88 = arith.constant 0 : index
    %146 = vector.load %arg7[%c0_85, %c5_86, %c0_87, %c0_88] : memref<1x12x8x8xf32, #tpu.memory_space<vmem>>, vector<1x1x8x8xf32>
    %147 = vector.shape_cast %146 : vector<1x1x8x8xf32> to vector<8x8xf32>
    %148 = vector.shape_cast %145 : vector<8x8xf32> to vector<1x1x8x8xf32>
    tpu.vector_store %arg7[%c0_85, %c5_86, %c0_87, %c0_88], %148 {strides = array<i32>} : memref<1x12x8x8xf32, #tpu.memory_space<vmem>>, vector<1x1x8x8xf32>,
    %149 = vector.extract_strided_slice %121 {offsets = [8, 0], sizes = [8, 8], strides = [1, 1]} : vector<24x16xf32> to vector<8x8xf32>
    %c0_89 = arith.constant 0 : index
    %c6_90 = arith.constant 6 : index
    %c0_91 = arith.constant 0 : index
    %c0_92 = arith.constant 0 : index
    %150 = vector.load %arg7[%c0_89, %c6_90, %c0_91, %c0_92] : memref<1x12x8x8xf32, #tpu.memory_space<vmem>>, vector<1x1x8x8xf32>
    %151 = vector.shape_cast %150 : vector<1x1x8x8xf32> to vector<8x8xf32>
    %152 = vector.shape_cast %149 : vector<8x8xf32> to vector<1x1x8x8xf32>
    tpu.vector_store %arg7[%c0_89, %c6_90, %c0_91, %c0_92], %152 {strides = array<i32>} : memref<1x12x8x8xf32, #tpu.memory_space<vmem>>, vector<1x1x8x8xf32>,
    %153 = vector.extract_strided_slice %121 {offsets = [8, 8], sizes = [8, 8], strides = [1, 1]} : vector<24x16xf32> to vector<8x8xf32>
    %154 = math.absf %153 : vector<8x8xf32>
    %c0_93 = arith.constant 0 : index
    %c7_94 = arith.constant 7 : index
    %c0_95 = arith.constant 0 : index
    %c0_96 = arith.constant 0 : index
    %155 = vector.load %arg7[%c0_93, %c7_94, %c0_95, %c0_96] : memref<1x12x8x8xf32, #tpu.memory_space<vmem>>, vector<1x1x8x8xf32>
    %156 = vector.shape_cast %155 : vector<1x1x8x8xf32> to vector<8x8xf32>
    %157 = vector.shape_cast %154 : vector<8x8xf32> to vector<1x1x8x8xf32>
    tpu.vector_store %arg7[%c0_93, %c7_94, %c0_95, %c0_96], %157 {strides = array<i32>} : memref<1x12x8x8xf32, #tpu.memory_space<vmem>>, vector<1x1x8x8xf32>,
    %158 = vector.extract_strided_slice %109 {offsets = [16, 0], sizes = [8, 8], strides = [1, 1]} : vector<24x16xf32> to vector<8x8xf32>
    %c0_97 = arith.constant 0 : index
    %c8_98 = arith.constant 8 : index
    %c0_99 = arith.constant 0 : index
    %c0_100 = arith.constant 0 : index
    %159 = vector.load %arg7[%c0_97, %c8_98, %c0_99, %c0_100] : memref<1x12x8x8xf32, #tpu.memory_space<vmem>>, vector<1x1x8x8xf32>
    %160 = vector.shape_cast %159 : vector<1x1x8x8xf32> to vector<8x8xf32>
    %161 = vector.shape_cast %158 : vector<8x8xf32> to vector<1x1x8x8xf32>
    tpu.vector_store %arg7[%c0_97, %c8_98, %c0_99, %c0_100], %161 {strides = array<i32>} : memref<1x12x8x8xf32, #tpu.memory_space<vmem>>, vector<1x1x8x8xf32>,
    %162 = vector.extract_strided_slice %109 {offsets = [16, 8], sizes = [8, 8], strides = [1, 1]} : vector<24x16xf32> to vector<8x8xf32>
    %163 = math.absf %162 : vector<8x8xf32>
    %c0_101 = arith.constant 0 : index
    %c9_102 = arith.constant 9 : index
    %c0_103 = arith.constant 0 : index
    %c0_104 = arith.constant 0 : index
    %164 = vector.load %arg7[%c0_101, %c9_102, %c0_103, %c0_104] : memref<1x12x8x8xf32, #tpu.memory_space<vmem>>, vector<1x1x8x8xf32>
    %165 = vector.shape_cast %164 : vector<1x1x8x8xf32> to vector<8x8xf32>
    %166 = vector.shape_cast %163 : vector<8x8xf32> to vector<1x1x8x8xf32>
    tpu.vector_store %arg7[%c0_101, %c9_102, %c0_103, %c0_104], %166 {strides = array<i32>} : memref<1x12x8x8xf32, #tpu.memory_space<vmem>>, vector<1x1x8x8xf32>,
    %167 = vector.extract_strided_slice %121 {offsets = [16, 0], sizes = [8, 8], strides = [1, 1]} : vector<24x16xf32> to vector<8x8xf32>
    %c0_105 = arith.constant 0 : index
    %c10_106 = arith.constant 10 : index
    %c0_107 = arith.constant 0 : index
    %c0_108 = arith.constant 0 : index
    %168 = vector.load %arg7[%c0_105, %c10_106, %c0_107, %c0_108] : memref<1x12x8x8xf32, #tpu.memory_space<vmem>>, vector<1x1x8x8xf32>
    %169 = vector.shape_cast %168 : vector<1x1x8x8xf32> to vector<8x8xf32>
    %170 = vector.shape_cast %167 : vector<8x8xf32> to vector<1x1x8x8xf32>
    tpu.vector_store %arg7[%c0_105, %c10_106, %c0_107, %c0_108], %170 {strides = array<i32>} : memref<1x12x8x8xf32, #tpu.memory_space<vmem>>, vector<1x1x8x8xf32>,
    %171 = vector.extract_strided_slice %121 {offsets = [16, 8], sizes = [8, 8], strides = [1, 1]} : vector<24x16xf32> to vector<8x8xf32>
    %172 = math.absf %171 : vector<8x8xf32>
    %c0_109 = arith.constant 0 : index
    %c11_110 = arith.constant 11 : index
    %c0_111 = arith.constant 0 : index
    %c0_112 = arith.constant 0 : index
    %173 = vector.load %arg7[%c0_109, %c11_110, %c0_111, %c0_112] : memref<1x12x8x8xf32, #tpu.memory_space<vmem>>, vector<1x1x8x8xf32>
    %174 = vector.shape_cast %173 : vector<1x1x8x8xf32> to vector<8x8xf32>
    %175 = vector.shape_cast %172 : vector<8x8xf32> to vector<1x1x8x8xf32>
    tpu.vector_store %arg7[%c0_109, %c11_110, %c0_111, %c0_112], %175 {strides = array<i32>} : memref<1x12x8x8xf32, #tpu.memory_space<vmem>>, vector<1x1x8x8xf32>,
    %176 = vector.extract_strided_slice %109 {offsets = [0, 0], sizes = [24, 8], strides = [1, 1]} : vector<24x16xf32> to vector<24x8xf32>
    %c0_113 = arith.constant 0 : index
    %c0_114 = arith.constant 0 : index
    %177 = vector.load %arg11[%c0_113, %c0_114] : memref<24x8xf32, #tpu.memory_space<vmem>>, vector<24x8xf32>
    tpu.vector_store %arg11[%c0_113, %c0_114], %176 {strides = array<i32>} : memref<24x8xf32, #tpu.memory_space<vmem>>, vector<24x8xf32>,
    %c0_115 = arith.constant 0 : index
    %c0_116 = arith.constant 0 : index
    %178 = tpu.strided_load %arg11[%c0_115, %c0_116] {strides = array<i32: 2, 1>} : memref<24x8xf32, #tpu.memory_space<vmem>>, vector<12x8xf32>
    %c1_117 = arith.constant 1 : index
    %c0_118 = arith.constant 0 : index
    %179 = tpu.strided_load %arg11[%c1_117, %c0_118] {strides = array<i32: 2, 1>} : memref<24x8xf32, #tpu.memory_space<vmem>>, vector<12x8xf32>
    %180 = arith.addf %178, %179 : vector<12x8xf32>
    %cst_119 = arith.constant 5.000000e-01 : f32
    %181 = vector.broadcast %cst_119 : f32 to vector<12x8xf32>
    %182 = arith.mulf %180, %181 : vector<12x8xf32>
    %183 = arith.subf %178, %179 : vector<12x8xf32>
    %184 = math.absf %183 : vector<12x8xf32>
    %c0_120 = arith.constant 0 : index
    %c0_121 = arith.constant 0 : index
    %185 = vector.load %arg4[%c0_120, %c0_121] : memref<8x8xbf16, #tpu.memory_space<vmem>>, vector<8x8xbf16>
    %186 = arith.truncf %182 : vector<12x8xf32> to vector<12x8xbf16>
    %187 = arith.extf %186 : vector<12x8xbf16> to vector<12x8xf32>
    %188 = arith.subf %182, %187 : vector<12x8xf32>
    %189 = arith.truncf %188 : vector<12x8xf32> to vector<12x8xbf16>
    %190 = arith.extf %189 : vector<12x8xbf16> to vector<12x8xf32>
    %191 = arith.subf %188, %190 : vector<12x8xf32>
    %192 = arith.truncf %191 : vector<12x8xf32> to vector<12x8xbf16>
    %cst_122 = arith.constant dense<0.000000e+00> : vector<12x8xf32>
    %193 = tpu.matmul %186, %185, %cst_122 {dimension_numbers = #tpu.dot_dimension_numbers<[1], [0], [0], [1], [0, 0, 1, 1], [], []>} : vector<12x8xbf16>, vector<8x8xbf16>, vector<12x8xf32> -> vector<12x8xf32>
    %cst_123 = arith.constant dense<0.000000e+00> : vector<12x8xf32>
    %194 = tpu.matmul %189, %185, %cst_123 {dimension_numbers = #tpu.dot_dimension_numbers<[1], [0], [0], [1], [0, 0, 1, 1], [], []>} : vector<12x8xbf16>, vector<8x8xbf16>, vector<12x8xf32> -> vector<12x8xf32>
    %195 = arith.addf %193, %194 : vector<12x8xf32>
    %cst_124 = arith.constant dense<0.000000e+00> : vector<12x8xf32>
    %196 = tpu.matmul %192, %185, %cst_124 {dimension_numbers = #tpu.dot_dimension_numbers<[1], [0], [0], [1], [0, 0, 1, 1], [], []>} : vector<12x8xbf16>, vector<8x8xbf16>, vector<12x8xf32> -> vector<12x8xf32>
    %197 = arith.addf %195, %196 : vector<12x8xf32>
    %198 = arith.truncf %184 : vector<12x8xf32> to vector<12x8xbf16>
    %199 = arith.extf %198 : vector<12x8xbf16> to vector<12x8xf32>
    %200 = arith.subf %184, %199 : vector<12x8xf32>
    %201 = arith.truncf %200 : vector<12x8xf32> to vector<12x8xbf16>
    %202 = arith.extf %201 : vector<12x8xbf16> to vector<12x8xf32>
    %203 = arith.subf %200, %202 : vector<12x8xf32>
    %204 = arith.truncf %203 : vector<12x8xf32> to vector<12x8xbf16>
    %cst_125 = arith.constant dense<0.000000e+00> : vector<12x8xf32>
    %205 = tpu.matmul %198, %185, %cst_125 {dimension_numbers = #tpu.dot_dimension_numbers<[1], [0], [0], [1], [0, 0, 1, 1], [], []>} : vector<12x8xbf16>, vector<8x8xbf16>, vector<12x8xf32> -> vector<12x8xf32>
    %cst_126 = arith.constant dense<0.000000e+00> : vector<12x8xf32>
    %206 = tpu.matmul %201, %185, %cst_126 {dimension_numbers = #tpu.dot_dimension_numbers<[1], [0], [0], [1], [0, 0, 1, 1], [], []>} : vector<12x8xbf16>, vector<8x8xbf16>, vector<12x8xf32> -> vector<12x8xf32>
    %207 = arith.addf %205, %206 : vector<12x8xf32>
    %cst_127 = arith.constant dense<0.000000e+00> : vector<12x8xf32>
    %208 = tpu.matmul %204, %185, %cst_127 {dimension_numbers = #tpu.dot_dimension_numbers<[1], [0], [0], [1], [0, 0, 1, 1], [], []>} : vector<12x8xbf16>, vector<8x8xbf16>, vector<12x8xf32> -> vector<12x8xf32>
    %209 = arith.addf %207, %208 : vector<12x8xf32>
    %210 = vector.extract_strided_slice %197 {offsets = [0, 0], sizes = [4, 4], strides = [1, 1]} : vector<12x8xf32> to vector<4x4xf32>
    %c0_128 = arith.constant 0 : index
    %c0_129 = arith.constant 0 : index
    %c0_130 = arith.constant 0 : index
    %c0_131 = arith.constant 0 : index
    %211 = vector.load %arg8[%c0_128, %c0_129, %c0_130, %c0_131] : memref<1x12x4x4xf32, #tpu.memory_space<vmem>>, vector<1x1x4x4xf32>
    %212 = vector.shape_cast %211 : vector<1x1x4x4xf32> to vector<4x4xf32>
    %213 = vector.shape_cast %210 : vector<4x4xf32> to vector<1x1x4x4xf32>
    tpu.vector_store %arg8[%c0_128, %c0_129, %c0_130, %c0_131], %213 {strides = array<i32>} : memref<1x12x4x4xf32, #tpu.memory_space<vmem>>, vector<1x1x4x4xf32>,
    %214 = vector.extract_strided_slice %197 {offsets = [0, 4], sizes = [4, 4], strides = [1, 1]} : vector<12x8xf32> to vector<4x4xf32>
    %215 = math.absf %214 : vector<4x4xf32>
    %c0_132 = arith.constant 0 : index
    %c1_133 = arith.constant 1 : index
    %c0_134 = arith.constant 0 : index
    %c0_135 = arith.constant 0 : index
    %216 = vector.load %arg8[%c0_132, %c1_133, %c0_134, %c0_135] : memref<1x12x4x4xf32, #tpu.memory_space<vmem>>, vector<1x1x4x4xf32>
    %217 = vector.shape_cast %216 : vector<1x1x4x4xf32> to vector<4x4xf32>
    %218 = vector.shape_cast %215 : vector<4x4xf32> to vector<1x1x4x4xf32>
    tpu.vector_store %arg8[%c0_132, %c1_133, %c0_134, %c0_135], %218 {strides = array<i32>} : memref<1x12x4x4xf32, #tpu.memory_space<vmem>>, vector<1x1x4x4xf32>,
    %219 = vector.extract_strided_slice %209 {offsets = [0, 0], sizes = [4, 4], strides = [1, 1]} : vector<12x8xf32> to vector<4x4xf32>
    %c0_136 = arith.constant 0 : index
    %c2_137 = arith.constant 2 : index
    %c0_138 = arith.constant 0 : index
    %c0_139 = arith.constant 0 : index
    %220 = vector.load %arg8[%c0_136, %c2_137, %c0_138, %c0_139] : memref<1x12x4x4xf32, #tpu.memory_space<vmem>>, vector<1x1x4x4xf32>
    %221 = vector.shape_cast %220 : vector<1x1x4x4xf32> to vector<4x4xf32>
    %222 = vector.shape_cast %219 : vector<4x4xf32> to vector<1x1x4x4xf32>
    tpu.vector_store %arg8[%c0_136, %c2_137, %c0_138, %c0_139], %222 {strides = array<i32>} : memref<1x12x4x4xf32, #tpu.memory_space<vmem>>, vector<1x1x4x4xf32>,
    %223 = vector.extract_strided_slice %209 {offsets = [0, 4], sizes = [4, 4], strides = [1, 1]} : vector<12x8xf32> to vector<4x4xf32>
    %224 = math.absf %223 : vector<4x4xf32>
    %c0_140 = arith.constant 0 : index
    %c3_141 = arith.constant 3 : index
    %c0_142 = arith.constant 0 : index
    %c0_143 = arith.constant 0 : index
    %225 = vector.load %arg8[%c0_140, %c3_141, %c0_142, %c0_143] : memref<1x12x4x4xf32, #tpu.memory_space<vmem>>, vector<1x1x4x4xf32>
    %226 = vector.shape_cast %225 : vector<1x1x4x4xf32> to vector<4x4xf32>
    %227 = vector.shape_cast %224 : vector<4x4xf32> to vector<1x1x4x4xf32>
    tpu.vector_store %arg8[%c0_140, %c3_141, %c0_142, %c0_143], %227 {strides = array<i32>} : memref<1x12x4x4xf32, #tpu.memory_space<vmem>>, vector<1x1x4x4xf32>,
    %228 = vector.extract_strided_slice %197 {offsets = [4, 0], sizes = [4, 4], strides = [1, 1]} : vector<12x8xf32> to vector<4x4xf32>
    %c0_144 = arith.constant 0 : index
    %c4_145 = arith.constant 4 : index
    %c0_146 = arith.constant 0 : index
    %c0_147 = arith.constant 0 : index
    %229 = vector.load %arg8[%c0_144, %c4_145, %c0_146, %c0_147] : memref<1x12x4x4xf32, #tpu.memory_space<vmem>>, vector<1x1x4x4xf32>
    %230 = vector.shape_cast %229 : vector<1x1x4x4xf32> to vector<4x4xf32>
    %231 = vector.shape_cast %228 : vector<4x4xf32> to vector<1x1x4x4xf32>
    tpu.vector_store %arg8[%c0_144, %c4_145, %c0_146, %c0_147], %231 {strides = array<i32>} : memref<1x12x4x4xf32, #tpu.memory_space<vmem>>, vector<1x1x4x4xf32>,
    %232 = vector.extract_strided_slice %197 {offsets = [4, 4], sizes = [4, 4], strides = [1, 1]} : vector<12x8xf32> to vector<4x4xf32>
    %233 = math.absf %232 : vector<4x4xf32>
    %c0_148 = arith.constant 0 : index
    %c5_149 = arith.constant 5 : index
    %c0_150 = arith.constant 0 : index
    %c0_151 = arith.constant 0 : index
    %234 = vector.load %arg8[%c0_148, %c5_149, %c0_150, %c0_151] : memref<1x12x4x4xf32, #tpu.memory_space<vmem>>, vector<1x1x4x4xf32>
    %235 = vector.shape_cast %234 : vector<1x1x4x4xf32> to vector<4x4xf32>
    %236 = vector.shape_cast %233 : vector<4x4xf32> to vector<1x1x4x4xf32>
    tpu.vector_store %arg8[%c0_148, %c5_149, %c0_150, %c0_151], %236 {strides = array<i32>} : memref<1x12x4x4xf32, #tpu.memory_space<vmem>>, vector<1x1x4x4xf32>,
    %237 = vector.extract_strided_slice %209 {offsets = [4, 0], sizes = [4, 4], strides = [1, 1]} : vector<12x8xf32> to vector<4x4xf32>
    %c0_152 = arith.constant 0 : index
    %c6_153 = arith.constant 6 : index
    %c0_154 = arith.constant 0 : index
    %c0_155 = arith.constant 0 : index
    %238 = vector.load %arg8[%c0_152, %c6_153, %c0_154, %c0_155] : memref<1x12x4x4xf32, #tpu.memory_space<vmem>>, vector<1x1x4x4xf32>
    %239 = vector.shape_cast %238 : vector<1x1x4x4xf32> to vector<4x4xf32>
    %240 = vector.shape_cast %237 : vector<4x4xf32> to vector<1x1x4x4xf32>
    tpu.vector_store %arg8[%c0_152, %c6_153, %c0_154, %c0_155], %240 {strides = array<i32>} : memref<1x12x4x4xf32, #tpu.memory_space<vmem>>, vector<1x1x4x4xf32>,
    %241 = vector.extract_strided_slice %209 {offsets = [4, 4], sizes = [4, 4], strides = [1, 1]} : vector<12x8xf32> to vector<4x4xf32>
    %242 = math.absf %241 : vector<4x4xf32>
    %c0_156 = arith.constant 0 : index
    %c7_157 = arith.constant 7 : index
    %c0_158 = arith.constant 0 : index
    %c0_159 = arith.constant 0 : index
    %243 = vector.load %arg8[%c0_156, %c7_157, %c0_158, %c0_159] : memref<1x12x4x4xf32, #tpu.memory_space<vmem>>, vector<1x1x4x4xf32>
    %244 = vector.shape_cast %243 : vector<1x1x4x4xf32> to vector<4x4xf32>
    %245 = vector.shape_cast %242 : vector<4x4xf32> to vector<1x1x4x4xf32>
    tpu.vector_store %arg8[%c0_156, %c7_157, %c0_158, %c0_159], %245 {strides = array<i32>} : memref<1x12x4x4xf32, #tpu.memory_space<vmem>>, vector<1x1x4x4xf32>,
    %246 = vector.extract_strided_slice %197 {offsets = [8, 0], sizes = [4, 4], strides = [1, 1]} : vector<12x8xf32> to vector<4x4xf32>
    %c0_160 = arith.constant 0 : index
    %c8_161 = arith.constant 8 : index
    %c0_162 = arith.constant 0 : index
    %c0_163 = arith.constant 0 : index
    %247 = vector.load %arg8[%c0_160, %c8_161, %c0_162, %c0_163] : memref<1x12x4x4xf32, #tpu.memory_space<vmem>>, vector<1x1x4x4xf32>
    %248 = vector.shape_cast %247 : vector<1x1x4x4xf32> to vector<4x4xf32>
    %249 = vector.shape_cast %246 : vector<4x4xf32> to vector<1x1x4x4xf32>
    tpu.vector_store %arg8[%c0_160, %c8_161, %c0_162, %c0_163], %249 {strides = array<i32>} : memref<1x12x4x4xf32, #tpu.memory_space<vmem>>, vector<1x1x4x4xf32>,
    %250 = vector.extract_strided_slice %197 {offsets = [8, 4], sizes = [4, 4], strides = [1, 1]} : vector<12x8xf32> to vector<4x4xf32>
    %251 = math.absf %250 : vector<4x4xf32>
    %c0_164 = arith.constant 0 : index
    %c9_165 = arith.constant 9 : index
    %c0_166 = arith.constant 0 : index
    %c0_167 = arith.constant 0 : index
    %252 = vector.load %arg8[%c0_164, %c9_165, %c0_166, %c0_167] : memref<1x12x4x4xf32, #tpu.memory_space<vmem>>, vector<1x1x4x4xf32>
    %253 = vector.shape_cast %252 : vector<1x1x4x4xf32> to vector<4x4xf32>
    %254 = vector.shape_cast %251 : vector<4x4xf32> to vector<1x1x4x4xf32>
    tpu.vector_store %arg8[%c0_164, %c9_165, %c0_166, %c0_167], %254 {strides = array<i32>} : memref<1x12x4x4xf32, #tpu.memory_space<vmem>>, vector<1x1x4x4xf32>,
    %255 = vector.extract_strided_slice %209 {offsets = [8, 0], sizes = [4, 4], strides = [1, 1]} : vector<12x8xf32> to vector<4x4xf32>
    %c0_168 = arith.constant 0 : index
    %c10_169 = arith.constant 10 : index
    %c0_170 = arith.constant 0 : index
    %c0_171 = arith.constant 0 : index
    %256 = vector.load %arg8[%c0_168, %c10_169, %c0_170, %c0_171] : memref<1x12x4x4xf32, #tpu.memory_space<vmem>>, vector<1x1x4x4xf32>
    %257 = vector.shape_cast %256 : vector<1x1x4x4xf32> to vector<4x4xf32>
    %258 = vector.shape_cast %255 : vector<4x4xf32> to vector<1x1x4x4xf32>
    tpu.vector_store %arg8[%c0_168, %c10_169, %c0_170, %c0_171], %258 {strides = array<i32>} : memref<1x12x4x4xf32, #tpu.memory_space<vmem>>, vector<1x1x4x4xf32>,
    %259 = vector.extract_strided_slice %209 {offsets = [8, 4], sizes = [4, 4], strides = [1, 1]} : vector<12x8xf32> to vector<4x4xf32>
    %260 = math.absf %259 : vector<4x4xf32>
    %c0_172 = arith.constant 0 : index
    %c11_173 = arith.constant 11 : index
    %c0_174 = arith.constant 0 : index
    %c0_175 = arith.constant 0 : index
    %261 = vector.load %arg8[%c0_172, %c11_173, %c0_174, %c0_175] : memref<1x12x4x4xf32, #tpu.memory_space<vmem>>, vector<1x1x4x4xf32>
    %262 = vector.shape_cast %261 : vector<1x1x4x4xf32> to vector<4x4xf32>
    %263 = vector.shape_cast %260 : vector<4x4xf32> to vector<1x1x4x4xf32>
    tpu.vector_store %arg8[%c0_172, %c11_173, %c0_174, %c0_175], %263 {strides = array<i32>} : memref<1x12x4x4xf32, #tpu.memory_space<vmem>>, vector<1x1x4x4xf32>,
    %264 = vector.extract_strided_slice %197 {offsets = [0, 0], sizes = [12, 4], strides = [1, 1]} : vector<12x8xf32> to vector<12x4xf32>
    %c0_176 = arith.constant 0 : index
    %c0_177 = arith.constant 0 : index
    %265 = vector.load %arg12[%c0_176, %c0_177] : memref<12x4xf32, #tpu.memory_space<vmem>>, vector<12x4xf32>
    tpu.vector_store %arg12[%c0_176, %c0_177], %264 {strides = array<i32>} : memref<12x4xf32, #tpu.memory_space<vmem>>, vector<12x4xf32>,
    %c0_178 = arith.constant 0 : index
    %c0_179 = arith.constant 0 : index
    %266 = tpu.strided_load %arg12[%c0_178, %c0_179] {strides = array<i32: 2, 1>} : memref<12x4xf32, #tpu.memory_space<vmem>>, vector<6x4xf32>
    %c1_180 = arith.constant 1 : index
    %c0_181 = arith.constant 0 : index
    %267 = tpu.strided_load %arg12[%c1_180, %c0_181] {strides = array<i32: 2, 1>} : memref<12x4xf32, #tpu.memory_space<vmem>>, vector<6x4xf32>
    %268 = arith.addf %266, %267 : vector<6x4xf32>
    %cst_182 = arith.constant 5.000000e-01 : f32
    %269 = vector.broadcast %cst_182 : f32 to vector<6x4xf32>
    %270 = arith.mulf %268, %269 : vector<6x4xf32>
    %271 = arith.subf %266, %267 : vector<6x4xf32>
    %272 = math.absf %271 : vector<6x4xf32>
    %c0_183 = arith.constant 0 : index
    %c0_184 = arith.constant 0 : index
    %273 = vector.load %arg5[%c0_183, %c0_184] : memref<4x4xbf16, #tpu.memory_space<vmem>>, vector<4x4xbf16>
    %274 = arith.truncf %270 : vector<6x4xf32> to vector<6x4xbf16>
    %275 = arith.extf %274 : vector<6x4xbf16> to vector<6x4xf32>
    %276 = arith.subf %270, %275 : vector<6x4xf32>
    %277 = arith.truncf %276 : vector<6x4xf32> to vector<6x4xbf16>
    %278 = arith.extf %277 : vector<6x4xbf16> to vector<6x4xf32>
    %279 = arith.subf %276, %278 : vector<6x4xf32>
    %280 = arith.truncf %279 : vector<6x4xf32> to vector<6x4xbf16>
    %cst_185 = arith.constant dense<0.000000e+00> : vector<6x4xf32>
    %281 = tpu.matmul %274, %273, %cst_185 {dimension_numbers = #tpu.dot_dimension_numbers<[1], [0], [0], [1], [0, 0, 1, 1], [], []>} : vector<6x4xbf16>, vector<4x4xbf16>, vector<6x4xf32> -> vector<6x4xf32>
    %cst_186 = arith.constant dense<0.000000e+00> : vector<6x4xf32>
    %282 = tpu.matmul %277, %273, %cst_186 {dimension_numbers = #tpu.dot_dimension_numbers<[1], [0], [0], [1], [0, 0, 1, 1], [], []>} : vector<6x4xbf16>, vector<4x4xbf16>, vector<6x4xf32> -> vector<6x4xf32>
    %283 = arith.addf %281, %282 : vector<6x4xf32>
    %cst_187 = arith.constant dense<0.000000e+00> : vector<6x4xf32>
    %284 = tpu.matmul %280, %273, %cst_187 {dimension_numbers = #tpu.dot_dimension_numbers<[1], [0], [0], [1], [0, 0, 1, 1], [], []>} : vector<6x4xbf16>, vector<4x4xbf16>, vector<6x4xf32> -> vector<6x4xf32>
    %285 = arith.addf %283, %284 : vector<6x4xf32>
    %286 = arith.truncf %272 : vector<6x4xf32> to vector<6x4xbf16>
    %287 = arith.extf %286 : vector<6x4xbf16> to vector<6x4xf32>
    %288 = arith.subf %272, %287 : vector<6x4xf32>
    %289 = arith.truncf %288 : vector<6x4xf32> to vector<6x4xbf16>
    %290 = arith.extf %289 : vector<6x4xbf16> to vector<6x4xf32>
    %291 = arith.subf %288, %290 : vector<6x4xf32>
    %292 = arith.truncf %291 : vector<6x4xf32> to vector<6x4xbf16>
    %cst_188 = arith.constant dense<0.000000e+00> : vector<6x4xf32>
    %293 = tpu.matmul %286, %273, %cst_188 {dimension_numbers = #tpu.dot_dimension_numbers<[1], [0], [0], [1], [0, 0, 1, 1], [], []>} : vector<6x4xbf16>, vector<4x4xbf16>, vector<6x4xf32> -> vector<6x4xf32>
    %cst_189 = arith.constant dense<0.000000e+00> : vector<6x4xf32>
    %294 = tpu.matmul %289, %273, %cst_189 {dimension_numbers = #tpu.dot_dimension_numbers<[1], [0], [0], [1], [0, 0, 1, 1], [], []>} : vector<6x4xbf16>, vector<4x4xbf16>, vector<6x4xf32> -> vector<6x4xf32>
    %295 = arith.addf %293, %294 : vector<6x4xf32>
    %cst_190 = arith.constant dense<0.000000e+00> : vector<6x4xf32>
    %296 = tpu.matmul %292, %273, %cst_190 {dimension_numbers = #tpu.dot_dimension_numbers<[1], [0], [0], [1], [0, 0, 1, 1], [], []>} : vector<6x4xbf16>, vector<4x4xbf16>, vector<6x4xf32> -> vector<6x4xf32>
    %297 = arith.addf %295, %296 : vector<6x4xf32>
    %298 = vector.extract_strided_slice %285 {offsets = [0, 0], sizes = [2, 2], strides = [1, 1]} : vector<6x4xf32> to vector<2x2xf32>
    %c0_191 = arith.constant 0 : index
    %c0_192 = arith.constant 0 : index
    %c0_193 = arith.constant 0 : index
    %c0_194 = arith.constant 0 : index
    %299 = vector.load %arg9[%c0_191, %c0_192, %c0_193, %c0_194] : memref<1x12x2x2xf32, #tpu.memory_space<vmem>>, vector<1x1x2x2xf32>
    %300 = vector.shape_cast %299 : vector<1x1x2x2xf32> to vector<2x2xf32>
    %301 = vector.shape_cast %298 : vector<2x2xf32> to vector<1x1x2x2xf32>
    tpu.vector_store %arg9[%c0_191, %c0_192, %c0_193, %c0_194], %301 {strides = array<i32>} : memref<1x12x2x2xf32, #tpu.memory_space<vmem>>, vector<1x1x2x2xf32>,
    %302 = vector.extract_strided_slice %285 {offsets = [0, 2], sizes = [2, 2], strides = [1, 1]} : vector<6x4xf32> to vector<2x2xf32>
    %303 = math.absf %302 : vector<2x2xf32>
    %c0_195 = arith.constant 0 : index
    %c1_196 = arith.constant 1 : index
    %c0_197 = arith.constant 0 : index
    %c0_198 = arith.constant 0 : index
    %304 = vector.load %arg9[%c0_195, %c1_196, %c0_197, %c0_198] : memref<1x12x2x2xf32, #tpu.memory_space<vmem>>, vector<1x1x2x2xf32>
    %305 = vector.shape_cast %304 : vector<1x1x2x2xf32> to vector<2x2xf32>
    %306 = vector.shape_cast %303 : vector<2x2xf32> to vector<1x1x2x2xf32>
    tpu.vector_store %arg9[%c0_195, %c1_196, %c0_197, %c0_198], %306 {strides = array<i32>} : memref<1x12x2x2xf32, #tpu.memory_space<vmem>>, vector<1x1x2x2xf32>,
    %307 = vector.extract_strided_slice %297 {offsets = [0, 0], sizes = [2, 2], strides = [1, 1]} : vector<6x4xf32> to vector<2x2xf32>
    %c0_199 = arith.constant 0 : index
    %c2_200 = arith.constant 2 : index
    %c0_201 = arith.constant 0 : index
    %c0_202 = arith.constant 0 : index
    %308 = vector.load %arg9[%c0_199, %c2_200, %c0_201, %c0_202] : memref<1x12x2x2xf32, #tpu.memory_space<vmem>>, vector<1x1x2x2xf32>
    %309 = vector.shape_cast %308 : vector<1x1x2x2xf32> to vector<2x2xf32>
    %310 = vector.shape_cast %307 : vector<2x2xf32> to vector<1x1x2x2xf32>
    tpu.vector_store %arg9[%c0_199, %c2_200, %c0_201, %c0_202], %310 {strides = array<i32>} : memref<1x12x2x2xf32, #tpu.memory_space<vmem>>, vector<1x1x2x2xf32>,
    %311 = vector.extract_strided_slice %297 {offsets = [0, 2], sizes = [2, 2], strides = [1, 1]} : vector<6x4xf32> to vector<2x2xf32>
    %312 = math.absf %311 : vector<2x2xf32>
    %c0_203 = arith.constant 0 : index
    %c3_204 = arith.constant 3 : index
    %c0_205 = arith.constant 0 : index
    %c0_206 = arith.constant 0 : index
    %313 = vector.load %arg9[%c0_203, %c3_204, %c0_205, %c0_206] : memref<1x12x2x2xf32, #tpu.memory_space<vmem>>, vector<1x1x2x2xf32>
    %314 = vector.shape_cast %313 : vector<1x1x2x2xf32> to vector<2x2xf32>
    %315 = vector.shape_cast %312 : vector<2x2xf32> to vector<1x1x2x2xf32>
    tpu.vector_store %arg9[%c0_203, %c3_204, %c0_205, %c0_206], %315 {strides = array<i32>} : memref<1x12x2x2xf32, #tpu.memory_space<vmem>>, vector<1x1x2x2xf32>,
    %316 = vector.extract_strided_slice %285 {offsets = [2, 0], sizes = [2, 2], strides = [1, 1]} : vector<6x4xf32> to vector<2x2xf32>
    %c0_207 = arith.constant 0 : index
    %c4_208 = arith.constant 4 : index
    %c0_209 = arith.constant 0 : index
    %c0_210 = arith.constant 0 : index
    %317 = vector.load %arg9[%c0_207, %c4_208, %c0_209, %c0_210] : memref<1x12x2x2xf32, #tpu.memory_space<vmem>>, vector<1x1x2x2xf32>
    %318 = vector.shape_cast %317 : vector<1x1x2x2xf32> to vector<2x2xf32>
    %319 = vector.shape_cast %316 : vector<2x2xf32> to vector<1x1x2x2xf32>
    tpu.vector_store %arg9[%c0_207, %c4_208, %c0_209, %c0_210], %319 {strides = array<i32>} : memref<1x12x2x2xf32, #tpu.memory_space<vmem>>, vector<1x1x2x2xf32>,
    %320 = vector.extract_strided_slice %285 {offsets = [2, 2], sizes = [2, 2], strides = [1, 1]} : vector<6x4xf32> to vector<2x2xf32>
    %321 = math.absf %320 : vector<2x2xf32>
    %c0_211 = arith.constant 0 : index
    %c5_212 = arith.constant 5 : index
    %c0_213 = arith.constant 0 : index
    %c0_214 = arith.constant 0 : index
    %322 = vector.load %arg9[%c0_211, %c5_212, %c0_213, %c0_214] : memref<1x12x2x2xf32, #tpu.memory_space<vmem>>, vector<1x1x2x2xf32>
    %323 = vector.shape_cast %322 : vector<1x1x2x2xf32> to vector<2x2xf32>
    %324 = vector.shape_cast %321 : vector<2x2xf32> to vector<1x1x2x2xf32>
    tpu.vector_store %arg9[%c0_211, %c5_212, %c0_213, %c0_214], %324 {strides = array<i32>} : memref<1x12x2x2xf32, #tpu.memory_space<vmem>>, vector<1x1x2x2xf32>,
    %325 = vector.extract_strided_slice %297 {offsets = [2, 0], sizes = [2, 2], strides = [1, 1]} : vector<6x4xf32> to vector<2x2xf32>
    %c0_215 = arith.constant 0 : index
    %c6_216 = arith.constant 6 : index
    %c0_217 = arith.constant 0 : index
    %c0_218 = arith.constant 0 : index
    %326 = vector.load %arg9[%c0_215, %c6_216, %c0_217, %c0_218] : memref<1x12x2x2xf32, #tpu.memory_space<vmem>>, vector<1x1x2x2xf32>
    %327 = vector.shape_cast %326 : vector<1x1x2x2xf32> to vector<2x2xf32>
    %328 = vector.shape_cast %325 : vector<2x2xf32> to vector<1x1x2x2xf32>
    tpu.vector_store %arg9[%c0_215, %c6_216, %c0_217, %c0_218], %328 {strides = array<i32>} : memref<1x12x2x2xf32, #tpu.memory_space<vmem>>, vector<1x1x2x2xf32>,
    %329 = vector.extract_strided_slice %297 {offsets = [2, 2], sizes = [2, 2], strides = [1, 1]} : vector<6x4xf32> to vector<2x2xf32>
    %330 = math.absf %329 : vector<2x2xf32>
    %c0_219 = arith.constant 0 : index
    %c7_220 = arith.constant 7 : index
    %c0_221 = arith.constant 0 : index
    %c0_222 = arith.constant 0 : index
    %331 = vector.load %arg9[%c0_219, %c7_220, %c0_221, %c0_222] : memref<1x12x2x2xf32, #tpu.memory_space<vmem>>, vector<1x1x2x2xf32>
    %332 = vector.shape_cast %331 : vector<1x1x2x2xf32> to vector<2x2xf32>
    %333 = vector.shape_cast %330 : vector<2x2xf32> to vector<1x1x2x2xf32>
    tpu.vector_store %arg9[%c0_219, %c7_220, %c0_221, %c0_222], %333 {strides = array<i32>} : memref<1x12x2x2xf32, #tpu.memory_space<vmem>>, vector<1x1x2x2xf32>,
    %334 = vector.extract_strided_slice %285 {offsets = [4, 0], sizes = [2, 2], strides = [1, 1]} : vector<6x4xf32> to vector<2x2xf32>
    %c0_223 = arith.constant 0 : index
    %c8_224 = arith.constant 8 : index
    %c0_225 = arith.constant 0 : index
    %c0_226 = arith.constant 0 : index
    %335 = vector.load %arg9[%c0_223, %c8_224, %c0_225, %c0_226] : memref<1x12x2x2xf32, #tpu.memory_space<vmem>>, vector<1x1x2x2xf32>
    %336 = vector.shape_cast %335 : vector<1x1x2x2xf32> to vector<2x2xf32>
    %337 = vector.shape_cast %334 : vector<2x2xf32> to vector<1x1x2x2xf32>
    tpu.vector_store %arg9[%c0_223, %c8_224, %c0_225, %c0_226], %337 {strides = array<i32>} : memref<1x12x2x2xf32, #tpu.memory_space<vmem>>, vector<1x1x2x2xf32>,
    %338 = vector.extract_strided_slice %285 {offsets = [4, 2], sizes = [2, 2], strides = [1, 1]} : vector<6x4xf32> to vector<2x2xf32>
    %339 = math.absf %338 : vector<2x2xf32>
    %c0_227 = arith.constant 0 : index
    %c9_228 = arith.constant 9 : index
    %c0_229 = arith.constant 0 : index
    %c0_230 = arith.constant 0 : index
    %340 = vector.load %arg9[%c0_227, %c9_228, %c0_229, %c0_230] : memref<1x12x2x2xf32, #tpu.memory_space<vmem>>, vector<1x1x2x2xf32>
    %341 = vector.shape_cast %340 : vector<1x1x2x2xf32> to vector<2x2xf32>
    %342 = vector.shape_cast %339 : vector<2x2xf32> to vector<1x1x2x2xf32>
    tpu.vector_store %arg9[%c0_227, %c9_228, %c0_229, %c0_230], %342 {strides = array<i32>} : memref<1x12x2x2xf32, #tpu.memory_space<vmem>>, vector<1x1x2x2xf32>,
    %343 = vector.extract_strided_slice %297 {offsets = [4, 0], sizes = [2, 2], strides = [1, 1]} : vector<6x4xf32> to vector<2x2xf32>
    %c0_231 = arith.constant 0 : index
    %c10_232 = arith.constant 10 : index
    %c0_233 = arith.constant 0 : index
    %c0_234 = arith.constant 0 : index
    %344 = vector.load %arg9[%c0_231, %c10_232, %c0_233, %c0_234] : memref<1x12x2x2xf32, #tpu.memory_space<vmem>>, vector<1x1x2x2xf32>
    %345 = vector.shape_cast %344 : vector<1x1x2x2xf32> to vector<2x2xf32>
    %346 = vector.shape_cast %343 : vector<2x2xf32> to vector<1x1x2x2xf32>
    tpu.vector_store %arg9[%c0_231, %c10_232, %c0_233, %c0_234], %346 {strides = array<i32>} : memref<1x12x2x2xf32, #tpu.memory_space<vmem>>, vector<1x1x2x2xf32>,
    %347 = vector.extract_strided_slice %297 {offsets = [4, 2], sizes = [2, 2], strides = [1, 1]} : vector<6x4xf32> to vector<2x2xf32>
    %348 = math.absf %347 : vector<2x2xf32>
    %c0_235 = arith.constant 0 : index
    %c11_236 = arith.constant 11 : index
    %c0_237 = arith.constant 0 : index
    %c0_238 = arith.constant 0 : index
    %349 = vector.load %arg9[%c0_235, %c11_236, %c0_237, %c0_238] : memref<1x12x2x2xf32, #tpu.memory_space<vmem>>, vector<1x1x2x2xf32>
    %350 = vector.shape_cast %349 : vector<1x1x2x2xf32> to vector<2x2xf32>
    %351 = vector.shape_cast %348 : vector<2x2xf32> to vector<1x1x2x2xf32>
    tpu.vector_store %arg9[%c0_235, %c11_236, %c0_237, %c0_238], %351 {strides = array<i32>} : memref<1x12x2x2xf32, #tpu.memory_space<vmem>>, vector<1x1x2x2xf32>,
    return
  }
  func.func @transform_0(%arg0: i32) -> (i32, i32, i32) {
    %c0_i32 = arith.constant 0 : i32
    %c0_i32_0 = arith.constant 0 : i32
    %c0_i32_1 = arith.constant 0 : i32
    return %arg0, %c0_i32, %c0_i32_0 : i32, i32, i32
  }
  func.func @transform_1(%arg0: i32) -> (i32, i32) {
    %c0_i32 = arith.constant 0 : i32
    %c0_i32_0 = arith.constant 0 : i32
    %c0_i32_1 = arith.constant 0 : i32
    return %c0_i32, %c0_i32_0 : i32, i32
  }
  func.func @transform_2(%arg0: i32) -> (i32, i32) {
    %c0_i32 = arith.constant 0 : i32
    %c0_i32_0 = arith.constant 0 : i32
    %c0_i32_1 = arith.constant 0 : i32
    return %c0_i32, %c0_i32_0 : i32, i32
  }
  func.func @transform_3(%arg0: i32) -> (i32, i32) {
    %c0_i32 = arith.constant 0 : i32
    %c0_i32_0 = arith.constant 0 : i32
    %c0_i32_1 = arith.constant 0 : i32
    return %c0_i32, %c0_i32_0 : i32, i32
  }
  func.func @transform_4(%arg0: i32) -> (i32, i32) {
    %c0_i32 = arith.constant 0 : i32
    %c0_i32_0 = arith.constant 0 : i32
    %c0_i32_1 = arith.constant 0 : i32
    return %c0_i32, %c0_i32_0 : i32, i32
  }
  func.func @transform_5(%arg0: i32) -> (i32, i32, i32, i32) {
    %c0_i32 = arith.constant 0 : i32
    %c0_i32_0 = arith.constant 0 : i32
    %c0_i32_1 = arith.constant 0 : i32
    %c0_i32_2 = arith.constant 0 : i32
    return %arg0, %c0_i32, %c0_i32_0, %c0_i32_1 : i32, i32, i32, i32
  }
  func.func @transform_6(%arg0: i32) -> (i32, i32, i32, i32) {
    %c0_i32 = arith.constant 0 : i32
    %c0_i32_0 = arith.constant 0 : i32
    %c0_i32_1 = arith.constant 0 : i32
    %c0_i32_2 = arith.constant 0 : i32
    return %arg0, %c0_i32, %c0_i32_0, %c0_i32_1 : i32, i32, i32, i32
  }
  func.func @transform_7(%arg0: i32) -> (i32, i32, i32, i32) {
    %c0_i32 = arith.constant 0 : i32
    %c0_i32_0 = arith.constant 0 : i32
    %c0_i32_1 = arith.constant 0 : i32
    %c0_i32_2 = arith.constant 0 : i32
    return %arg0, %c0_i32, %c0_i32_0, %c0_i32_1 : i32, i32, i32, i32
  }
  func.func @transform_8(%arg0: i32) -> (i32, i32, i32, i32) {
    %c0_i32 = arith.constant 0 : i32
    %c0_i32_0 = arith.constant 0 : i32
    %c0_i32_1 = arith.constant 0 : i32
    %c0_i32_2 = arith.constant 0 : i32
    return %arg0, %c0_i32, %c0_i32_0, %c0_i32_1 : i32, i32, i32, i32
  }
}

</mosaic_0001>

<llo_original>
// kernel: wavelet_transform.1
$region0: #{wavelet_transform.1}
  #allocation0 [shape = 'u32[]', space=smem, size = 0x4, offset = 0x4, fixed_abs, tag = 'smem constant byte address 0x4 - core index']
  #allocation1 [shape = 'u32[144,128]{1,0:T(1,128)}', space=vmem, size = 0x12000, scoped, tag = 'internal scratch']
  #allocation2 [shape = 'f32[48,16]{1,0:T(8,128)}', space=vmem, size = 0x6000, scoped, tag = 'scratch operand']
  #allocation3 [shape = 'f32[24,8]{1,0:T(8,128)}', space=vmem, size = 0x3000, scoped, tag = 'scratch operand']
  #allocation4 [shape = 'f32[12,4]{1,0:T(8,128)}', space=vmem, size = 0x2000, scoped, tag = 'scratch operand']
  %s0 = inlined_call_operand.hbm [shape: f32[2,96,32], index: 0, kind: input, shape index: {}]
  %s1 = inlined_call_operand.vmem [shape: bf16[32,32], index: 1, kind: input, shape index: {}]
  %s2 = inlined_call_operand.vmem [shape: bf16[16,16], index: 2, kind: input, shape index: {}]
  %s3 = inlined_call_operand.vmem [shape: bf16[8,8], index: 3, kind: input, shape index: {}]
  %s4 = inlined_call_operand.vmem [shape: bf16[4,4], index: 4, kind: input, shape index: {}]
  %s5 = inlined_call_operand.hbm [shape: f32[2,12,16,16], index: 5, kind: output, shape index: {0}]
  %s6 = inlined_call_operand.vmem [shape: f32[2,12,8,8], index: 6, kind: output, shape index: {1}]
  %s7 = inlined_call_operand.vmem [shape: f32[2,12,4,4], index: 7, kind: output, shape index: {2}]
  %s8 = inlined_call_operand.vmem [shape: f32[2,12,2,2], index: 8, kind: output, shape index: {3}]
  %9 = xla_tuple %s5, %s6, %s7, %s8
  %s10 = sld [smem:[#allocation0]]
  $region81: #{wavelet_transform.1} parent=0
    _
  %s12 = ssub.s32 1, %s10
  %s13 = scalar_select 0, %s12, %s10
  $region1: #{wavelet_transform.1} parent=0
    #allocation5 [shape = 'u8[98304]{0}', space=vmem, size = 0x18000, scoped, tag = 'input window, operand 0']
    #allocation6 [shape = 's32[2]{0}', space=sflag, size = 0x8, scoped, tag = 'scoped memory for wavelet_transform.1']
    #allocation7 [shape = 's32[2]{0}', space=sflag, size = 0x8, scoped, tag = 'scoped memory for wavelet_transform.1']
    #allocation8 [shape = 'u8[196608]{0}', space=vmem, size = 0x30000, scoped, tag = 'output window, operand 0']
    %14 = vsyncpa [#allocation6], 0
    %s15 = scalar_lea.sflag [#allocation6], 1
    %16 = vsyncpa %s15, 0
    %17 = vsyncpa [#allocation7], 0
    %s18 = scalar_lea.sflag [#allocation7], 1
    %19 = vsyncpa %s18, 0
    loop: start=0, step=1, limit=4
    $region2: #{wavelet_transform.1} parent=1 // loop_pre_header
      _
    $region3: #{wavelet_transform.1} parent=1 // loop_header
      %s21 = sphi 0, %s25
      %p22 = scmp.ge.s32.totalorder %s21, 4
      %s31 = sphi 0, %s33
      %s34 = sphi 0, %s31
      %s35 = sphi 0, %s34
      %s51 = sphi 0, %s35
      %s55 = sphi 0, %s55
      %s57 = sphi 0, %s55
      %s58 = sphi 0, %s57
      %s72 = sphi 0, %s58
      %s76 = sphi 0, %s76
      %s78 = sphi 0, %s76
      %s79 = sphi 0, %s78
      %s93 = sphi 0, %s79
      %s97 = sphi 0, %s97
      %s99 = sphi 0, %s97
      %s100 = sphi 0, %s99
      %s114 = sphi 0, %s100
      %s118 = sphi 0, %s118
      %s120 = sphi 0, %s118
      %s121 = sphi 0, %s120
      %s135 = sphi 0, %s121
      %s141 = sphi 0, %s143
      %s144 = sphi 0, %s141
      %s145 = sphi 0, %s144
      %s161 = sphi 0, %s145
      %s167 = sphi 0, %s169
      %s170 = sphi 0, %s167
      %s171 = sphi 0, %s170
      %s187 = sphi 0, %s171
      %s193 = sphi 0, %s195
      %s196 = sphi 0, %s193
      %s197 = sphi 0, %s196
      %s213 = sphi 0, %s197
      %s219 = sphi 0, %s221
      %s222 = sphi 0, %s219
      %s223 = sphi 0, %s222
      %s239 = sphi 0, %s223
    $region4: #{wavelet_transform.1} parent=1 // loop_header_branch
      %24 = sbr.rel (%p22) target = $region8
    $region5: #{wavelet_transform.1} parent=1 // loop_body
      %s26 = ssub.s32 %s21, 1
      %s27 = ssub.s32 %s21, 2
      %s28 = sadd.s32 %s21, 1
      %s29 = ssub.s32 %s21, %s28
      %p30 = scmp.eq.s32.totalorder %s29, 0
      %s32 = sadd.s32 %s31, 1
      %s33 = scalar_select %p30, %s31, %s32
      %p36 = pneg %p30
      %p37 = scmp.eq.s32.totalorder %s21, 1
      %p38 = por %p36, %p37
      %p39 = scmp.ne.s32.totalorder %s31, %s34
      %p40 = scmp.eq.s32.totalorder %s21, 0
      %p41 = por %p39, %p40
      %p42 = scmp.ne.s32.totalorder %s31, %s34
      %p43 = scmp.eq.s32.totalorder %s26, 1
      %p44 = por %p42, %p43
      %p45 = scmp.ne.s32.totalorder %s34, %s35
      %p46 = scmp.eq.s32.totalorder %s26, 0
      %p47 = por %p45, %p46
      %p48 = scmp.ne.s32.totalorder %s34, %s35
      %p49 = scmp.eq.s32.totalorder %s27, 1
      %p50 = por %p48, %p49
      %p52 = scmp.ne.s32.totalorder %s35, %s51
      %p53 = scmp.eq.s32.totalorder %s27, 0
      %p54 = por %p52, %p53
      %s56 = sadd.s32 %s55, 1
      %p59 = scmp.eq.s32.totalorder %s21, 1
      %p60 = scmp.ne.s32.totalorder %s55, %s57
      %p61 = scmp.eq.s32.totalorder %s21, 0
      %p62 = por %p60, %p61
      %p63 = scmp.ne.s32.totalorder %s55, %s57
      %p64 = scmp.eq.s32.totalorder %s26, 1
      %p65 = por %p63, %p64
      %p66 = scmp.ne.s32.totalorder %s57, %s58
      %p67 = scmp.eq.s32.totalorder %s26, 0
      %p68 = por %p66, %p67
      %p69 = scmp.ne.s32.totalorder %s57, %s58
      %p70 = scmp.eq.s32.totalorder %s27, 1
      %p71 = por %p69, %p70
      %p73 = scmp.ne.s32.totalorder %s58, %s72
      %p74 = scmp.eq.s32.totalorder %s27, 0
      %p75 = por %p73, %p74
      %s77 = sadd.s32 %s76, 1
      %p80 = scmp.eq.s32.totalorder %s21, 1
      %p81 = scmp.ne.s32.totalorder %s76, %s78
      %p82 = scmp.eq.s32.totalorder %s21, 0
      %p83 = por %p81, %p82
      %p84 = scmp.ne.s32.totalorder %s76, %s78
      %p85 = scmp.eq.s32.totalorder %s26, 1
      %p86 = por %p84, %p85
      %p87 = scmp.ne.s32.totalorder %s78, %s79
      %p88 = scmp.eq.s32.totalorder %s26, 0
      %p89 = por %p87, %p88
      %p90 = scmp.ne.s32.totalorder %s78, %s79
      %p91 = scmp.eq.s32.totalorder %s27, 1
      %p92 = por %p90, %p91
      %p94 = scmp.ne.s32.totalorder %s79, %s93
      %p95 = scmp.eq.s32.totalorder %s27, 0
      %p96 = por %p94, %p95
      %s98 = sadd.s32 %s97, 1
      %p101 = scmp.eq.s32.totalorder %s21, 1
      %p102 = scmp.ne.s32.totalorder %s97, %s99
      %p103 = scmp.eq.s32.totalorder %s21, 0
      %p104 = por %p102, %p103
      %p105 = scmp.ne.s32.totalorder %s97, %s99
      %p106 = scmp.eq.s32.totalorder %s26, 1
      %p107 = por %p105, %p106
      %p108 = scmp.ne.s32.totalorder %s99, %s100
      %p109 = scmp.eq.s32.totalorder %s26, 0
      %p110 = por %p108, %p109
      %p111 = scmp.ne.s32.totalorder %s99, %s100
      %p112 = scmp.eq.s32.totalorder %s27, 1
      %p113 = por %p111, %p112
      %p115 = scmp.ne.s32.totalorder %s100, %s114
      %p116 = scmp.eq.s32.totalorder %s27, 0
      %p117 = por %p115, %p116
      %s119 = sadd.s32 %s118, 1
      %p122 = scmp.eq.s32.totalorder %s21, 1
      %p123 = scmp.ne.s32.totalorder %s118, %s120
      %p124 = scmp.eq.s32.totalorder %s21, 0
      %p125 = por %p123, %p124
      %p126 = scmp.ne.s32.totalorder %s118, %s120
      %p127 = scmp.eq.s32.totalorder %s26, 1
      %p128 = por %p126, %p127
      %p129 = scmp.ne.s32.totalorder %s120, %s121
      %p130 = scmp.eq.s32.totalorder %s26, 0
      %p131 = por %p129, %p130
      %p132 = scmp.ne.s32.totalorder %s120, %s121
      %p133 = scmp.eq.s32.totalorder %s27, 1
      %p134 = por %p132, %p133
      %p136 = scmp.ne.s32.totalorder %s121, %s135
      %p137 = scmp.eq.s32.totalorder %s27, 0
      %p138 = por %p136, %p137
      %s139 = ssub.s32 %s21, %s28
      %p140 = scmp.eq.s32.totalorder %s139, 0
      %s142 = sadd.s32 %s141, 1
      %s143 = scalar_select %p140, %s141, %s142
      %p146 = pneg %p140
      %p147 = scmp.eq.s32.totalorder %s21, 1
      %p148 = por %p146, %p147
      %p149 = scmp.ne.s32.totalorder %s141, %s144
      %p150 = scmp.eq.s32.totalorder %s21, 0
      %p151 = por %p149, %p150
      %p152 = scmp.ne.s32.totalorder %s141, %s144
      %p153 = scmp.eq.s32.totalorder %s26, 1
      %p154 = por %p152, %p153
      %p155 = scmp.ne.s32.totalorder %s144, %s145
      %p156 = scmp.eq.s32.totalorder %s26, 0
      %p157 = por %p155, %p156
      %p158 = scmp.ne.s32.totalorder %s144, %s145
      %p159 = scmp.eq.s32.totalorder %s27, 1
      %p160 = por %p158, %p159
      %p162 = scmp.ne.s32.totalorder %s145, %s161
      %p163 = scmp.eq.s32.totalorder %s27, 0
      %p164 = por %p162, %p163
      %s165 = ssub.s32 %s21, %s28
      %p166 = scmp.eq.s32.totalorder %s165, 0
      %s168 = sadd.s32 %s167, 1
      %s169 = scalar_select %p166, %s167, %s168
      %p172 = pneg %p166
      %p173 = scmp.eq.s32.totalorder %s21, 1
      %p174 = por %p172, %p173
      %p175 = scmp.ne.s32.totalorder %s167, %s170
      %p176 = scmp.eq.s32.totalorder %s21, 0
      %p177 = por %p175, %p176
      %p178 = scmp.ne.s32.totalorder %s167, %s170
      %p179 = scmp.eq.s32.totalorder %s26, 1
      %p180 = por %p178, %p179
      %p181 = scmp.ne.s32.totalorder %s170, %s171
      %p182 = scmp.eq.s32.totalorder %s26, 0
      %p183 = por %p181, %p182
      %p184 = scmp.ne.s32.totalorder %s170, %s171
      %p185 = scmp.eq.s32.totalorder %s27, 1
      %p186 = por %p184, %p185
      %p188 = scmp.ne.s32.totalorder %s171, %s187
      %p189 = scmp.eq.s32.totalorder %s27, 0
      %p190 = por %p188, %p189
      %s191 = ssub.s32 %s21, %s28
      %p192 = scmp.eq.s32.totalorder %s191, 0
      %s194 = sadd.s32 %s193, 1
      %s195 = scalar_select %p192, %s193, %s194
      %p198 = pneg %p192
      %p199 = scmp.eq.s32.totalorder %s21, 1
      %p200 = por %p198, %p199
      %p201 = scmp.ne.s32.totalorder %s193, %s196
      %p202 = scmp.eq.s32.totalorder %s21, 0
      %p203 = por %p201, %p202
      %p204 = scmp.ne.s32.totalorder %s193, %s196
      %p205 = scmp.eq.s32.totalorder %s26, 1
      %p206 = por %p204, %p205
      %p207 = scmp.ne.s32.totalorder %s196, %s197
      %p208 = scmp.eq.s32.totalorder %s26, 0
      %p209 = por %p207, %p208
      %p210 = scmp.ne.s32.totalorder %s196, %s197
      %p211 = scmp.eq.s32.totalorder %s27, 1
      %p212 = por %p210, %p211
      %p214 = scmp.ne.s32.totalorder %s197, %s213
      %p215 = scmp.eq.s32.totalorder %s27, 0
      %p216 = por %p214, %p215
      %s217 = ssub.s32 %s21, %s28
      %p218 = scmp.eq.s32.totalorder %s217, 0
      %s220 = sadd.s32 %s219, 1
      %s221 = scalar_select %p218, %s219, %s220
      %p224 = pneg %p218
      %p225 = scmp.eq.s32.totalorder %s21, 1
      %p226 = por %p224, %p225
      %p227 = scmp.ne.s32.totalorder %s219, %s222
      %p228 = scmp.eq.s32.totalorder %s21, 0
      %p229 = por %p227, %p228
      %p230 = scmp.ne.s32.totalorder %s219, %s222
      %p231 = scmp.eq.s32.totalorder %s26, 1
      %p232 = por %p230, %p231
      %p233 = scmp.ne.s32.totalorder %s222, %s223
      %p234 = scmp.eq.s32.totalorder %s26, 0
      %p235 = por %p233, %p234
      %p236 = scmp.ne.s32.totalorder %s222, %s223
      %p237 = scmp.eq.s32.totalorder %s27, 1
      %p238 = por %p236, %p237
      %p240 = scmp.ne.s32.totalorder %s223, %s239
      %p241 = scmp.eq.s32.totalorder %s27, 0
      %p242 = por %p240, %p241
      %p243 = scmp.le.s32.totalorder 1, %s21
      %p244 = scmp.lt.s32.totalorder %s21, 3
      %p245 = pnand %p243, %p244
      %p246 = pneg %p245
      // Predicated region
      $region9: #{wavelet_transform.1} parent=5 // pred_check
        _
      $region10: #{wavelet_transform.1} parent=5 // pred_check_branch
        %248 = sbr.rel (%p245) target = $region12
      $region11: #{wavelet_transform.1} parent=5 // pred_region
        %s249 = ssub.s32 %s21, 1
        // Predicated region
        $region13: #{wavelet_transform.1} parent=11 // pred_check
          %p250 = pneg %p68
        $region14: #{wavelet_transform.1} parent=11 // pred_check_branch
          %252 = sbr.rel (%p250) target = $region16
        $region15: #{wavelet_transform.1} parent=11 // pred_region
          _
        $region16: #{wavelet_transform.1} parent=11 // pred_fallthru
          _
        // Predicated region
        $region17: #{wavelet_transform.1} parent=11 // pred_check
          %p253 = pneg %p89
        $region18: #{wavelet_transform.1} parent=11 // pred_check_branch
          %255 = sbr.rel (%p253) target = $region20
        $region19: #{wavelet_transform.1} parent=11 // pred_region
          _
        $region20: #{wavelet_transform.1} parent=11 // pred_fallthru
          _
        // Predicated region
        $region21: #{wavelet_transform.1} parent=11 // pred_check
          %p256 = pneg %p110
        $region22: #{wavelet_transform.1} parent=11 // pred_check_branch
          %258 = sbr.rel (%p256) target = $region24
        $region23: #{wavelet_transform.1} parent=11 // pred_region
          _
        $region24: #{wavelet_transform.1} parent=11 // pred_fallthru
          _
        // Predicated region
        $region25: #{wavelet_transform.1} parent=11 // pred_check
          %p259 = pneg %p131
        $region26: #{wavelet_transform.1} parent=11 // pred_check_branch
          %261 = sbr.rel (%p259) target = $region28
        $region27: #{wavelet_transform.1} parent=11 // pred_region
          _
        $region28: #{wavelet_transform.1} parent=11 // pred_fallthru
          _
      $region12: #{wavelet_transform.1} parent=5 // pred_fallthru
        _
      %p262 = scmp.lt.s32.totalorder %s21, 2
      // Predicated region
      $region29: #{wavelet_transform.1} parent=5 // pred_check
        %p263 = pneg %p262
      $region30: #{wavelet_transform.1} parent=5 // pred_check_branch
        %265 = sbr.rel (%p263) target = $region32
      $region31: #{wavelet_transform.1} parent=5 // pred_region
        // Predicated region
        $region33: #{wavelet_transform.1} parent=31 // pred_check
          %p266 = pneg %p41
        $region34: #{wavelet_transform.1} parent=31 // pred_check_branch
          %268 = sbr.rel (%p266) target = $region36
        $region35: #{wavelet_transform.1} parent=31 // pred_region
          %s269 = sand.u32 %s31, 1
          %s270 = scalar_lea.sflag [#allocation6], %s269
          %s271 = sand.u32 %s31, 1
          %s272 = smul.addr %s271, 96
          %s273 = scalar_lea.vmem [#allocation5], %s272
          %s275 = ssub.s32 1536, 1536
          %276 = vsyncadd %s270, %s275
          %s277 = smul.addr %s21, 12
          %s278 = smul.addr %s277, 128
          %s279 = scalar_lea.hbm %s0, %s278
          %s280 = sshll.u32 %s273, 4
          %s281 = int_to_ptr.vmem [resolvable:$true] %s280
          %286 = dma.hbm_to_vmem [thread:$0]  %s279, 1536, %s281, %s270, 128, 128, 8
        $region36: #{wavelet_transform.1} parent=31 // pred_fallthru
          _
      $region32: #{wavelet_transform.1} parent=5 // pred_fallthru
        _
      %p287 = scmp.le.s32.totalorder 1, %s21
      %p288 = scmp.lt.s32.totalorder %s21, 3
      %p289 = pnand %p287, %p288
      %p290 = pneg %p289
      // Predicated region
      $region37: #{wavelet_transform.1} parent=5 // pred_check
        _
      $region38: #{wavelet_transform.1} parent=5 // pred_check_branch
        %292 = sbr.rel (%p289) target = $region40
      $region39: #{wavelet_transform.1} parent=5 // pred_region
        %s293 = ssub.s32 %s21, 1
        %s294 = sand.u32 %s34, 1
        %s295 = scalar_lea.sflag [#allocation6], %s294
        %s296 = sand.u32 %s34, 1
        %s297 = smul.addr %s296, 96
        %s298 = scalar_lea.vmem [#allocation5], %s297
        // Predicated region
        $region41: #{wavelet_transform.1} parent=39 // pred_check
          %p299 = pneg %p47
        $region42: #{wavelet_transform.1} parent=39 // pred_check_branch
          %301 = sbr.rel (%p299) target = $region44
        $region43: #{wavelet_transform.1} parent=39 // pred_region
          %302 = dma.done %s295, 1536
        $region44: #{wavelet_transform.1} parent=39 // pred_fallthru
          _
        %s303 = sand.u32 %s34, 1
        %s304 = scalar_lea.sflag [#allocation6], %s303
        %s305 = sand.u32 %s34, 1
        %s306 = smul.addr %s305, 96
        %s307 = scalar_lea.vmem [#allocation5], %s306
        %p308 = pneg %p47
        %p309 = pneg %p44
        %p310 = pneg %p68
        %p311 = pneg %p65
        %p312 = pneg %p89
        %p313 = pneg %p86
        %p314 = pneg %p110
        %p315 = pneg %p107
        %p316 = pneg %p131
        %p317 = pneg %p128
        %p318 = pneg %p157
        %p319 = pneg %p154
        %s320 = sand.u32 %s144, 1
        %s321 = scalar_lea.sflag [#allocation7], %s320
        %s322 = sand.u32 %s144, 1
        %s323 = smul.addr %s322, 192
        %s324 = scalar_lea.vmem [#allocation8], %s323
        %p325 = pneg %p183
        %p326 = pneg %p180
        %p327 = scmp.lt.s32.totalorder %s26, 1
        %s328 = scalar_select %p327, %s26, 1
        %s329 = smul.addr %s328, 12
        %s330 = smul.addr %s329, 8
        %s331 = scalar_lea.vmem %s6, %s330
        %p332 = pneg %p209
        %p333 = pneg %p206
        %p334 = scmp.lt.s32.totalorder %s26, 1
        %s335 = scalar_select %p334, %s26, 1
        %s336 = smul.addr %s335, 12
        %s337 = smul.addr %s336, 4
        %s338 = scalar_lea.vmem %s7, %s337
        %p339 = pneg %p235
        %p340 = pneg %p232
        %p341 = scmp.lt.s32.totalorder %s26, 1
        %s342 = scalar_select %p341, %s26, 1
        %s343 = smul.addr %s342, 12
        %s344 = smul.addr %s343, 2
        %s345 = scalar_lea.vmem %s8, %s344
        %p346 = scmp.lt.s32.totalorder %s26, 1
        %s347 = scalar_select %p346, %s26, 1
        %s348 = smul.addr %s347, 12
        %s349 = smul.addr %s348, 8
        %s350 = scalar_lea.vmem %s6, %s349
        %p351 = scmp.lt.s32.totalorder %s26, 1
        %s352 = scalar_select %p351, %s26, 1
        %s353 = smul.addr %s352, 12
        %s354 = smul.addr %s353, 4
        %s355 = scalar_lea.vmem %s7, %s354
        %p356 = scmp.lt.s32.totalorder %s26, 1
        %s357 = scalar_select %p356, %s26, 1
        %s358 = smul.addr %s357, 12
        %s359 = smul.addr %s358, 2
        %s360 = scalar_lea.vmem %s8, %s359
        %v362 = vld [vmem:[%s298] ss:$2 sm:$0xff]
        %s363 = scalar_lea.vmem %s298, 16 [#allocation5]
        %v364 = vld [vmem:[%s363] ss:$2 sm:$0xff]
        %s365 = scalar_lea.vmem %s298, 32 [#allocation5]
        %v366 = vld [vmem:[%s365] ss:$2 sm:$0xff]
        %s367 = scalar_lea.vmem %s298, 48 [#allocation5]
        %v368 = vld [vmem:[%s367] ss:$2 sm:$0xff]
        %s369 = scalar_lea.vmem %s298, 64 [#allocation5]
        %v370 = vld [vmem:[%s369] ss:$2 sm:$0xff]
        %s371 = scalar_lea.vmem %s298, 80 [#allocation5]
        %v372 = vld [vmem:[%s371] ss:$2 sm:$0xff]
        %s373 = scalar_lea.vmem %s298, 1 [#allocation5]
        %v374 = vld [vmem:[%s373] ss:$2 sm:$0xff]
        %s375 = scalar_lea.vmem %s298, 17 [#allocation5]
        %v376 = vld [vmem:[%s375] ss:$2 sm:$0xff]
        %s377 = scalar_lea.vmem %s298, 33 [#allocation5]
        %v378 = vld [vmem:[%s377] ss:$2 sm:$0xff]
        %s379 = scalar_lea.vmem %s298, 49 [#allocation5]
        %v380 = vld [vmem:[%s379] ss:$2 sm:$0xff]
        %s381 = scalar_lea.vmem %s298, 65 [#allocation5]
        %v382 = vld [vmem:[%s381] ss:$2 sm:$0xff]
        %s383 = scalar_lea.vmem %s298, 81 [#allocation5]
        %v384 = vld [vmem:[%s383] ss:$2 sm:$0xff]
        %v385 = vadd.f32 %v362, %v374
        %v386 = vadd.f32 %v364, %v376
        %v387 = vadd.f32 %v366, %v378
        %v388 = vadd.f32 %v368, %v380
        %v389 = vadd.f32 %v370, %v382
        %v390 = vadd.f32 %v372, %v384
        %v391 = vmul.f32 %v385, 0.5
        %v392 = vmul.f32 %v386, 0.5
        %v393 = vmul.f32 %v387, 0.5
        %v394 = vmul.f32 %v388, 0.5
        %v395 = vmul.f32 %v389, 0.5
        %v396 = vmul.f32 %v390, 0.5
        %v397 = vsub.f32 %v362, %v374
        %v398 = vsub.f32 %v364, %v376
        %v399 = vsub.f32 %v366, %v378
        %v400 = vsub.f32 %v368, %v380
        %v401 = vsub.f32 %v370, %v382
        %v402 = vsub.f32 %v372, %v384
        %v403 = vand.u32 2147483647, %v397
        %v404 = vand.u32 2147483647, %v398
        %v405 = vand.u32 2147483647, %v399
        %v406 = vand.u32 2147483647, %v400
        %v407 = vand.u32 2147483647, %v401
        %v408 = vand.u32 2147483647, %v402
        %v409 = vld [vmem:[%s1] sm:$0xf]
        %v410 = vld [vmem:[%s1 + $0x4] sm:$0xf]
        %v411 = vld [vmem:[%s1 + $0x8] sm:$0xf]
        %v412 = vld [vmem:[%s1 + $0xc] sm:$0xf]
        %v413 = vpack.c.bf16 %v392, %v391
        %v414 = vpack.c.bf16 %v394, %v393
        %v415 = vpack.c.bf16 %v396, %v395
        %v416 = vunpack.c.l.bf16 %v413
        %v417 = vunpack.c.h.bf16 %v413
        %v418 = vunpack.c.l.bf16 %v414
        %v419 = vunpack.c.h.bf16 %v414
        %v420 = vunpack.c.l.bf16 %v415
        %v421 = vunpack.c.h.bf16 %v415
        %v422 = vsub.f32 %v391, %v416
        %v423 = vsub.f32 %v392, %v417
        %v424 = vsub.f32 %v393, %v418
        %v425 = vsub.f32 %v394, %v419
        %v426 = vsub.f32 %v395, %v420
        %v427 = vsub.f32 %v396, %v421
        %v428 = vpack.c.bf16 %v423, %v422
        %v429 = vpack.c.bf16 %v425, %v424
        %v430 = vpack.c.bf16 %v427, %v426
        %v431 = vunpack.c.l.bf16 %v428
        %v432 = vunpack.c.h.bf16 %v428
        %v433 = vunpack.c.l.bf16 %v429
        %v434 = vunpack.c.h.bf16 %v429
        %v435 = vunpack.c.l.bf16 %v430
        %v436 = vunpack.c.h.bf16 %v430
        %v437 = vsub.f32 %v422, %v431
        %v438 = vsub.f32 %v423, %v432
        %v439 = vsub.f32 %v424, %v433
        %v440 = vsub.f32 %v425, %v434
        %v441 = vsub.f32 %v426, %v435
        %v442 = vsub.f32 %v427, %v436
        %v443 = vpack.c.bf16 %v438, %v437
        %v444 = vpack.c.bf16 %v440, %v439
        %v445 = vpack.c.bf16 %v442, %v441
        %v450 = vunpack.c.l.b16 %v409
        %v451 = vunpack.c.l.b16 %v410
        %v452 = vunpack.c.l.b16 %v411
        %v453 = vunpack.c.l.b16 %v412
        %v454 = vpack.c.b16 %v451, %v450
        %v455 = vpack.c.b16 %v453, %v452
        %vm458 = vcmask 261120
        %v460 = vsel %vm458, %v428, 0
        %v463 = vsel %vm458, %v429, 0
        %v466 = vsel %vm458, %v430, 0
        %468 = vmatprep.subr.bf16.mxu0 0
        %469 = vmatpush1.bf16.msra.mxu0 0
        %470 = vmatprep.subr.bf16.mxu0 0
        %471 = vmatpush1.bf16.msra.mxu0 0
        %472 = vmatprep.subr.bf16.mxu0 0
        %473 = vmatpush1.bf16.msra.mxu0 0
        %474 = vmatprep.subr.bf16.mxu0 0
        %475 = vmatpush1.bf16.msra.mxu0 0
        %476 = vmatprep.subr.bf16.mxu0 0
        %477 = vmatpush1.bf16.msra.mxu0 0
        %478 = vmatprep.subr.bf16.mxu0 0
        %479 = vmatpush1.bf16.msra.mxu0 0
        %480 = vmatprep.subr.bf16.mxu0 0
        %481 = vmatpush1.bf16.msra.mxu0 %v455
        %482 = vmatprep.subr.bf16.mxu0 0
        %483 = vmatpush1.bf16.msra.mxu0 %v454
        %484 = vmatprep.subr.bf16.mxu0 0
        %485 = vmatpush2.bf16.msra.mxu0 0
        %486 = vmatprep.subr.bf16.mxu0 0
        %487 = vmatpush2.bf16.msra.mxu0 0
        %488 = vmatprep.subr.bf16.mxu0 0
        %489 = vmatpush2.bf16.msra.mxu0 0
        %490 = vmatprep.subr.bf16.mxu0 0
        %491 = vmatpush2.bf16.msra.mxu0 0
        %492 = vmatprep.subr.bf16.mxu0 0
        %493 = vmatpush2.bf16.msra.mxu0 0
        %494 = vmatprep.subr.bf16.mxu0 0
        %495 = vmatpush2.bf16.msra.mxu0 0
        %496 = vmatprep.subr.bf16.mxu0 0
        %497 = vmatpush2.bf16.msra.mxu0 0
        %498 = vmatprep.subr.bf16.mxu0 0
        %499 = vmatpush2.bf16.msra.mxu0 0
        %500 = vmatprep.mubr.bf16.mxu0 0
        %501 = vmatmul.mubr.bf16.gmra.mxu0 %v460
        %v502 = vpop.f32.mrf.mxu0
        %v503 = vadd.f32 0.0, %v502
        %v504 = vpop.f32.mrf.mxu0
        %v505 = vpop.f32.mrf.mxu0
        %v506 = vadd.f32 0.0, %v505
        %v507 = vpop.f32.mrf.mxu0
        %508 = vmatprep.mubr.bf16.mxu0 0
        %509 = vmatmul.mubr.bf16.gmra.mxu0 %v463
        %v510 = vpop.f32.mrf.mxu0
        %v511 = vadd.f32 0.0, %v510
        %v512 = vpop.f32.mrf.mxu0
        %v513 = vpop.f32.mrf.mxu0
        %v514 = vadd.f32 0.0, %v513
        %v515 = vpop.f32.mrf.mxu0
        %516 = vmatprep.mubr.bf16.mxu0 0
        %517 = vmatmul.mubr.bf16.gmra.mxu0 %v466
        %v518 = vpop.f32.mrf.mxu0
        %v519 = vadd.f32 0.0, %v518
        %v520 = vpop.f32.mrf.mxu0
        %v521 = vpop.f32.mrf.mxu0
        %v522 = vadd.f32 0.0, %v521
        %v523 = vpop.f32.mrf.mxu0
        %524 = vdwg.mxu0
        %v526 = vsel %vm458, %v413, 0
        %v529 = vsel %vm458, %v414, 0
        %v532 = vsel %vm458, %v415, 0
        %534 = vmatprep.subr.bf16.mxu0 0
        %535 = vmatpush1.bf16.msra.mxu0 0
        %536 = vmatprep.subr.bf16.mxu0 0
        %537 = vmatpush1.bf16.msra.mxu0 0
        %538 = vmatprep.subr.bf16.mxu0 0
        %539 = vmatpush1.bf16.msra.mxu0 0
        %540 = vmatprep.subr.bf16.mxu0 0
        %541 = vmatpush1.bf16.msra.mxu0 0
        %542 = vmatprep.subr.bf16.mxu0 0
        %543 = vmatpush1.bf16.msra.mxu0 0
        %544 = vmatprep.subr.bf16.mxu0 0
        %545 = vmatpush1.bf16.msra.mxu0 0
        %546 = vmatprep.subr.bf16.mxu0 0
        %547 = vmatpush1.bf16.msra.mxu0 %v455
        %548 = vmatprep.subr.bf16.mxu0 0
        %549 = vmatpush1.bf16.msra.mxu0 %v454
        %550 = vmatprep.subr.bf16.mxu0 0
        %551 = vmatpush2.bf16.msra.mxu0 0
        %552 = vmatprep.subr.bf16.mxu0 0
        %553 = vmatpush2.bf16.msra.mxu0 0
        %554 = vmatprep.subr.bf16.mxu0 0
        %555 = vmatpush2.bf16.msra.mxu0 0
        %556 = vmatprep.subr.bf16.mxu0 0
        %557 = vmatpush2.bf16.msra.mxu0 0
        %558 = vmatprep.subr.bf16.mxu0 0
        %559 = vmatpush2.bf16.msra.mxu0 0
        %560 = vmatprep.subr.bf16.mxu0 0
        %561 = vmatpush2.bf16.msra.mxu0 0
        %562 = vmatprep.subr.bf16.mxu0 0
        %563 = vmatpush2.bf16.msra.mxu0 0
        %564 = vmatprep.subr.bf16.mxu0 0
        %565 = vmatpush2.bf16.msra.mxu0 0
        %566 = vmatprep.mubr.bf16.mxu0 0
        %567 = vmatmul.mubr.bf16.gmra.mxu0 %v526
        %v568 = vpop.f32.mrf.mxu0
        %v569 = vadd.f32 %v503, %v568
        %v570 = vpop.f32.mrf.mxu0
        %v571 = vpop.f32.mrf.mxu0
        %v572 = vadd.f32 %v506, %v571
        %v573 = vpop.f32.mrf.mxu0
        %574 = vmatprep.mubr.bf16.mxu0 0
        %575 = vmatmul.mubr.bf16.gmra.mxu0 %v529
        %v576 = vpop.f32.mrf.mxu0
        %v577 = vadd.f32 %v511, %v576
        %v578 = vpop.f32.mrf.mxu0
        %v579 = vpop.f32.mrf.mxu0
        %v580 = vadd.f32 %v514, %v579
        %v581 = vpop.f32.mrf.mxu0
        %582 = vmatprep.mubr.bf16.mxu0 0
        %583 = vmatmul.mubr.bf16.gmra.mxu0 %v532
        %v584 = vpop.f32.mrf.mxu0
        %v585 = vadd.f32 %v519, %v584
        %v586 = vpop.f32.mrf.mxu0
        %v587 = vpop.f32.mrf.mxu0
        %v588 = vadd.f32 %v522, %v587
        %v589 = vpop.f32.mrf.mxu0
        %590 = vdwg.mxu0
        %v592 = vsel %vm458, %v443, 0
        %v595 = vsel %vm458, %v444, 0
        %v598 = vsel %vm458, %v445, 0
        %600 = vmatprep.subr.bf16.mxu0 0
        %601 = vmatpush1.bf16.msra.mxu0 0
        %602 = vmatprep.subr.bf16.mxu0 0
        %603 = vmatpush1.bf16.msra.mxu0 0
        %604 = vmatprep.subr.bf16.mxu0 0
        %605 = vmatpush1.bf16.msra.mxu0 0
        %606 = vmatprep.subr.bf16.mxu0 0
        %607 = vmatpush1.bf16.msra.mxu0 0
        %608 = vmatprep.subr.bf16.mxu0 0
        %609 = vmatpush1.bf16.msra.mxu0 0
        %610 = vmatprep.subr.bf16.mxu0 0
        %611 = vmatpush1.bf16.msra.mxu0 0
        %612 = vmatprep.subr.bf16.mxu0 0
        %613 = vmatpush1.bf16.msra.mxu0 %v455
        %614 = vmatprep.subr.bf16.mxu0 0
        %615 = vmatpush1.bf16.msra.mxu0 %v454
        %616 = vmatprep.subr.bf16.mxu0 0
        %617 = vmatpush2.bf16.msra.mxu0 0
        %618 = vmatprep.subr.bf16.mxu0 0
        %619 = vmatpush2.bf16.msra.mxu0 0
        %620 = vmatprep.subr.bf16.mxu0 0
        %621 = vmatpush2.bf16.msra.mxu0 0
        %622 = vmatprep.subr.bf16.mxu0 0
        %623 = vmatpush2.bf16.msra.mxu0 0
        %624 = vmatprep.subr.bf16.mxu0 0
        %625 = vmatpush2.bf16.msra.mxu0 0
        %626 = vmatprep.subr.bf16.mxu0 0
        %627 = vmatpush2.bf16.msra.mxu0 0
        %628 = vmatprep.subr.bf16.mxu0 0
        %629 = vmatpush2.bf16.msra.mxu0 0
        %630 = vmatprep.subr.bf16.mxu0 0
        %631 = vmatpush2.bf16.msra.mxu0 0
        %632 = vmatprep.mubr.bf16.mxu0 0
        %633 = vmatmul.mubr.bf16.gmra.mxu0 %v592
        %v634 = vpop.f32.mrf.mxu0
        %v635 = vadd.f32 0.0, %v634
        %v636 = vpop.f32.mrf.mxu0
        %v637 = vpop.f32.mrf.mxu0
        %v638 = vadd.f32 0.0, %v637
        %v639 = vpop.f32.mrf.mxu0
        %640 = vmatprep.mubr.bf16.mxu0 0
        %641 = vmatmul.mubr.bf16.gmra.mxu0 %v595
        %v642 = vpop.f32.mrf.mxu0
        %v643 = vadd.f32 0.0, %v642
        %v644 = vpop.f32.mrf.mxu0
        %v645 = vpop.f32.mrf.mxu0
        %v646 = vadd.f32 0.0, %v645
        %v647 = vpop.f32.mrf.mxu0
        %648 = vmatprep.mubr.bf16.mxu0 0
        %649 = vmatmul.mubr.bf16.gmra.mxu0 %v598
        %v650 = vpop.f32.mrf.mxu0
        %v651 = vadd.f32 0.0, %v650
        %v652 = vpop.f32.mrf.mxu0
        %v653 = vpop.f32.mrf.mxu0
        %v654 = vadd.f32 0.0, %v653
        %v655 = vpop.f32.mrf.mxu0
        %656 = vdwg.mxu0
        %v657 = vadd.f32 %v569, %v635
        %v658 = vadd.f32 %v572, %v638
        %v659 = vadd.f32 %v577, %v643
        %v660 = vadd.f32 %v580, %v646
        %v661 = vadd.f32 %v585, %v651
        %v662 = vadd.f32 %v588, %v654
        %v663 = vpack.c.bf16 %v404, %v403
        %v664 = vpack.c.bf16 %v406, %v405
        %v665 = vpack.c.bf16 %v408, %v407
        %v666 = vunpack.c.l.bf16 %v663
        %v667 = vunpack.c.h.bf16 %v663
        %v668 = vunpack.c.l.bf16 %v664
        %v669 = vunpack.c.h.bf16 %v664
        %v670 = vunpack.c.l.bf16 %v665
        %v671 = vunpack.c.h.bf16 %v665
        %v672 = vsub.f32 %v403, %v666
        %v673 = vsub.f32 %v404, %v667
        %v674 = vsub.f32 %v405, %v668
        %v675 = vsub.f32 %v406, %v669
        %v676 = vsub.f32 %v407, %v670
        %v677 = vsub.f32 %v408, %v671
        %v678 = vpack.c.bf16 %v673, %v672
        %v679 = vpack.c.bf16 %v675, %v674
        %v680 = vpack.c.bf16 %v677, %v676
        %v681 = vunpack.c.l.bf16 %v678
        %v682 = vunpack.c.h.bf16 %v678
        %v683 = vunpack.c.l.bf16 %v679
        %v684 = vunpack.c.h.bf16 %v679
        %v685 = vunpack.c.l.bf16 %v680
        %v686 = vunpack.c.h.bf16 %v680
        %v687 = vsub.f32 %v672, %v681
        %v688 = vsub.f32 %v673, %v682
        %v689 = vsub.f32 %v674, %v683
        %v690 = vsub.f32 %v675, %v684
        %v691 = vsub.f32 %v676, %v685
        %v692 = vsub.f32 %v677, %v686
        %v693 = vpack.c.bf16 %v688, %v687
        %v694 = vpack.c.bf16 %v690, %v689
        %v695 = vpack.c.bf16 %v692, %v691
        %v697 = vsel %vm458, %v678, 0
        %v700 = vsel %vm458, %v679, 0
        %v703 = vsel %vm458, %v680, 0
        %705 = vmatprep.subr.bf16.mxu0 0
        %706 = vmatpush1.bf16.msra.mxu0 0
        %707 = vmatprep.subr.bf16.mxu0 0
        %708 = vmatpush1.bf16.msra.mxu0 0
        %709 = vmatprep.subr.bf16.mxu0 0
        %710 = vmatpush1.bf16.msra.mxu0 0
        %711 = vmatprep.subr.bf16.mxu0 0
        %712 = vmatpush1.bf16.msra.mxu0 0
        %713 = vmatprep.subr.bf16.mxu0 0
        %714 = vmatpush1.bf16.msra.mxu0 0
        %715 = vmatprep.subr.bf16.mxu0 0
        %716 = vmatpush1.bf16.msra.mxu0 0
        %717 = vmatprep.subr.bf16.mxu0 0
        %718 = vmatpush1.bf16.msra.mxu0 %v455
        %719 = vmatprep.subr.bf16.mxu0 0
        %720 = vmatpush1.bf16.msra.mxu0 %v454
        %721 = vmatprep.subr.bf16.mxu0 0
        %722 = vmatpush2.bf16.msra.mxu0 0
        %723 = vmatprep.subr.bf16.mxu0 0
        %724 = vmatpush2.bf16.msra.mxu0 0
        %725 = vmatprep.subr.bf16.mxu0 0
        %726 = vmatpush2.bf16.msra.mxu0 0
        %727 = vmatprep.subr.bf16.mxu0 0
        %728 = vmatpush2.bf16.msra.mxu0 0
        %729 = vmatprep.subr.bf16.mxu0 0
        %730 = vmatpush2.bf16.msra.mxu0 0
        %731 = vmatprep.subr.bf16.mxu0 0
        %732 = vmatpush2.bf16.msra.mxu0 0
        %733 = vmatprep.subr.bf16.mxu0 0
        %734 = vmatpush2.bf16.msra.mxu0 0
        %735 = vmatprep.subr.bf16.mxu0 0
        %736 = vmatpush2.bf16.msra.mxu0 0
        %737 = vmatprep.mubr.bf16.mxu0 0
        %738 = vmatmul.mubr.bf16.gmra.mxu0 %v697
        %v739 = vpop.f32.mrf.mxu0
        %v740 = vadd.f32 0.0, %v739
        %v741 = vpop.f32.mrf.mxu0
        %v742 = vpop.f32.mrf.mxu0
        %v743 = vadd.f32 0.0, %v742
        %v744 = vpop.f32.mrf.mxu0
        %745 = vmatprep.mubr.bf16.mxu0 0
        %746 = vmatmul.mubr.bf16.gmra.mxu0 %v700
        %v747 = vpop.f32.mrf.mxu0
        %v748 = vadd.f32 0.0, %v747
        %v749 = vpop.f32.mrf.mxu0
        %v750 = vpop.f32.mrf.mxu0
        %v751 = vadd.f32 0.0, %v750
        %v752 = vpop.f32.mrf.mxu0
        %753 = vmatprep.mubr.bf16.mxu0 0
        %754 = vmatmul.mubr.bf16.gmra.mxu0 %v703
        %v755 = vpop.f32.mrf.mxu0
        %v756 = vadd.f32 0.0, %v755
        %v757 = vpop.f32.mrf.mxu0
        %v758 = vpop.f32.mrf.mxu0
        %v759 = vadd.f32 0.0, %v758
        %v760 = vpop.f32.mrf.mxu0
        %761 = vdwg.mxu0
        %v763 = vsel %vm458, %v663, 0
        %v766 = vsel %vm458, %v664, 0
        %v769 = vsel %vm458, %v665, 0
        %771 = vmatprep.subr.bf16.mxu0 0
        %772 = vmatpush1.bf16.msra.mxu0 0
        %773 = vmatprep.subr.bf16.mxu0 0
        %774 = vmatpush1.bf16.msra.mxu0 0
        %775 = vmatprep.subr.bf16.mxu0 0
        %776 = vmatpush1.bf16.msra.mxu0 0
        %777 = vmatprep.subr.bf16.mxu0 0
        %778 = vmatpush1.bf16.msra.mxu0 0
        %779 = vmatprep.subr.bf16.mxu0 0
        %780 = vmatpush1.bf16.msra.mxu0 0
        %781 = vmatprep.subr.bf16.mxu0 0
        %782 = vmatpush1.bf16.msra.mxu0 0
        %783 = vmatprep.subr.bf16.mxu0 0
        %784 = vmatpush1.bf16.msra.mxu0 %v455
        %785 = vmatprep.subr.bf16.mxu0 0
        %786 = vmatpush1.bf16.msra.mxu0 %v454
        %787 = vmatprep.subr.bf16.mxu0 0
        %788 = vmatpush2.bf16.msra.mxu0 0
        %789 = vmatprep.subr.bf16.mxu0 0
        %790 = vmatpush2.bf16.msra.mxu0 0
        %791 = vmatprep.subr.bf16.mxu0 0
        %792 = vmatpush2.bf16.msra.mxu0 0
        %793 = vmatprep.subr.bf16.mxu0 0
        %794 = vmatpush2.bf16.msra.mxu0 0
        %795 = vmatprep.subr.bf16.mxu0 0
        %796 = vmatpush2.bf16.msra.mxu0 0
        %797 = vmatprep.subr.bf16.mxu0 0
        %798 = vmatpush2.bf16.msra.mxu0 0
        %799 = vmatprep.subr.bf16.mxu0 0
        %800 = vmatpush2.bf16.msra.mxu0 0
        %801 = vmatprep.subr.bf16.mxu0 0
        %802 = vmatpush2.bf16.msra.mxu0 0
        %803 = vmatprep.mubr.bf16.mxu0 0
        %804 = vmatmul.mubr.bf16.gmra.mxu0 %v763
        %v805 = vpop.f32.mrf.mxu0
        %v806 = vadd.f32 %v740, %v805
        %v807 = vpop.f32.mrf.mxu0
        %v808 = vpop.f32.mrf.mxu0
        %v809 = vadd.f32 %v743, %v808
        %v810 = vpop.f32.mrf.mxu0
        %811 = vmatprep.mubr.bf16.mxu0 0
        %812 = vmatmul.mubr.bf16.gmra.mxu0 %v766
        %v813 = vpop.f32.mrf.mxu0
        %v814 = vadd.f32 %v748, %v813
        %v815 = vpop.f32.mrf.mxu0
        %v816 = vpop.f32.mrf.mxu0
        %v817 = vadd.f32 %v751, %v816
        %v818 = vpop.f32.mrf.mxu0
        %819 = vmatprep.mubr.bf16.mxu0 0
        %820 = vmatmul.mubr.bf16.gmra.mxu0 %v769
        %v821 = vpop.f32.mrf.mxu0
        %v822 = vadd.f32 %v756, %v821
        %v823 = vpop.f32.mrf.mxu0
        %v824 = vpop.f32.mrf.mxu0
        %v825 = vadd.f32 %v759, %v824
        %v826 = vpop.f32.mrf.mxu0
        %827 = vdwg.mxu0
        %v829 = vsel %vm458, %v693, 0
        %v832 = vsel %vm458, %v694, 0
        %v835 = vsel %vm458, %v695, 0
        %837 = vmatprep.subr.bf16.mxu0 0
        %838 = vmatpush1.bf16.msra.mxu0 0
        %839 = vmatprep.subr.bf16.mxu0 0
        %840 = vmatpush1.bf16.msra.mxu0 0
        %841 = vmatprep.subr.bf16.mxu0 0
        %842 = vmatpush1.bf16.msra.mxu0 0
        %843 = vmatprep.subr.bf16.mxu0 0
        %844 = vmatpush1.bf16.msra.mxu0 0
        %845 = vmatprep.subr.bf16.mxu0 0
        %846 = vmatpush1.bf16.msra.mxu0 0
        %847 = vmatprep.subr.bf16.mxu0 0
        %848 = vmatpush1.bf16.msra.mxu0 0
        %849 = vmatprep.subr.bf16.mxu0 0
        %850 = vmatpush1.bf16.msra.mxu0 %v455
        %851 = vmatprep.subr.bf16.mxu0 0
        %852 = vmatpush1.bf16.msra.mxu0 %v454
        %853 = vmatprep.subr.bf16.mxu0 0
        %854 = vmatpush2.bf16.msra.mxu0 0
        %855 = vmatprep.subr.bf16.mxu0 0
        %856 = vmatpush2.bf16.msra.mxu0 0
        %857 = vmatprep.subr.bf16.mxu0 0
        %858 = vmatpush2.bf16.msra.mxu0 0
        %859 = vmatprep.subr.bf16.mxu0 0
        %860 = vmatpush2.bf16.msra.mxu0 0
        %861 = vmatprep.subr.bf16.mxu0 0
        %862 = vmatpush2.bf16.msra.mxu0 0
        %863 = vmatprep.subr.bf16.mxu0 0
        %864 = vmatpush2.bf16.msra.mxu0 0
        %865 = vmatprep.subr.bf16.mxu0 0
        %866 = vmatpush2.bf16.msra.mxu0 0
        %867 = vmatprep.subr.bf16.mxu0 0
        %868 = vmatpush2.bf16.msra.mxu0 0
        %869 = vmatprep.mubr.bf16.mxu0 0
        %870 = vmatmul.mubr.bf16.gmra.mxu0 %v829
        %v871 = vpop.f32.mrf.mxu0
        %v872 = vadd.f32 0.0, %v871
        %v873 = vpop.f32.mrf.mxu0
        %v874 = vpop.f32.mrf.mxu0
        %v875 = vadd.f32 0.0, %v874
        %v876 = vpop.f32.mrf.mxu0
        %877 = vmatprep.mubr.bf16.mxu0 0
        %878 = vmatmul.mubr.bf16.gmra.mxu0 %v832
        %v879 = vpop.f32.mrf.mxu0
        %v880 = vadd.f32 0.0, %v879
        %v881 = vpop.f32.mrf.mxu0
        %v882 = vpop.f32.mrf.mxu0
        %v883 = vadd.f32 0.0, %v882
        %v884 = vpop.f32.mrf.mxu0
        %885 = vmatprep.mubr.bf16.mxu0 0
        %886 = vmatmul.mubr.bf16.gmra.mxu0 %v835
        %v887 = vpop.f32.mrf.mxu0
        %v888 = vadd.f32 0.0, %v887
        %v889 = vpop.f32.mrf.mxu0
        %v890 = vpop.f32.mrf.mxu0
        %v891 = vadd.f32 0.0, %v890
        %v892 = vpop.f32.mrf.mxu0
        %893 = vdwg.mxu0
        %v894 = vadd.f32 %v806, %v872
        %v895 = vadd.f32 %v809, %v875
        %v896 = vadd.f32 %v814, %v880
        %v897 = vadd.f32 %v817, %v883
        %v898 = vadd.f32 %v822, %v888
        %v899 = vadd.f32 %v825, %v891
        %vm900 = vcmask 130048
        %901 = vst.msk [vmem:[%s324] sm:$0xff] %vm900, %v657
        %902 = vst.msk [vmem:[%s324 + $0x8] sm:$0xff] %vm900, %v658
        %v903 = vand.u32 2147483647, %v657
        %v904 = vand.u32 2147483647, %v658
        %907 = vrot.lane.b32.xlu0 %v903, 112
        %v908 = vpop.permute.xlu0 %907
        %909 = vrot.lane.b32.xlu0 %v904, 112
        %v910 = vpop.permute.xlu0 %909
        %s913 = scalar_lea.vmem %s324, 16 [#allocation8]
        %914 = vst.msk [vmem:[%s913] sm:$0xff] %vm900, %v908
        %915 = vst.msk [vmem:[%s913 + $0x8] sm:$0xff] %vm900, %v910
        %s916 = scalar_lea.vmem %s324, 32 [#allocation8]
        %917 = vst.msk [vmem:[%s916] sm:$0xff] %vm900, %v894
        %918 = vst.msk [vmem:[%s916 + $0x8] sm:$0xff] %vm900, %v895
        %v919 = vand.u32 2147483647, %v894
        %v920 = vand.u32 2147483647, %v895
        %923 = vrot.lane.b32.xlu0 %v919, 112
        %v924 = vpop.permute.xlu0 %923
        %925 = vrot.lane.b32.xlu0 %v920, 112
        %v926 = vpop.permute.xlu0 %925
        %s929 = scalar_lea.vmem %s324, 48 [#allocation8]
        %930 = vst.msk [vmem:[%s929] sm:$0xff] %vm900, %v924
        %931 = vst.msk [vmem:[%s929 + $0x8] sm:$0xff] %vm900, %v926
        %s932 = scalar_lea.vmem %s324, 64 [#allocation8]
        %933 = vst.msk [vmem:[%s932] sm:$0xff] %vm900, %v659
        %934 = vst.msk [vmem:[%s932 + $0x8] sm:$0xff] %vm900, %v660
        %v935 = vand.u32 2147483647, %v659
        %v936 = vand.u32 2147483647, %v660
        %939 = vrot.lane.b32.xlu0 %v935, 112
        %v940 = vpop.permute.xlu0 %939
        %941 = vrot.lane.b32.xlu0 %v936, 112
        %v942 = vpop.permute.xlu0 %941
        %s945 = scalar_lea.vmem %s324, 80 [#allocation8]
        %946 = vst.msk [vmem:[%s945] sm:$0xff] %vm900, %v940
        %947 = vst.msk [vmem:[%s945 + $0x8] sm:$0xff] %vm900, %v942
        %s948 = scalar_lea.vmem %s324, 96 [#allocation8]
        %949 = vst.msk [vmem:[%s948] sm:$0xff] %vm900, %v896
        %950 = vst.msk [vmem:[%s948 + $0x8] sm:$0xff] %vm900, %v897
        %v951 = vand.u32 2147483647, %v896
        %v952 = vand.u32 2147483647, %v897
        %955 = vrot.lane.b32.xlu0 %v951, 112
        %v956 = vpop.permute.xlu0 %955
        %957 = vrot.lane.b32.xlu0 %v952, 112
        %v958 = vpop.permute.xlu0 %957
        %s961 = scalar_lea.vmem %s324, 112 [#allocation8]
        %962 = vst.msk [vmem:[%s961] sm:$0xff] %vm900, %v956
        %963 = vst.msk [vmem:[%s961 + $0x8] sm:$0xff] %vm900, %v958
        %s964 = scalar_lea.vmem %s324, 128 [#allocation8]
        %965 = vst.msk [vmem:[%s964] sm:$0xff] %vm900, %v661
        %966 = vst.msk [vmem:[%s964 + $0x8] sm:$0xff] %vm900, %v662
        %v967 = vand.u32 2147483647, %v661
        %v968 = vand.u32 2147483647, %v662
        %971 = vrot.lane.b32.xlu0 %v967, 112
        %v972 = vpop.permute.xlu0 %971
        %973 = vrot.lane.b32.xlu0 %v968, 112
        %v974 = vpop.permute.xlu0 %973
        %s977 = scalar_lea.vmem %s324, 144 [#allocation8]
        %978 = vst.msk [vmem:[%s977] sm:$0xff] %vm900, %v972
        %979 = vst.msk [vmem:[%s977 + $0x8] sm:$0xff] %vm900, %v974
        %s980 = scalar_lea.vmem %s324, 160 [#allocation8]
        %981 = vst.msk [vmem:[%s980] sm:$0xff] %vm900, %v898
        %982 = vst.msk [vmem:[%s980 + $0x8] sm:$0xff] %vm900, %v899
        %v983 = vand.u32 2147483647, %v898
        %v984 = vand.u32 2147483647, %v899
        %987 = vrot.lane.b32.xlu0 %v983, 112
        %v988 = vpop.permute.xlu0 %987
        %989 = vrot.lane.b32.xlu0 %v984, 112
        %v990 = vpop.permute.xlu0 %989
        %s993 = scalar_lea.vmem %s324, 176 [#allocation8]
        %994 = vst.msk [vmem:[%s993] sm:$0xff] %vm900, %v988
        %995 = vst.msk [vmem:[%s993 + $0x8] sm:$0xff] %vm900, %v990
        %996 = vst.msk [vmem:[#allocation2] sm:$0xff] %vm900, %v657
        %997 = vst.msk [vmem:[#allocation2 + $0x8] sm:$0xff] %vm900, %v658
        %998 = vst.msk [vmem:[#allocation2 + $0x10] sm:$0xff] %vm900, %v659
        %999 = vst.msk [vmem:[#allocation2 + $0x18] sm:$0xff] %vm900, %v660
        %1000 = vst.msk [vmem:[#allocation2 + $0x20] sm:$0xff] %vm900, %v661
        %1001 = vst.msk [vmem:[#allocation2 + $0x28] sm:$0xff] %vm900, %v662
        %v1002 = vld [vmem:[#allocation2] ss:$2 sm:$0xff]
        %s1003 = scalar_lea.vmem [#allocation2], 16
        %v1004 = vld [vmem:[%s1003] ss:$2 sm:$0xff]
        %s1005 = scalar_lea.vmem [#allocation2], 32
        %v1006 = vld [vmem:[%s1005] ss:$2 sm:$0xff]
        %s1007 = scalar_lea.vmem [#allocation2], 1
        %v1008 = vld [vmem:[%s1007] ss:$2 sm:$0xff]
        %s1009 = scalar_lea.vmem [#allocation2], 17
        %v1010 = vld [vmem:[%s1009] ss:$2 sm:$0xff]
        %s1011 = scalar_lea.vmem [#allocation2], 33
        %v1012 = vld [vmem:[%s1011] ss:$2 sm:$0xff]
        %v1013 = vadd.f32 %v1002, %v1008
        %v1014 = vadd.f32 %v1004, %v1010
        %v1015 = vadd.f32 %v1006, %v1012
        %v1016 = vmul.f32 %v1013, 0.5
        %v1017 = vmul.f32 %v1014, 0.5
        %v1018 = vmul.f32 %v1015, 0.5
        %v1019 = vsub.f32 %v1002, %v1008
        %v1020 = vsub.f32 %v1004, %v1010
        %v1021 = vsub.f32 %v1006, %v1012
        %v1022 = vand.u32 2147483647, %v1019
        %v1023 = vand.u32 2147483647, %v1020
        %v1024 = vand.u32 2147483647, %v1021
        %v1025 = vld [vmem:[%s2] sm:$0xf]
        %v1026 = vld [vmem:[%s2 + $0x4] sm:$0xf]
        %v1027 = vpack.c.bf16 %v1017, %v1016
        %v1028 = vpack.c.bf16 %v1018, %v1018
        %v1029 = vunpack.c.l.bf16 %v1027
        %v1030 = vunpack.c.h.bf16 %v1027
        %v1031 = vunpack.c.l.bf16 %v1028
        %v1032 = vsub.f32 %v1016, %v1029
        %v1033 = vsub.f32 %v1017, %v1030
        %v1034 = vsub.f32 %v1018, %v1031
        %v1035 = vpack.c.bf16 %v1033, %v1032
        %v1036 = vpack.c.bf16 %v1034, %v1034
        %v1037 = vunpack.c.l.bf16 %v1035
        %v1038 = vunpack.c.h.bf16 %v1035
        %v1039 = vunpack.c.l.bf16 %v1036
        %v1040 = vsub.f32 %v1032, %v1037
        %v1041 = vsub.f32 %v1033, %v1038
        %v1042 = vsub.f32 %v1034, %v1039
        %v1043 = vpack.c.bf16 %v1041, %v1040
        %v1044 = vpack.c.bf16 %v1042, %v1042
        %v1047 = vunpack.c.l.b16 %v1025
        %v1048 = vunpack.c.l.b16 %v1026
        %v1049 = vpack.c.b16 %v1048, %v1047
        %v1052 = vsel %vm900, %v1035, 0
        %v1055 = vsel %vm900, %v1036, 0
        %1057 = vmatprep.subr.bf16.mxu0 0
        %1058 = vmatpush1.bf16.msra.mxu0 0
        %1059 = vmatprep.subr.bf16.mxu0 0
        %1060 = vmatpush1.bf16.msra.mxu0 0
        %1061 = vmatprep.subr.bf16.mxu0 0
        %1062 = vmatpush1.bf16.msra.mxu0 0
        %1063 = vmatprep.subr.bf16.mxu0 0
        %1064 = vmatpush1.bf16.msra.mxu0 0
        %1065 = vmatprep.subr.bf16.mxu0 0
        %1066 = vmatpush1.bf16.msra.mxu0 0
        %1067 = vmatprep.subr.bf16.mxu0 0
        %1068 = vmatpush1.bf16.msra.mxu0 0
        %1069 = vmatprep.subr.bf16.mxu0 0
        %1070 = vmatpush1.bf16.msra.mxu0 0
        %1071 = vmatprep.subr.bf16.mxu0 0
        %1072 = vmatpush1.bf16.msra.mxu0 %v1049
        %1073 = vmatprep.subr.bf16.mxu0 0
        %1074 = vmatpush2.bf16.msra.mxu0 0
        %1075 = vmatprep.subr.bf16.mxu0 0
        %1076 = vmatpush2.bf16.msra.mxu0 0
        %1077 = vmatprep.subr.bf16.mxu0 0
        %1078 = vmatpush2.bf16.msra.mxu0 0
        %1079 = vmatprep.subr.bf16.mxu0 0
        %1080 = vmatpush2.bf16.msra.mxu0 0
        %1081 = vmatprep.subr.bf16.mxu0 0
        %1082 = vmatpush2.bf16.msra.mxu0 0
        %1083 = vmatprep.subr.bf16.mxu0 0
        %1084 = vmatpush2.bf16.msra.mxu0 0
        %1085 = vmatprep.subr.bf16.mxu0 0
        %1086 = vmatpush2.bf16.msra.mxu0 0
        %1087 = vmatprep.subr.bf16.mxu0 0
        %1088 = vmatpush2.bf16.msra.mxu0 0
        %1089 = vmatprep.mubr.bf16.mxu0 0
        %1090 = vmatmul.mubr.bf16.gmra.mxu0 %v1052
        %v1091 = vpop.f32.mrf.mxu0
        %v1092 = vadd.f32 0.0, %v1091
        %v1093 = vpop.f32.mrf.mxu0
        %v1094 = vpop.f32.mrf.mxu0
        %v1095 = vadd.f32 0.0, %v1094
        %v1096 = vpop.f32.mrf.mxu0
        %1097 = vmatprep.mubr.bf16.mxu0 0
        %1098 = vmatmul.mubr.bf16.gmra.mxu0 %v1055
        %v1099 = vpop.f32.mrf.mxu0
        %v1100 = vadd.f32 0.0, %v1099
        %v1101 = vpop.f32.mrf.mxu0
        %v1102 = vpop.f32.mrf.mxu0
        %v1103 = vpop.f32.mrf.mxu0
        %1104 = vdwg.mxu0
        %v1106 = vsel %vm900, %v1027, 0
        %v1109 = vsel %vm900, %v1028, 0
        %1111 = vmatprep.subr.bf16.mxu0 0
        %1112 = vmatpush1.bf16.msra.mxu0 0
        %1113 = vmatprep.subr.bf16.mxu0 0
        %1114 = vmatpush1.bf16.msra.mxu0 0
        %1115 = vmatprep.subr.bf16.mxu0 0
        %1116 = vmatpush1.bf16.msra.mxu0 0
        %1117 = vmatprep.subr.bf16.mxu0 0
        %1118 = vmatpush1.bf16.msra.mxu0 0
        %1119 = vmatprep.subr.bf16.mxu0 0
        %1120 = vmatpush1.bf16.msra.mxu0 0
        %1121 = vmatprep.subr.bf16.mxu0 0
        %1122 = vmatpush1.bf16.msra.mxu0 0
        %1123 = vmatprep.subr.bf16.mxu0 0
        %1124 = vmatpush1.bf16.msra.mxu0 0
        %1125 = vmatprep.subr.bf16.mxu0 0
        %1126 = vmatpush1.bf16.msra.mxu0 %v1049
        %1127 = vmatprep.subr.bf16.mxu0 0
        %1128 = vmatpush2.bf16.msra.mxu0 0
        %1129 = vmatprep.subr.bf16.mxu0 0
        %1130 = vmatpush2.bf16.msra.mxu0 0
        %1131 = vmatprep.subr.bf16.mxu0 0
        %1132 = vmatpush2.bf16.msra.mxu0 0
        %1133 = vmatprep.subr.bf16.mxu0 0
        %1134 = vmatpush2.bf16.msra.mxu0 0
        %1135 = vmatprep.subr.bf16.mxu0 0
        %1136 = vmatpush2.bf16.msra.mxu0 0
        %1137 = vmatprep.subr.bf16.mxu0 0
        %1138 = vmatpush2.bf16.msra.mxu0 0
        %1139 = vmatprep.subr.bf16.mxu0 0
        %1140 = vmatpush2.bf16.msra.mxu0 0
        %1141 = vmatprep.subr.bf16.mxu0 0
        %1142 = vmatpush2.bf16.msra.mxu0 0
        %1143 = vmatprep.mubr.bf16.mxu0 0
        %1144 = vmatmul.mubr.bf16.gmra.mxu0 %v1106
        %v1145 = vpop.f32.mrf.mxu0
        %v1146 = vadd.f32 %v1092, %v1145
        %v1147 = vpop.f32.mrf.mxu0
        %v1148 = vpop.f32.mrf.mxu0
        %v1149 = vadd.f32 %v1095, %v1148
        %v1150 = vpop.f32.mrf.mxu0
        %1151 = vmatprep.mubr.bf16.mxu0 0
        %1152 = vmatmul.mubr.bf16.gmra.mxu0 %v1109
        %v1153 = vpop.f32.mrf.mxu0
        %v1154 = vadd.f32 %v1100, %v1153
        %v1155 = vpop.f32.mrf.mxu0
        %v1156 = vpop.f32.mrf.mxu0
        %v1157 = vpop.f32.mrf.mxu0
        %1158 = vdwg.mxu0
        %v1160 = vsel %vm900, %v1043, 0
        %v1163 = vsel %vm900, %v1044, 0
        %1165 = vmatprep.subr.bf16.mxu0 0
        %1166 = vmatpush1.bf16.msra.mxu0 0
        %1167 = vmatprep.subr.bf16.mxu0 0
        %1168 = vmatpush1.bf16.msra.mxu0 0
        %1169 = vmatprep.subr.bf16.mxu0 0
        %1170 = vmatpush1.bf16.msra.mxu0 0
        %1171 = vmatprep.subr.bf16.mxu0 0
        %1172 = vmatpush1.bf16.msra.mxu0 0
        %1173 = vmatprep.subr.bf16.mxu0 0
        %1174 = vmatpush1.bf16.msra.mxu0 0
        %1175 = vmatprep.subr.bf16.mxu0 0
        %1176 = vmatpush1.bf16.msra.mxu0 0
        %1177 = vmatprep.subr.bf16.mxu0 0
        %1178 = vmatpush1.bf16.msra.mxu0 0
        %1179 = vmatprep.subr.bf16.mxu0 0
        %1180 = vmatpush1.bf16.msra.mxu0 %v1049
        %1181 = vmatprep.subr.bf16.mxu0 0
        %1182 = vmatpush2.bf16.msra.mxu0 0
        %1183 = vmatprep.subr.bf16.mxu0 0
        %1184 = vmatpush2.bf16.msra.mxu0 0
        %1185 = vmatprep.subr.bf16.mxu0 0
        %1186 = vmatpush2.bf16.msra.mxu0 0
        %1187 = vmatprep.subr.bf16.mxu0 0
        %1188 = vmatpush2.bf16.msra.mxu0 0
        %1189 = vmatprep.subr.bf16.mxu0 0
        %1190 = vmatpush2.bf16.msra.mxu0 0
        %1191 = vmatprep.subr.bf16.mxu0 0
        %1192 = vmatpush2.bf16.msra.mxu0 0
        %1193 = vmatprep.subr.bf16.mxu0 0
        %1194 = vmatpush2.bf16.msra.mxu0 0
        %1195 = vmatprep.subr.bf16.mxu0 0
        %1196 = vmatpush2.bf16.msra.mxu0 0
        %1197 = vmatprep.mubr.bf16.mxu0 0
        %1198 = vmatmul.mubr.bf16.gmra.mxu0 %v1160
        %v1199 = vpop.f32.mrf.mxu0
        %v1200 = vadd.f32 0.0, %v1199
        %v1201 = vpop.f32.mrf.mxu0
        %v1202 = vpop.f32.mrf.mxu0
        %v1203 = vadd.f32 0.0, %v1202
        %v1204 = vpop.f32.mrf.mxu0
        %1205 = vmatprep.mubr.bf16.mxu0 0
        %1206 = vmatmul.mubr.bf16.gmra.mxu0 %v1163
        %v1207 = vpop.f32.mrf.mxu0
        %v1208 = vadd.f32 0.0, %v1207
        %v1209 = vpop.f32.mrf.mxu0
        %v1210 = vpop.f32.mrf.mxu0
        %v1211 = vpop.f32.mrf.mxu0
        %1212 = vdwg.mxu0
        %v1213 = vadd.f32 %v1146, %v1200
        %v1214 = vadd.f32 %v1149, %v1203
        %v1215 = vadd.f32 %v1154, %v1208
        %v1216 = vpack.c.bf16 %v1023, %v1022
        %v1217 = vpack.c.bf16 %v1024, %v1024
        %v1218 = vunpack.c.l.bf16 %v1216
        %v1219 = vunpack.c.h.bf16 %v1216
        %v1220 = vunpack.c.l.bf16 %v1217
        %v1221 = vsub.f32 %v1022, %v1218
        %v1222 = vsub.f32 %v1023, %v1219
        %v1223 = vsub.f32 %v1024, %v1220
        %v1224 = vpack.c.bf16 %v1222, %v1221
        %v1225 = vpack.c.bf16 %v1223, %v1223
        %v1226 = vunpack.c.l.bf16 %v1224
        %v1227 = vunpack.c.h.bf16 %v1224
        %v1228 = vunpack.c.l.bf16 %v1225
        %v1229 = vsub.f32 %v1221, %v1226
        %v1230 = vsub.f32 %v1222, %v1227
        %v1231 = vsub.f32 %v1223, %v1228
        %v1232 = vpack.c.bf16 %v1230, %v1229
        %v1233 = vpack.c.bf16 %v1231, %v1231
        %v1235 = vsel %vm900, %v1224, 0
        %v1238 = vsel %vm900, %v1225, 0
        %1240 = vmatprep.subr.bf16.mxu0 0
        %1241 = vmatpush1.bf16.msra.mxu0 0
        %1242 = vmatprep.subr.bf16.mxu0 0
        %1243 = vmatpush1.bf16.msra.mxu0 0
        %1244 = vmatprep.subr.bf16.mxu0 0
        %1245 = vmatpush1.bf16.msra.mxu0 0
        %1246 = vmatprep.subr.bf16.mxu0 0
        %1247 = vmatpush1.bf16.msra.mxu0 0
        %1248 = vmatprep.subr.bf16.mxu0 0
        %1249 = vmatpush1.bf16.msra.mxu0 0
        %1250 = vmatprep.subr.bf16.mxu0 0
        %1251 = vmatpush1.bf16.msra.mxu0 0
        %1252 = vmatprep.subr.bf16.mxu0 0
        %1253 = vmatpush1.bf16.msra.mxu0 0
        %1254 = vmatprep.subr.bf16.mxu0 0
        %1255 = vmatpush1.bf16.msra.mxu0 %v1049
        %1256 = vmatprep.subr.bf16.mxu0 0
        %1257 = vmatpush2.bf16.msra.mxu0 0
        %1258 = vmatprep.subr.bf16.mxu0 0
        %1259 = vmatpush2.bf16.msra.mxu0 0
        %1260 = vmatprep.subr.bf16.mxu0 0
        %1261 = vmatpush2.bf16.msra.mxu0 0
        %1262 = vmatprep.subr.bf16.mxu0 0
        %1263 = vmatpush2.bf16.msra.mxu0 0
        %1264 = vmatprep.subr.bf16.mxu0 0
        %1265 = vmatpush2.bf16.msra.mxu0 0
        %1266 = vmatprep.subr.bf16.mxu0 0
        %1267 = vmatpush2.bf16.msra.mxu0 0
        %1268 = vmatprep.subr.bf16.mxu0 0
        %1269 = vmatpush2.bf16.msra.mxu0 0
        %1270 = vmatprep.subr.bf16.mxu0 0
        %1271 = vmatpush2.bf16.msra.mxu0 0
        %1272 = vmatprep.mubr.bf16.mxu0 0
        %1273 = vmatmul.mubr.bf16.gmra.mxu0 %v1235
        %v1274 = vpop.f32.mrf.mxu0
        %v1275 = vadd.f32 0.0, %v1274
        %v1276 = vpop.f32.mrf.mxu0
        %v1277 = vpop.f32.mrf.mxu0
        %v1278 = vadd.f32 0.0, %v1277
        %v1279 = vpop.f32.mrf.mxu0
        %1280 = vmatprep.mubr.bf16.mxu0 0
        %1281 = vmatmul.mubr.bf16.gmra.mxu0 %v1238
        %v1282 = vpop.f32.mrf.mxu0
        %v1283 = vadd.f32 0.0, %v1282
        %v1284 = vpop.f32.mrf.mxu0
        %v1285 = vpop.f32.mrf.mxu0
        %v1286 = vpop.f32.mrf.mxu0
        %1287 = vdwg.mxu0
        %v1289 = vsel %vm900, %v1216, 0
        %v1292 = vsel %vm900, %v1217, 0
        %1294 = vmatprep.subr.bf16.mxu0 0
        %1295 = vmatpush1.bf16.msra.mxu0 0
        %1296 = vmatprep.subr.bf16.mxu0 0
        %1297 = vmatpush1.bf16.msra.mxu0 0
        %1298 = vmatprep.subr.bf16.mxu0 0
        %1299 = vmatpush1.bf16.msra.mxu0 0
        %1300 = vmatprep.subr.bf16.mxu0 0
        %1301 = vmatpush1.bf16.msra.mxu0 0
        %1302 = vmatprep.subr.bf16.mxu0 0
        %1303 = vmatpush1.bf16.msra.mxu0 0
        %1304 = vmatprep.subr.bf16.mxu0 0
        %1305 = vmatpush1.bf16.msra.mxu0 0
        %1306 = vmatprep.subr.bf16.mxu0 0
        %1307 = vmatpush1.bf16.msra.mxu0 0
        %1308 = vmatprep.subr.bf16.mxu0 0
        %1309 = vmatpush1.bf16.msra.mxu0 %v1049
        %1310 = vmatprep.subr.bf16.mxu0 0
        %1311 = vmatpush2.bf16.msra.mxu0 0
        %1312 = vmatprep.subr.bf16.mxu0 0
        %1313 = vmatpush2.bf16.msra.mxu0 0
        %1314 = vmatprep.subr.bf16.mxu0 0
        %1315 = vmatpush2.bf16.msra.mxu0 0
        %1316 = vmatprep.subr.bf16.mxu0 0
        %1317 = vmatpush2.bf16.msra.mxu0 0
        %1318 = vmatprep.subr.bf16.mxu0 0
        %1319 = vmatpush2.bf16.msra.mxu0 0
        %1320 = vmatprep.subr.bf16.mxu0 0
        %1321 = vmatpush2.bf16.msra.mxu0 0
        %1322 = vmatprep.subr.bf16.mxu0 0
        %1323 = vmatpush2.bf16.msra.mxu0 0
        %1324 = vmatprep.subr.bf16.mxu0 0
        %1325 = vmatpush2.bf16.msra.mxu0 0
        %1326 = vmatprep.mubr.bf16.mxu0 0
        %1327 = vmatmul.mubr.bf16.gmra.mxu0 %v1289
        %v1328 = vpop.f32.mrf.mxu0
        %v1329 = vadd.f32 %v1275, %v1328
        %v1330 = vpop.f32.mrf.mxu0
        %v1331 = vpop.f32.mrf.mxu0
        %v1332 = vadd.f32 %v1278, %v1331
        %v1333 = vpop.f32.mrf.mxu0
        %1334 = vmatprep.mubr.bf16.mxu0 0
        %1335 = vmatmul.mubr.bf16.gmra.mxu0 %v1292
        %v1336 = vpop.f32.mrf.mxu0
        %v1337 = vadd.f32 %v1283, %v1336
        %v1338 = vpop.f32.mrf.mxu0
        %v1339 = vpop.f32.mrf.mxu0
        %v1340 = vpop.f32.mrf.mxu0
        %1341 = vdwg.mxu0
        %v1343 = vsel %vm900, %v1232, 0
        %v1346 = vsel %vm900, %v1233, 0
        %1348 = vmatprep.subr.bf16.mxu0 0
        %1349 = vmatpush1.bf16.msra.mxu0 0
        %1350 = vmatprep.subr.bf16.mxu0 0
        %1351 = vmatpush1.bf16.msra.mxu0 0
        %1352 = vmatprep.subr.bf16.mxu0 0
        %1353 = vmatpush1.bf16.msra.mxu0 0
        %1354 = vmatprep.subr.bf16.mxu0 0
        %1355 = vmatpush1.bf16.msra.mxu0 0
        %1356 = vmatprep.subr.bf16.mxu0 0
        %1357 = vmatpush1.bf16.msra.mxu0 0
        %1358 = vmatprep.subr.bf16.mxu0 0
        %1359 = vmatpush1.bf16.msra.mxu0 0
        %1360 = vmatprep.subr.bf16.mxu0 0
        %1361 = vmatpush1.bf16.msra.mxu0 0
        %1362 = vmatprep.subr.bf16.mxu0 0
        %1363 = vmatpush1.bf16.msra.mxu0 %v1049
        %1364 = vmatprep.subr.bf16.mxu0 0
        %1365 = vmatpush2.bf16.msra.mxu0 0
        %1366 = vmatprep.subr.bf16.mxu0 0
        %1367 = vmatpush2.bf16.msra.mxu0 0
        %1368 = vmatprep.subr.bf16.mxu0 0
        %1369 = vmatpush2.bf16.msra.mxu0 0
        %1370 = vmatprep.subr.bf16.mxu0 0
        %1371 = vmatpush2.bf16.msra.mxu0 0
        %1372 = vmatprep.subr.bf16.mxu0 0
        %1373 = vmatpush2.bf16.msra.mxu0 0
        %1374 = vmatprep.subr.bf16.mxu0 0
        %1375 = vmatpush2.bf16.msra.mxu0 0
        %1376 = vmatprep.subr.bf16.mxu0 0
        %1377 = vmatpush2.bf16.msra.mxu0 0
        %1378 = vmatprep.subr.bf16.mxu0 0
        %1379 = vmatpush2.bf16.msra.mxu0 0
        %1380 = vmatprep.mubr.bf16.mxu0 0
        %1381 = vmatmul.mubr.bf16.gmra.mxu0 %v1343
        %v1382 = vpop.f32.mrf.mxu0
        %v1383 = vadd.f32 0.0, %v1382
        %v1384 = vpop.f32.mrf.mxu0
        %v1385 = vpop.f32.mrf.mxu0
        %v1386 = vadd.f32 0.0, %v1385
        %v1387 = vpop.f32.mrf.mxu0
        %1388 = vmatprep.mubr.bf16.mxu0 0
        %1389 = vmatmul.mubr.bf16.gmra.mxu0 %v1346
        %v1390 = vpop.f32.mrf.mxu0
        %v1391 = vadd.f32 0.0, %v1390
        %v1392 = vpop.f32.mrf.mxu0
        %v1393 = vpop.f32.mrf.mxu0
        %v1394 = vpop.f32.mrf.mxu0
        %1395 = vdwg.mxu0
        %v1396 = vadd.f32 %v1329, %v1383
        %v1397 = vadd.f32 %v1332, %v1386
        %v1398 = vadd.f32 %v1337, %v1391
        %vm1399 = vcmask 64512
        %1400 = vst.msk [vmem:[%s350] sm:$0xff] %vm1399, %v1213
        %v1401 = vand.u32 2147483647, %v1213
        %1403 = vrot.lane.b32.xlu0 %v1401, 120
        %v1404 = vpop.permute.xlu0 %1403
        %s1406 = scalar_lea.vmem %s350, 8
        %1407 = vst.msk [vmem:[%s1406] sm:$0xff] %vm1399, %v1404
        %s1408 = scalar_lea.vmem %s350, 16
        %1409 = vst.msk [vmem:[%s1408] sm:$0xff] %vm1399, %v1396
        %v1410 = vand.u32 2147483647, %v1396
        %1412 = vrot.lane.b32.xlu0 %v1410, 120
        %v1413 = vpop.permute.xlu0 %1412
        %s1415 = scalar_lea.vmem %s350, 24
        %1416 = vst.msk [vmem:[%s1415] sm:$0xff] %vm1399, %v1413
        %s1417 = scalar_lea.vmem %s350, 32
        %1418 = vst.msk [vmem:[%s1417] sm:$0xff] %vm1399, %v1214
        %v1419 = vand.u32 2147483647, %v1214
        %1421 = vrot.lane.b32.xlu0 %v1419, 120
        %v1422 = vpop.permute.xlu0 %1421
        %s1424 = scalar_lea.vmem %s350, 40
        %1425 = vst.msk [vmem:[%s1424] sm:$0xff] %vm1399, %v1422
        %s1426 = scalar_lea.vmem %s350, 48
        %1427 = vst.msk [vmem:[%s1426] sm:$0xff] %vm1399, %v1397
        %v1428 = vand.u32 2147483647, %v1397
        %1430 = vrot.lane.b32.xlu0 %v1428, 120
        %v1431 = vpop.permute.xlu0 %1430
        %s1433 = scalar_lea.vmem %s350, 56
        %1434 = vst.msk [vmem:[%s1433] sm:$0xff] %vm1399, %v1431
        %s1435 = scalar_lea.vmem %s350, 64
        %1436 = vst.msk [vmem:[%s1435] sm:$0xff] %vm1399, %v1215
        %v1437 = vand.u32 2147483647, %v1215
        %1439 = vrot.lane.b32.xlu0 %v1437, 120
        %v1440 = vpop.permute.xlu0 %1439
        %s1442 = scalar_lea.vmem %s350, 72
        %1443 = vst.msk [vmem:[%s1442] sm:$0xff] %vm1399, %v1440
        %s1444 = scalar_lea.vmem %s350, 80
        %1445 = vst.msk [vmem:[%s1444] sm:$0xff] %vm1399, %v1398
        %v1446 = vand.u32 2147483647, %v1398
        %1448 = vrot.lane.b32.xlu0 %v1446, 120
        %v1449 = vpop.permute.xlu0 %1448
        %s1451 = scalar_lea.vmem %s350, 88
        %1452 = vst.msk [vmem:[%s1451] sm:$0xff] %vm1399, %v1449
        %1453 = vst.msk [vmem:[#allocation3] sm:$0xff] %vm1399, %v1213
        %1454 = vst.msk [vmem:[#allocation3 + $0x8] sm:$0xff] %vm1399, %v1214
        %1455 = vst.msk [vmem:[#allocation3 + $0x10] sm:$0xff] %vm1399, %v1215
        %v1456 = vld [vmem:[#allocation3] ss:$2 sm:$0xff]
        %s1457 = scalar_lea.vmem [#allocation3], 16
        %v1458 = vld [vmem:[%s1457] ss:$2 sm:$0xf]
        %s1459 = scalar_lea.vmem [#allocation3], 1
        %v1460 = vld [vmem:[%s1459] ss:$2 sm:$0xff]
        %s1461 = scalar_lea.vmem [#allocation3], 17
        %v1462 = vld [vmem:[%s1461] ss:$2 sm:$0xf]
        %v1463 = vadd.f32 %v1456, %v1460
        %v1464 = vadd.f32 %v1458, %v1462
        %v1465 = vmul.f32 %v1463, 0.5
        %v1466 = vmul.f32 %v1464, 0.5
        %v1467 = vsub.f32 %v1456, %v1460
        %v1468 = vsub.f32 %v1458, %v1462
        %v1469 = vand.u32 2147483647, %v1467
        %v1470 = vand.u32 2147483647, %v1468
        %v1471 = vld [vmem:[%s3] sm:$0xf]
        %v1472 = vpack.c.bf16 %v1466, %v1465
        %v1473 = vunpack.c.l.bf16 %v1472
        %v1474 = vunpack.c.h.bf16 %v1472
        %v1475 = vsub.f32 %v1465, %v1473
        %v1476 = vsub.f32 %v1466, %v1474
        %v1477 = vpack.c.bf16 %v1476, %v1475
        %v1478 = vunpack.c.l.bf16 %v1477
        %v1479 = vunpack.c.h.bf16 %v1477
        %v1480 = vsub.f32 %v1475, %v1478
        %v1481 = vsub.f32 %v1476, %v1479
        %v1482 = vpack.c.bf16 %v1481, %v1480
        %v1484 = vsel %vm1399, %v1477, 0
        %vm1486 = vcmask 1043456
        %v1488 = vsel %vm1486, %v1471, 0
        %1490 = vmatprep.subr.bf16.mxu0 0
        %1491 = vmatpush1.bf16.msra.mxu0 0
        %1492 = vmatprep.subr.bf16.mxu0 0
        %1493 = vmatpush1.bf16.msra.mxu0 0
        %1494 = vmatprep.subr.bf16.mxu0 0
        %1495 = vmatpush1.bf16.msra.mxu0 0
        %1496 = vmatprep.subr.bf16.mxu0 0
        %1497 = vmatpush1.bf16.msra.mxu0 0
        %1498 = vmatprep.subr.bf16.mxu0 0
        %1499 = vmatpush1.bf16.msra.mxu0 0
        %1500 = vmatprep.subr.bf16.mxu0 0
        %1501 = vmatpush1.bf16.msra.mxu0 0
        %1502 = vmatprep.subr.bf16.mxu0 0
        %1503 = vmatpush1.bf16.msra.mxu0 0
        %1504 = vmatprep.subr.bf16.mxu0 0
        %1505 = vmatpush1.bf16.msra.mxu0 %v1488
        %1506 = vmatprep.subr.bf16.mxu0 0
        %1507 = vmatpush2.bf16.msra.mxu0 0
        %1508 = vmatprep.subr.bf16.mxu0 0
        %1509 = vmatpush2.bf16.msra.mxu0 0
        %1510 = vmatprep.subr.bf16.mxu0 0
        %1511 = vmatpush2.bf16.msra.mxu0 0
        %1512 = vmatprep.subr.bf16.mxu0 0
        %1513 = vmatpush2.bf16.msra.mxu0 0
        %1514 = vmatprep.subr.bf16.mxu0 0
        %1515 = vmatpush2.bf16.msra.mxu0 0
        %1516 = vmatprep.subr.bf16.mxu0 0
        %1517 = vmatpush2.bf16.msra.mxu0 0
        %1518 = vmatprep.subr.bf16.mxu0 0
        %1519 = vmatpush2.bf16.msra.mxu0 0
        %1520 = vmatprep.subr.bf16.mxu0 0
        %1521 = vmatpush2.bf16.msra.mxu0 0
        %1522 = vmatprep.mubr.bf16.mxu0 0
        %1523 = vmatmul.mubr.bf16.gmra.mxu0 %v1484
        %v1524 = vpop.f32.mrf.mxu0
        %v1525 = vadd.f32 0.0, %v1524
        %v1526 = vpop.f32.mrf.mxu0
        %v1527 = vpop.f32.mrf.mxu0
        %v1528 = vadd.f32 0.0, %v1527
        %v1529 = vpop.f32.mrf.mxu0
        %1530 = vdwg.mxu0
        %v1532 = vsel %vm1399, %v1472, 0
        %1534 = vmatprep.subr.bf16.mxu0 0
        %1535 = vmatpush1.bf16.msra.mxu0 0
        %1536 = vmatprep.subr.bf16.mxu0 0
        %1537 = vmatpush1.bf16.msra.mxu0 0
        %1538 = vmatprep.subr.bf16.mxu0 0
        %1539 = vmatpush1.bf16.msra.mxu0 0
        %1540 = vmatprep.subr.bf16.mxu0 0
        %1541 = vmatpush1.bf16.msra.mxu0 0
        %1542 = vmatprep.subr.bf16.mxu0 0
        %1543 = vmatpush1.bf16.msra.mxu0 0
        %1544 = vmatprep.subr.bf16.mxu0 0
        %1545 = vmatpush1.bf16.msra.mxu0 0
        %1546 = vmatprep.subr.bf16.mxu0 0
        %1547 = vmatpush1.bf16.msra.mxu0 0
        %1548 = vmatprep.subr.bf16.mxu0 0
        %1549 = vmatpush1.bf16.msra.mxu0 %v1488
        %1550 = vmatprep.subr.bf16.mxu0 0
        %1551 = vmatpush2.bf16.msra.mxu0 0
        %1552 = vmatprep.subr.bf16.mxu0 0
        %1553 = vmatpush2.bf16.msra.mxu0 0
        %1554 = vmatprep.subr.bf16.mxu0 0
        %1555 = vmatpush2.bf16.msra.mxu0 0
        %1556 = vmatprep.subr.bf16.mxu0 0
        %1557 = vmatpush2.bf16.msra.mxu0 0
        %1558 = vmatprep.subr.bf16.mxu0 0
        %1559 = vmatpush2.bf16.msra.mxu0 0
        %1560 = vmatprep.subr.bf16.mxu0 0
        %1561 = vmatpush2.bf16.msra.mxu0 0
        %1562 = vmatprep.subr.bf16.mxu0 0
        %1563 = vmatpush2.bf16.msra.mxu0 0
        %1564 = vmatprep.subr.bf16.mxu0 0
        %1565 = vmatpush2.bf16.msra.mxu0 0
        %1566 = vmatprep.mubr.bf16.mxu0 0
        %1567 = vmatmul.mubr.bf16.gmra.mxu0 %v1532
        %v1568 = vpop.f32.mrf.mxu0
        %v1569 = vadd.f32 %v1525, %v1568
        %v1570 = vpop.f32.mrf.mxu0
        %v1571 = vpop.f32.mrf.mxu0
        %v1572 = vadd.f32 %v1528, %v1571
        %v1573 = vpop.f32.mrf.mxu0
        %1574 = vdwg.mxu0
        %v1576 = vsel %vm1399, %v1482, 0
        %1578 = vmatprep.subr.bf16.mxu0 0
        %1579 = vmatpush1.bf16.msra.mxu0 0
        %1580 = vmatprep.subr.bf16.mxu0 0
        %1581 = vmatpush1.bf16.msra.mxu0 0
        %1582 = vmatprep.subr.bf16.mxu0 0
        %1583 = vmatpush1.bf16.msra.mxu0 0
        %1584 = vmatprep.subr.bf16.mxu0 0
        %1585 = vmatpush1.bf16.msra.mxu0 0
        %1586 = vmatprep.subr.bf16.mxu0 0
        %1587 = vmatpush1.bf16.msra.mxu0 0
        %1588 = vmatprep.subr.bf16.mxu0 0
        %1589 = vmatpush1.bf16.msra.mxu0 0
        %1590 = vmatprep.subr.bf16.mxu0 0
        %1591 = vmatpush1.bf16.msra.mxu0 0
        %1592 = vmatprep.subr.bf16.mxu0 0
        %1593 = vmatpush1.bf16.msra.mxu0 %v1488
        %1594 = vmatprep.subr.bf16.mxu0 0
        %1595 = vmatpush2.bf16.msra.mxu0 0
        %1596 = vmatprep.subr.bf16.mxu0 0
        %1597 = vmatpush2.bf16.msra.mxu0 0
        %1598 = vmatprep.subr.bf16.mxu0 0
        %1599 = vmatpush2.bf16.msra.mxu0 0
        %1600 = vmatprep.subr.bf16.mxu0 0
        %1601 = vmatpush2.bf16.msra.mxu0 0
        %1602 = vmatprep.subr.bf16.mxu0 0
        %1603 = vmatpush2.bf16.msra.mxu0 0
        %1604 = vmatprep.subr.bf16.mxu0 0
        %1605 = vmatpush2.bf16.msra.mxu0 0
        %1606 = vmatprep.subr.bf16.mxu0 0
        %1607 = vmatpush2.bf16.msra.mxu0 0
        %1608 = vmatprep.subr.bf16.mxu0 0
        %1609 = vmatpush2.bf16.msra.mxu0 0
        %1610 = vmatprep.mubr.bf16.mxu0 0
        %1611 = vmatmul.mubr.bf16.gmra.mxu0 %v1576
        %v1612 = vpop.f32.mrf.mxu0
        %v1613 = vadd.f32 0.0, %v1612
        %v1614 = vpop.f32.mrf.mxu0
        %v1615 = vpop.f32.mrf.mxu0
        %v1616 = vadd.f32 0.0, %v1615
        %v1617 = vpop.f32.mrf.mxu0
        %1618 = vdwg.mxu0
        %v1619 = vadd.f32 %v1569, %v1613
        %v1620 = vadd.f32 %v1572, %v1616
        %v1621 = vpack.c.bf16 %v1470, %v1469
        %v1622 = vunpack.c.l.bf16 %v1621
        %v1623 = vunpack.c.h.bf16 %v1621
        %v1624 = vsub.f32 %v1469, %v1622
        %v1625 = vsub.f32 %v1470, %v1623
        %v1626 = vpack.c.bf16 %v1625, %v1624
        %v1627 = vunpack.c.l.bf16 %v1626
        %v1628 = vunpack.c.h.bf16 %v1626
        %v1629 = vsub.f32 %v1624, %v1627
        %v1630 = vsub.f32 %v1625, %v1628
        %v1631 = vpack.c.bf16 %v1630, %v1629
        %v1633 = vsel %vm1399, %v1626, 0
        %1635 = vmatprep.subr.bf16.mxu0 0
        %1636 = vmatpush1.bf16.msra.mxu0 0
        %1637 = vmatprep.subr.bf16.mxu0 0
        %1638 = vmatpush1.bf16.msra.mxu0 0
        %1639 = vmatprep.subr.bf16.mxu0 0
        %1640 = vmatpush1.bf16.msra.mxu0 0
        %1641 = vmatprep.subr.bf16.mxu0 0
        %1642 = vmatpush1.bf16.msra.mxu0 0
        %1643 = vmatprep.subr.bf16.mxu0 0
        %1644 = vmatpush1.bf16.msra.mxu0 0
        %1645 = vmatprep.subr.bf16.mxu0 0
        %1646 = vmatpush1.bf16.msra.mxu0 0
        %1647 = vmatprep.subr.bf16.mxu0 0
        %1648 = vmatpush1.bf16.msra.mxu0 0
        %1649 = vmatprep.subr.bf16.mxu0 0
        %1650 = vmatpush1.bf16.msra.mxu0 %v1488
        %1651 = vmatprep.subr.bf16.mxu0 0
        %1652 = vmatpush2.bf16.msra.mxu0 0
        %1653 = vmatprep.subr.bf16.mxu0 0
        %1654 = vmatpush2.bf16.msra.mxu0 0
        %1655 = vmatprep.subr.bf16.mxu0 0
        %1656 = vmatpush2.bf16.msra.mxu0 0
        %1657 = vmatprep.subr.bf16.mxu0 0
        %1658 = vmatpush2.bf16.msra.mxu0 0
        %1659 = vmatprep.subr.bf16.mxu0 0
        %1660 = vmatpush2.bf16.msra.mxu0 0
        %1661 = vmatprep.subr.bf16.mxu0 0
        %1662 = vmatpush2.bf16.msra.mxu0 0
        %1663 = vmatprep.subr.bf16.mxu0 0
        %1664 = vmatpush2.bf16.msra.mxu0 0
        %1665 = vmatprep.subr.bf16.mxu0 0
        %1666 = vmatpush2.bf16.msra.mxu0 0
        %1667 = vmatprep.mubr.bf16.mxu0 0
        %1668 = vmatmul.mubr.bf16.gmra.mxu0 %v1633
        %v1669 = vpop.f32.mrf.mxu0
        %v1670 = vadd.f32 0.0, %v1669
        %v1671 = vpop.f32.mrf.mxu0
        %v1672 = vpop.f32.mrf.mxu0
        %v1673 = vadd.f32 0.0, %v1672
        %v1674 = vpop.f32.mrf.mxu0
        %1675 = vdwg.mxu0
        %v1677 = vsel %vm1399, %v1621, 0
        %1679 = vmatprep.subr.bf16.mxu0 0
        %1680 = vmatpush1.bf16.msra.mxu0 0
        %1681 = vmatprep.subr.bf16.mxu0 0
        %1682 = vmatpush1.bf16.msra.mxu0 0
        %1683 = vmatprep.subr.bf16.mxu0 0
        %1684 = vmatpush1.bf16.msra.mxu0 0
        %1685 = vmatprep.subr.bf16.mxu0 0
        %1686 = vmatpush1.bf16.msra.mxu0 0
        %1687 = vmatprep.subr.bf16.mxu0 0
        %1688 = vmatpush1.bf16.msra.mxu0 0
        %1689 = vmatprep.subr.bf16.mxu0 0
        %1690 = vmatpush1.bf16.msra.mxu0 0
        %1691 = vmatprep.subr.bf16.mxu0 0
        %1692 = vmatpush1.bf16.msra.mxu0 0
        %1693 = vmatprep.subr.bf16.mxu0 0
        %1694 = vmatpush1.bf16.msra.mxu0 %v1488
        %1695 = vmatprep.subr.bf16.mxu0 0
        %1696 = vmatpush2.bf16.msra.mxu0 0
        %1697 = vmatprep.subr.bf16.mxu0 0
        %1698 = vmatpush2.bf16.msra.mxu0 0
        %1699 = vmatprep.subr.bf16.mxu0 0
        %1700 = vmatpush2.bf16.msra.mxu0 0
        %1701 = vmatprep.subr.bf16.mxu0 0
        %1702 = vmatpush2.bf16.msra.mxu0 0
        %1703 = vmatprep.subr.bf16.mxu0 0
        %1704 = vmatpush2.bf16.msra.mxu0 0
        %1705 = vmatprep.subr.bf16.mxu0 0
        %1706 = vmatpush2.bf16.msra.mxu0 0
        %1707 = vmatprep.subr.bf16.mxu0 0
        %1708 = vmatpush2.bf16.msra.mxu0 0
        %1709 = vmatprep.subr.bf16.mxu0 0
        %1710 = vmatpush2.bf16.msra.mxu0 0
        %1711 = vmatprep.mubr.bf16.mxu0 0
        %1712 = vmatmul.mubr.bf16.gmra.mxu0 %v1677
        %v1713 = vpop.f32.mrf.mxu0
        %v1714 = vadd.f32 %v1670, %v1713
        %v1715 = vpop.f32.mrf.mxu0
        %v1716 = vpop.f32.mrf.mxu0
        %v1717 = vadd.f32 %v1673, %v1716
        %v1718 = vpop.f32.mrf.mxu0
        %1719 = vdwg.mxu0
        %v1721 = vsel %vm1399, %v1631, 0
        %1723 = vmatprep.subr.bf16.mxu0 0
        %1724 = vmatpush1.bf16.msra.mxu0 0
        %1725 = vmatprep.subr.bf16.mxu0 0
        %1726 = vmatpush1.bf16.msra.mxu0 0
        %1727 = vmatprep.subr.bf16.mxu0 0
        %1728 = vmatpush1.bf16.msra.mxu0 0
        %1729 = vmatprep.subr.bf16.mxu0 0
        %1730 = vmatpush1.bf16.msra.mxu0 0
        %1731 = vmatprep.subr.bf16.mxu0 0
        %1732 = vmatpush1.bf16.msra.mxu0 0
        %1733 = vmatprep.subr.bf16.mxu0 0
        %1734 = vmatpush1.bf16.msra.mxu0 0
        %1735 = vmatprep.subr.bf16.mxu0 0
        %1736 = vmatpush1.bf16.msra.mxu0 0
        %1737 = vmatprep.subr.bf16.mxu0 0
        %1738 = vmatpush1.bf16.msra.mxu0 %v1488
        %1739 = vmatprep.subr.bf16.mxu0 0
        %1740 = vmatpush2.bf16.msra.mxu0 0
        %1741 = vmatprep.subr.bf16.mxu0 0
        %1742 = vmatpush2.bf16.msra.mxu0 0
        %1743 = vmatprep.subr.bf16.mxu0 0
        %1744 = vmatpush2.bf16.msra.mxu0 0
        %1745 = vmatprep.subr.bf16.mxu0 0
        %1746 = vmatpush2.bf16.msra.mxu0 0
        %1747 = vmatprep.subr.bf16.mxu0 0
        %1748 = vmatpush2.bf16.msra.mxu0 0
        %1749 = vmatprep.subr.bf16.mxu0 0
        %1750 = vmatpush2.bf16.msra.mxu0 0
        %1751 = vmatprep.subr.bf16.mxu0 0
        %1752 = vmatpush2.bf16.msra.mxu0 0
        %1753 = vmatprep.subr.bf16.mxu0 0
        %1754 = vmatpush2.bf16.msra.mxu0 0
        %1755 = vmatprep.mubr.bf16.mxu0 0
        %1756 = vmatmul.mubr.bf16.gmra.mxu0 %v1721
        %v1757 = vpop.f32.mrf.mxu0
        %v1758 = vadd.f32 0.0, %v1757
        %v1759 = vpop.f32.mrf.mxu0
        %v1760 = vpop.f32.mrf.mxu0
        %v1761 = vadd.f32 0.0, %v1760
        %v1762 = vpop.f32.mrf.mxu0
        %1763 = vdwg.mxu0
        %v1764 = vadd.f32 %v1714, %v1758
        %v1765 = vadd.f32 %v1717, %v1761
        %vm1766 = vcmask 27648
        %1767 = vst.msk [vmem:[%s355] sm:$0xf] %vm1766, %v1619
        %v1768 = vand.u32 2147483647, %v1619
        %1770 = vrot.lane.b32.xlu0 %v1768, 124
        %v1771 = vpop.permute.xlu0 %1770
        %s1773 = scalar_lea.vmem %s355, 4
        %1774 = vst.msk [vmem:[%s1773] sm:$0xf] %vm1766, %v1771
        %s1775 = scalar_lea.vmem %s355, 8
        %1776 = vst.msk [vmem:[%s1775] sm:$0xf] %vm1766, %v1764
        %v1777 = vand.u32 2147483647, %v1764
        %1779 = vrot.lane.b32.xlu0 %v1777, 124
        %v1780 = vpop.permute.xlu0 %1779
        %s1782 = scalar_lea.vmem %s355, 12
        %1783 = vst.msk [vmem:[%s1782] sm:$0xf] %vm1766, %v1780
        %s1784 = scalar_lea.vmem %s355, 16
        %vm1785 = vcmask 31748
        %1786 = vst.msk [vmem:[%s1784 - $0x4] sm:$0xf0] %vm1785, %v1619
        %s1787 = scalar_lea.vmem %s355, 20
        %1788 = vst.msk [vmem:[%s1787 - $0x4] sm:$0xf0] %vm1785, %v1771
        %s1789 = scalar_lea.vmem %s355, 24
        %1790 = vst.msk [vmem:[%s1789 - $0x4] sm:$0xf0] %vm1785, %v1764
        %s1791 = scalar_lea.vmem %s355, 28
        %1792 = vst.msk [vmem:[%s1791 - $0x4] sm:$0xf0] %vm1785, %v1780
        %s1793 = scalar_lea.vmem %s355, 32
        %1794 = vst.msk [vmem:[%s1793] sm:$0xf] %vm1766, %v1620
        %v1795 = vand.u32 2147483647, %v1620
        %1797 = vrot.lane.b32.xlu0 %v1795, 124
        %v1798 = vpop.permute.xlu0 %1797
        %s1800 = scalar_lea.vmem %s355, 36
        %1801 = vst.msk [vmem:[%s1800] sm:$0xf] %vm1766, %v1798
        %s1802 = scalar_lea.vmem %s355, 40
        %1803 = vst.msk [vmem:[%s1802] sm:$0xf] %vm1766, %v1765
        %v1804 = vand.u32 2147483647, %v1765
        %1806 = vrot.lane.b32.xlu0 %v1804, 124
        %v1807 = vpop.permute.xlu0 %1806
        %s1809 = scalar_lea.vmem %s355, 44
        %1810 = vst.msk [vmem:[%s1809] sm:$0xf] %vm1766, %v1807
        %vm1811 = vcmask 31744
        %1812 = vst.msk [vmem:[#allocation4] sm:$0xff] %vm1811, %v1619
        %1813 = vst.msk [vmem:[#allocation4 + $0x8] sm:$0xf] %vm1766, %v1620
        %v1814 = vld [vmem:[#allocation4] ss:$2 sm:$0x3f]
        %s1815 = scalar_lea.vmem [#allocation4], 1
        %v1816 = vld [vmem:[%s1815] ss:$2 sm:$0x3f]
        %v1817 = vadd.f32 %v1814, %v1816
        %v1818 = vmul.f32 %v1817, 0.5
        %v1819 = vsub.f32 %v1814, %v1816
        %v1820 = vand.u32 2147483647, %v1819
        %v1821 = vld [vmem:[%s4] sm:$0x3]
        %v1822 = vpack.c.bf16 %v1818, %v1818
        %v1823 = vunpack.c.l.bf16 %v1822
        %v1824 = vsub.f32 %v1818, %v1823
        %v1825 = vpack.c.bf16 %v1824, %v1824
        %v1826 = vunpack.c.l.bf16 %v1825
        %v1827 = vsub.f32 %v1824, %v1826
        %v1828 = vpack.c.bf16 %v1827, %v1827
        %v1830 = vsel %vm1811, %v1825, 0
        %vm1832 = vcmask 1041408
        %v1834 = vsel %vm1832, %v1821, 0
        %1836 = vmatprep.subr.bf16.mxu0 0
        %1837 = vmatpush1.bf16.msra.mxu0 0
        %1838 = vmatprep.subr.bf16.mxu0 0
        %1839 = vmatpush1.bf16.msra.mxu0 0
        %1840 = vmatprep.subr.bf16.mxu0 0
        %1841 = vmatpush1.bf16.msra.mxu0 0
        %1842 = vmatprep.subr.bf16.mxu0 0
        %1843 = vmatpush1.bf16.msra.mxu0 0
        %1844 = vmatprep.subr.bf16.mxu0 0
        %1845 = vmatpush1.bf16.msra.mxu0 0
        %1846 = vmatprep.subr.bf16.mxu0 0
        %1847 = vmatpush1.bf16.msra.mxu0 0
        %1848 = vmatprep.subr.bf16.mxu0 0
        %1849 = vmatpush1.bf16.msra.mxu0 0
        %1850 = vmatprep.subr.bf16.mxu0 0
        %1851 = vmatpush1.bf16.msra.mxu0 %v1834
        %1852 = vmatprep.subr.bf16.mxu0 0
        %1853 = vmatpush2.bf16.msra.mxu0 0
        %1854 = vmatprep.subr.bf16.mxu0 0
        %1855 = vmatpush2.bf16.msra.mxu0 0
        %1856 = vmatprep.subr.bf16.mxu0 0
        %1857 = vmatpush2.bf16.msra.mxu0 0
        %1858 = vmatprep.subr.bf16.mxu0 0
        %1859 = vmatpush2.bf16.msra.mxu0 0
        %1860 = vmatprep.subr.bf16.mxu0 0
        %1861 = vmatpush2.bf16.msra.mxu0 0
        %1862 = vmatprep.subr.bf16.mxu0 0
        %1863 = vmatpush2.bf16.msra.mxu0 0
        %1864 = vmatprep.subr.bf16.mxu0 0
        %1865 = vmatpush2.bf16.msra.mxu0 0
        %1866 = vmatprep.subr.bf16.mxu0 0
        %1867 = vmatpush2.bf16.msra.mxu0 0
        %1868 = vmatprep.mubr.bf16.mxu0 0
        %1869 = vmatmul.mubr.bf16.gmra.mxu0 %v1830
        %v1870 = vpop.f32.mrf.mxu0
        %v1871 = vadd.f32 0.0, %v1870
        %v1872 = vpop.f32.mrf.mxu0
        %v1873 = vpop.f32.mrf.mxu0
        %v1874 = vpop.f32.mrf.mxu0
        %1875 = vdwg.mxu0
        %v1877 = vsel %vm1811, %v1822, 0
        %1879 = vmatprep.subr.bf16.mxu0 0
        %1880 = vmatpush1.bf16.msra.mxu0 0
        %1881 = vmatprep.subr.bf16.mxu0 0
        %1882 = vmatpush1.bf16.msra.mxu0 0
        %1883 = vmatprep.subr.bf16.mxu0 0
        %1884 = vmatpush1.bf16.msra.mxu0 0
        %1885 = vmatprep.subr.bf16.mxu0 0
        %1886 = vmatpush1.bf16.msra.mxu0 0
        %1887 = vmatprep.subr.bf16.mxu0 0
        %1888 = vmatpush1.bf16.msra.mxu0 0
        %1889 = vmatprep.subr.bf16.mxu0 0
        %1890 = vmatpush1.bf16.msra.mxu0 0
        %1891 = vmatprep.subr.bf16.mxu0 0
        %1892 = vmatpush1.bf16.msra.mxu0 0
        %1893 = vmatprep.subr.bf16.mxu0 0
        %1894 = vmatpush1.bf16.msra.mxu0 %v1834
        %1895 = vmatprep.subr.bf16.mxu0 0
        %1896 = vmatpush2.bf16.msra.mxu0 0
        %1897 = vmatprep.subr.bf16.mxu0 0
        %1898 = vmatpush2.bf16.msra.mxu0 0
        %1899 = vmatprep.subr.bf16.mxu0 0
        %1900 = vmatpush2.bf16.msra.mxu0 0
        %1901 = vmatprep.subr.bf16.mxu0 0
        %1902 = vmatpush2.bf16.msra.mxu0 0
        %1903 = vmatprep.subr.bf16.mxu0 0
        %1904 = vmatpush2.bf16.msra.mxu0 0
        %1905 = vmatprep.subr.bf16.mxu0 0
        %1906 = vmatpush2.bf16.msra.mxu0 0
        %1907 = vmatprep.subr.bf16.mxu0 0
        %1908 = vmatpush2.bf16.msra.mxu0 0
        %1909 = vmatprep.subr.bf16.mxu0 0
        %1910 = vmatpush2.bf16.msra.mxu0 0
        %1911 = vmatprep.mubr.bf16.mxu0 0
        %1912 = vmatmul.mubr.bf16.gmra.mxu0 %v1877
        %v1913 = vpop.f32.mrf.mxu0
        %v1914 = vadd.f32 %v1871, %v1913
        %v1915 = vpop.f32.mrf.mxu0
        %v1916 = vpop.f32.mrf.mxu0
        %v1917 = vpop.f32.mrf.mxu0
        %1918 = vdwg.mxu0
        %v1920 = vsel %vm1811, %v1828, 0
        %1922 = vmatprep.subr.bf16.mxu0 0
        %1923 = vmatpush1.bf16.msra.mxu0 0
        %1924 = vmatprep.subr.bf16.mxu0 0
        %1925 = vmatpush1.bf16.msra.mxu0 0
        %1926 = vmatprep.subr.bf16.mxu0 0
        %1927 = vmatpush1.bf16.msra.mxu0 0
        %1928 = vmatprep.subr.bf16.mxu0 0
        %1929 = vmatpush1.bf16.msra.mxu0 0
        %1930 = vmatprep.subr.bf16.mxu0 0
        %1931 = vmatpush1.bf16.msra.mxu0 0
        %1932 = vmatprep.subr.bf16.mxu0 0
        %1933 = vmatpush1.bf16.msra.mxu0 0
        %1934 = vmatprep.subr.bf16.mxu0 0
        %1935 = vmatpush1.bf16.msra.mxu0 0
        %1936 = vmatprep.subr.bf16.mxu0 0
        %1937 = vmatpush1.bf16.msra.mxu0 %v1834
        %1938 = vmatprep.subr.bf16.mxu0 0
        %1939 = vmatpush2.bf16.msra.mxu0 0
        %1940 = vmatprep.subr.bf16.mxu0 0
        %1941 = vmatpush2.bf16.msra.mxu0 0
        %1942 = vmatprep.subr.bf16.mxu0 0
        %1943 = vmatpush2.bf16.msra.mxu0 0
        %1944 = vmatprep.subr.bf16.mxu0 0
        %1945 = vmatpush2.bf16.msra.mxu0 0
        %1946 = vmatprep.subr.bf16.mxu0 0
        %1947 = vmatpush2.bf16.msra.mxu0 0
        %1948 = vmatprep.subr.bf16.mxu0 0
        %1949 = vmatpush2.bf16.msra.mxu0 0
        %1950 = vmatprep.subr.bf16.mxu0 0
        %1951 = vmatpush2.bf16.msra.mxu0 0
        %1952 = vmatprep.subr.bf16.mxu0 0
        %1953 = vmatpush2.bf16.msra.mxu0 0
        %1954 = vmatprep.mubr.bf16.mxu0 0
        %1955 = vmatmul.mubr.bf16.gmra.mxu0 %v1920
        %v1956 = vpop.f32.mrf.mxu0
        %v1957 = vadd.f32 0.0, %v1956
        %v1958 = vpop.f32.mrf.mxu0
        %v1959 = vpop.f32.mrf.mxu0
        %v1960 = vpop.f32.mrf.mxu0
        %1961 = vdwg.mxu0
        %v1962 = vadd.f32 %v1914, %v1957
        %v1963 = vpack.c.bf16 %v1820, %v1820
        %v1964 = vunpack.c.l.bf16 %v1963
        %v1965 = vsub.f32 %v1820, %v1964
        %v1966 = vpack.c.bf16 %v1965, %v1965
        %v1967 = vunpack.c.l.bf16 %v1966
        %v1968 = vsub.f32 %v1965, %v1967
        %v1969 = vpack.c.bf16 %v1968, %v1968
        %v1971 = vsel %vm1811, %v1966, 0
        %1973 = vmatprep.subr.bf16.mxu0 0
        %1974 = vmatpush1.bf16.msra.mxu0 0
        %1975 = vmatprep.subr.bf16.mxu0 0
        %1976 = vmatpush1.bf16.msra.mxu0 0
        %1977 = vmatprep.subr.bf16.mxu0 0
        %1978 = vmatpush1.bf16.msra.mxu0 0
        %1979 = vmatprep.subr.bf16.mxu0 0
        %1980 = vmatpush1.bf16.msra.mxu0 0
        %1981 = vmatprep.subr.bf16.mxu0 0
        %1982 = vmatpush1.bf16.msra.mxu0 0
        %1983 = vmatprep.subr.bf16.mxu0 0
        %1984 = vmatpush1.bf16.msra.mxu0 0
        %1985 = vmatprep.subr.bf16.mxu0 0
        %1986 = vmatpush1.bf16.msra.mxu0 0
        %1987 = vmatprep.subr.bf16.mxu0 0
        %1988 = vmatpush1.bf16.msra.mxu0 %v1834
        %1989 = vmatprep.subr.bf16.mxu0 0
        %1990 = vmatpush2.bf16.msra.mxu0 0
        %1991 = vmatprep.subr.bf16.mxu0 0
        %1992 = vmatpush2.bf16.msra.mxu0 0
        %1993 = vmatprep.subr.bf16.mxu0 0
        %1994 = vmatpush2.bf16.msra.mxu0 0
        %1995 = vmatprep.subr.bf16.mxu0 0
        %1996 = vmatpush2.bf16.msra.mxu0 0
        %1997 = vmatprep.subr.bf16.mxu0 0
        %1998 = vmatpush2.bf16.msra.mxu0 0
        %1999 = vmatprep.subr.bf16.mxu0 0
        %2000 = vmatpush2.bf16.msra.mxu0 0
        %2001 = vmatprep.subr.bf16.mxu0 0
        %2002 = vmatpush2.bf16.msra.mxu0 0
        %2003 = vmatprep.subr.bf16.mxu0 0
        %2004 = vmatpush2.bf16.msra.mxu0 0
        %2005 = vmatprep.mubr.bf16.mxu0 0
        %2006 = vmatmul.mubr.bf16.gmra.mxu0 %v1971
        %v2007 = vpop.f32.mrf.mxu0
        %v2008 = vadd.f32 0.0, %v2007
        %v2009 = vpop.f32.mrf.mxu0
        %v2010 = vpop.f32.mrf.mxu0
        %v2011 = vpop.f32.mrf.mxu0
        %2012 = vdwg.mxu0
        %v2014 = vsel %vm1811, %v1963, 0
        %2016 = vmatprep.subr.bf16.mxu0 0
        %2017 = vmatpush1.bf16.msra.mxu0 0
        %2018 = vmatprep.subr.bf16.mxu0 0
        %2019 = vmatpush1.bf16.msra.mxu0 0
        %2020 = vmatprep.subr.bf16.mxu0 0
        %2021 = vmatpush1.bf16.msra.mxu0 0
        %2022 = vmatprep.subr.bf16.mxu0 0
        %2023 = vmatpush1.bf16.msra.mxu0 0
        %2024 = vmatprep.subr.bf16.mxu0 0
        %2025 = vmatpush1.bf16.msra.mxu0 0
        %2026 = vmatprep.subr.bf16.mxu0 0
        %2027 = vmatpush1.bf16.msra.mxu0 0
        %2028 = vmatprep.subr.bf16.mxu0 0
        %2029 = vmatpush1.bf16.msra.mxu0 0
        %2030 = vmatprep.subr.bf16.mxu0 0
        %2031 = vmatpush1.bf16.msra.mxu0 %v1834
        %2032 = vmatprep.subr.bf16.mxu0 0
        %2033 = vmatpush2.bf16.msra.mxu0 0
        %2034 = vmatprep.subr.bf16.mxu0 0
        %2035 = vmatpush2.bf16.msra.mxu0 0
        %2036 = vmatprep.subr.bf16.mxu0 0
        %2037 = vmatpush2.bf16.msra.mxu0 0
        %2038 = vmatprep.subr.bf16.mxu0 0
        %2039 = vmatpush2.bf16.msra.mxu0 0
        %2040 = vmatprep.subr.bf16.mxu0 0
        %2041 = vmatpush2.bf16.msra.mxu0 0
        %2042 = vmatprep.subr.bf16.mxu0 0
        %2043 = vmatpush2.bf16.msra.mxu0 0
        %2044 = vmatprep.subr.bf16.mxu0 0
        %2045 = vmatpush2.bf16.msra.mxu0 0
        %2046 = vmatprep.subr.bf16.mxu0 0
        %2047 = vmatpush2.bf16.msra.mxu0 0
        %2048 = vmatprep.mubr.bf16.mxu0 0
        %2049 = vmatmul.mubr.bf16.gmra.mxu0 %v2014
        %v2050 = vpop.f32.mrf.mxu0
        %v2051 = vadd.f32 %v2008, %v2050
        %v2052 = vpop.f32.mrf.mxu0
        %v2053 = vpop.f32.mrf.mxu0
        %v2054 = vpop.f32.mrf.mxu0
        %2055 = vdwg.mxu0
        %v2057 = vsel %vm1811, %v1969, 0
        %2059 = vmatprep.subr.bf16.mxu0 0
        %2060 = vmatpush1.bf16.msra.mxu0 0
        %2061 = vmatprep.subr.bf16.mxu0 0
        %2062 = vmatpush1.bf16.msra.mxu0 0
        %2063 = vmatprep.subr.bf16.mxu0 0
        %2064 = vmatpush1.bf16.msra.mxu0 0
        %2065 = vmatprep.subr.bf16.mxu0 0
        %2066 = vmatpush1.bf16.msra.mxu0 0
        %2067 = vmatprep.subr.bf16.mxu0 0
        %2068 = vmatpush1.bf16.msra.mxu0 0
        %2069 = vmatprep.subr.bf16.mxu0 0
        %2070 = vmatpush1.bf16.msra.mxu0 0
        %2071 = vmatprep.subr.bf16.mxu0 0
        %2072 = vmatpush1.bf16.msra.mxu0 0
        %2073 = vmatprep.subr.bf16.mxu0 0
        %2074 = vmatpush1.bf16.msra.mxu0 %v1834
        %2075 = vmatprep.subr.bf16.mxu0 0
        %2076 = vmatpush2.bf16.msra.mxu0 0
        %2077 = vmatprep.subr.bf16.mxu0 0
        %2078 = vmatpush2.bf16.msra.mxu0 0
        %2079 = vmatprep.subr.bf16.mxu0 0
        %2080 = vmatpush2.bf16.msra.mxu0 0
        %2081 = vmatprep.subr.bf16.mxu0 0
        %2082 = vmatpush2.bf16.msra.mxu0 0
        %2083 = vmatprep.subr.bf16.mxu0 0
        %2084 = vmatpush2.bf16.msra.mxu0 0
        %2085 = vmatprep.subr.bf16.mxu0 0
        %2086 = vmatpush2.bf16.msra.mxu0 0
        %2087 = vmatprep.subr.bf16.mxu0 0
        %2088 = vmatpush2.bf16.msra.mxu0 0
        %2089 = vmatprep.subr.bf16.mxu0 0
        %2090 = vmatpush2.bf16.msra.mxu0 0
        %2091 = vmatprep.mubr.bf16.mxu0 0
        %2092 = vmatmul.mubr.bf16.gmra.mxu0 %v2057
        %v2093 = vpop.f32.mrf.mxu0
        %v2094 = vadd.f32 0.0, %v2093
        %v2095 = vpop.f32.mrf.mxu0
        %v2096 = vpop.f32.mrf.mxu0
        %v2097 = vpop.f32.mrf.mxu0
        %2098 = vdwg.mxu0
        %v2099 = vadd.f32 %v2051, %v2094
        %vm2100 = vcmask 9216
        %2101 = vst.msk [vmem:[%s360] sm:$0x3] %vm2100, %v1962
        %v2102 = vand.u32 2147483647, %v1962
        %2104 = vrot.lane.b32.xlu0 %v2102, 126
        %v2105 = vpop.permute.xlu0 %2104
        %s2107 = scalar_lea.vmem %s360, 2
        %2108 = vst.msk [vmem:[%s2107] sm:$0x3] %vm2100, %v2105
        %s2109 = scalar_lea.vmem %s360, 4
        %2110 = vst.msk [vmem:[%s2109] sm:$0x3] %vm2100, %v2099
        %v2111 = vand.u32 2147483647, %v2099
        %2113 = vrot.lane.b32.xlu0 %v2111, 126
        %v2114 = vpop.permute.xlu0 %2113
        %s2116 = scalar_lea.vmem %s360, 6
        %2117 = vst.msk [vmem:[%s2116] sm:$0x3] %vm2100, %v2114
        %s2118 = scalar_lea.vmem %s360, 8
        %vm2119 = vcmask 11266
        %2120 = vst.msk [vmem:[%s2118 - $0x2] sm:$0xc] %vm2119, %v1962
        %s2121 = scalar_lea.vmem %s360, 10
        %2122 = vst.msk [vmem:[%s2121 - $0x2] sm:$0xc] %vm2119, %v2105
        %s2123 = scalar_lea.vmem %s360, 12
        %2124 = vst.msk [vmem:[%s2123 - $0x2] sm:$0xc] %vm2119, %v2099
        %s2125 = scalar_lea.vmem %s360, 14
        %2126 = vst.msk [vmem:[%s2125 - $0x2] sm:$0xc] %vm2119, %v2114
        %s2127 = scalar_lea.vmem %s360, 16
        %vm2128 = vcmask 13316
        %2129 = vst.msk [vmem:[%s2127 - $0x4] sm:$0x30] %vm2128, %v1962
        %s2130 = scalar_lea.vmem %s360, 18
        %2131 = vst.msk [vmem:[%s2130 - $0x4] sm:$0x30] %vm2128, %v2105
        %s2132 = scalar_lea.vmem %s360, 20
        %2133 = vst.msk [vmem:[%s2132 - $0x4] sm:$0x30] %vm2128, %v2099
        %s2134 = scalar_lea.vmem %s360, 22
        %2135 = vst.msk [vmem:[%s2134 - $0x4] sm:$0x30] %vm2128, %v2114
        %s2136 = sand.u32 %s144, 1
        %s2137 = scalar_lea.sflag [#allocation7], %s2136
        %s2138 = sand.u32 %s144, 1
        %s2139 = smul.addr %s2138, 192
        %s2140 = scalar_lea.vmem [#allocation8], %s2139
        %p2141 = scmp.lt.s32.totalorder %s26, 1
        %s2142 = scalar_select %p2141, %s26, 1
        %s2143 = smul.addr %s2142, 12
        %s2144 = smul.addr %s2143, 8
        %s2145 = scalar_lea.vmem %s6, %s2144
        %p2146 = scmp.lt.s32.totalorder %s26, 1
        %s2147 = scalar_select %p2146, %s26, 1
        %s2148 = smul.addr %s2147, 12
        %s2149 = smul.addr %s2148, 4
        %s2150 = scalar_lea.vmem %s7, %s2149
        %p2151 = scmp.lt.s32.totalorder %s26, 1
        %s2152 = scalar_select %p2151, %s26, 1
        %s2153 = smul.addr %s2152, 12
        %s2154 = smul.addr %s2153, 2
        %s2155 = scalar_lea.vmem %s8, %s2154
        // Predicated region
        $region45: #{wavelet_transform.1} parent=39 // pred_check
          %p2156 = pneg %p154
        $region46: #{wavelet_transform.1} parent=39 // pred_check_branch
          %2158 = sbr.rel (%p2156) target = $region48
        $region47: #{wavelet_transform.1} parent=39 // pred_region
          %s2160 = ssub.s32 3072, 3072
          %2161 = vsyncadd %s2137, %s2160
          %s2162 = smul.addr %s26, 24
          %s2163 = smul.addr %s2162, 128
          %s2164 = scalar_lea.hbm %s5, %s2163
          %s2165 = sshll.u32 %s2140, 4
          %s2166 = int_to_ptr.vmem [resolvable:$true] %s2165
          %2171 = dma.vmem_to_hbm [thread:$0]  %s2166, 3072, %s2164, %s2137, 128, 128, 8
        $region48: #{wavelet_transform.1} parent=39 // pred_fallthru
          _
        // Predicated region
        $region49: #{wavelet_transform.1} parent=39 // pred_check
          %p2172 = pneg %p180
        $region50: #{wavelet_transform.1} parent=39 // pred_check_branch
          %2174 = sbr.rel (%p2172) target = $region52
        $region51: #{wavelet_transform.1} parent=39 // pred_region
          _
        $region52: #{wavelet_transform.1} parent=39 // pred_fallthru
          _
        // Predicated region
        $region53: #{wavelet_transform.1} parent=39 // pred_check
          %p2175 = pneg %p206
        $region54: #{wavelet_transform.1} parent=39 // pred_check_branch
          %2177 = sbr.rel (%p2175) target = $region56
        $region55: #{wavelet_transform.1} parent=39 // pred_region
          _
        $region56: #{wavelet_transform.1} parent=39 // pred_fallthru
          _
        // Predicated region
        $region57: #{wavelet_transform.1} parent=39 // pred_check
          %p2178 = pneg %p232
        $region58: #{wavelet_transform.1} parent=39 // pred_check_branch
          %2180 = sbr.rel (%p2178) target = $region60
        $region59: #{wavelet_transform.1} parent=39 // pred_region
          _
        $region60: #{wavelet_transform.1} parent=39 // pred_fallthru
          _
      $region40: #{wavelet_transform.1} parent=5 // pred_fallthru
        _
      %p2181 = scmp.le.s32.totalorder 2, %s21
      // Predicated region
      $region61: #{wavelet_transform.1} parent=5 // pred_check
        %p2182 = pneg %p2181
      $region62: #{wavelet_transform.1} parent=5 // pred_check_branch
        %2184 = sbr.rel (%p2182) target = $region64
      $region63: #{wavelet_transform.1} parent=5 // pred_region
        %s2185 = ssub.s32 %s21, 2
        // Predicated region
        $region65: #{wavelet_transform.1} parent=63 // pred_check
          %p2186 = pneg %p160
        $region66: #{wavelet_transform.1} parent=63 // pred_check_branch
          %2188 = sbr.rel (%p2186) target = $region68
        $region67: #{wavelet_transform.1} parent=63 // pred_region
          %s2189 = sand.u32 %s145, 1
          %s2190 = scalar_lea.sflag [#allocation7], %s2189
          %s2191 = sand.u32 %s145, 1
          %s2192 = smul.addr %s2191, 192
          %s2193 = scalar_lea.vmem [#allocation8], %s2192
          %2194 = dma.done %s2190, 3072
        $region68: #{wavelet_transform.1} parent=63 // pred_fallthru
          _
        // Predicated region
        $region69: #{wavelet_transform.1} parent=63 // pred_check
          %p2195 = pneg %p186
        $region70: #{wavelet_transform.1} parent=63 // pred_check_branch
          %2197 = sbr.rel (%p2195) target = $region72
        $region71: #{wavelet_transform.1} parent=63 // pred_region
          %p2198 = scmp.lt.s32.totalorder %s27, 1
          %s2199 = scalar_select %p2198, %s27, 1
          %s2200 = smul.addr %s2199, 12
          %s2201 = smul.addr %s2200, 8
          %s2202 = scalar_lea.vmem %s6, %s2201
        $region72: #{wavelet_transform.1} parent=63 // pred_fallthru
          _
        // Predicated region
        $region73: #{wavelet_transform.1} parent=63 // pred_check
          %p2203 = pneg %p212
        $region74: #{wavelet_transform.1} parent=63 // pred_check_branch
          %2205 = sbr.rel (%p2203) target = $region76
        $region75: #{wavelet_transform.1} parent=63 // pred_region
          %p2206 = scmp.lt.s32.totalorder %s27, 1
          %s2207 = scalar_select %p2206, %s27, 1
          %s2208 = smul.addr %s2207, 12
          %s2209 = smul.addr %s2208, 4
          %s2210 = scalar_lea.vmem %s7, %s2209
        $region76: #{wavelet_transform.1} parent=63 // pred_fallthru
          _
        // Predicated region
        $region77: #{wavelet_transform.1} parent=63 // pred_check
          %p2211 = pneg %p238
        $region78: #{wavelet_transform.1} parent=63 // pred_check_branch
          %2213 = sbr.rel (%p2211) target = $region80
        $region79: #{wavelet_transform.1} parent=63 // pred_region
          %p2214 = scmp.lt.s32.totalorder %s27, 1
          %s2215 = scalar_select %p2214, %s27, 1
          %s2216 = smul.addr %s2215, 12
          %s2217 = smul.addr %s2216, 2
          %s2218 = scalar_lea.vmem %s8, %s2217
        $region80: #{wavelet_transform.1} parent=63 // pred_fallthru
          _
      $region64: #{wavelet_transform.1} parent=5 // pred_fallthru
        _
    $region6: #{wavelet_transform.1} parent=1 // loop_footer
      %s25 = sadd.s32 1, %s21
    $region7: #{wavelet_transform.1} parent=1 // loop_footer_branch
      %20 = sbr.rel target = $region3
    $region8: #{wavelet_transform.1} parent=1 // loop_exit
      _
    %2219 = vsyncpa [#allocation6], 1
    %s2220 = scalar_lea.sflag [#allocation6], 1
    %2221 = vsyncpa %s2220, 1
    %2222 = vsyncpa [#allocation7], 1
    %s2223 = scalar_lea.sflag [#allocation7], 1
    %2224 = vsyncpa %s2223, 1

</llo_original>
